<compile_context>
chip_gen: v7x
topology: tpu7x:2x2x1
jax: 0.10.0
libtpu: 0.0.40
codegen_flags: <defaults>
</compile_context>

<pallas_src>
import functools

import jax
import jax.numpy as jnp
from jax.experimental import pallas as pl
from jax.experimental.pallas import tpu as pltpu

KSIZE = 3
PAD = 1
EPS = 1e-5


def _basic_block3d_kernel(x_ref, mask_ref, rhs1_ref, rhs2_ref, gb_ref, o_ref,
                          *, N, D, H, W, Cin, Cout):
    Mr = N * D * H                    # rows: fused (n, d, h)
    WC = W * Cout                     # lanes per conv-output block: fused (w, c)
    KC1 = W * Cin                     # lanes per conv-input block (stage 1)
    inv_m = 1.0 / (N * D * H * W)     # BN batch-statistics divisor

    def shift_rows(a, s):
        # out[r] = a[r + s]; vacated rows are zero (and also masked by the tap mask).
        if s == 0:
            return a
        n, k = a.shape
        z = jnp.zeros((abs(s), k), a.dtype)
        if s > 0:
            return jnp.concatenate([a[s:, :], z], axis=0)
        return jnp.concatenate([z, a[:n + s, :]], axis=0)

    def conv_dh(a, rhs_ref, kc):
        # a: (Mr, kc) bf16, lanes = (w, c).  For each (kd, kh) tap: shift rows by
        # (kd-1)*H + (kh-1), zero out-of-range d/h rows via the precomputed 0/1 mask
        # column, and accumulate one MXU dot against that tap's block-Toeplitz RHS slice
        # (which folds the 3 kw taps and the W boundary into the contraction).
        acc = None
        k = 0
        for kd in range(KSIZE):
            for kh in range(KSIZE):
                s = (kd - PAD) * H + (kh - PAD)
                piece = shift_rows(a, s) * mask_ref[:, k:k + 1]
                part = jnp.dot(piece, rhs_ref[k * kc:(k + 1) * kc, :],
                               preferred_element_type=jnp.float32)
                acc = part if acc is None else acc + part
                k += 1
        return acc

    def fold_channels(rs):
        # (1, W*Cout) per-(w, c) sums -> (1, Cout) per-channel sums; log2(W) aligned halves.
        width = W
        while width > 1 and width % 2 == 0:
            half = width // 2
            rs = rs[:, :half * Cout] + rs[:, half * Cout:width * Cout]
            width = half
        acc = rs[:, :Cout]
        for w in range(1, width):     # only if W is not a power of two
            acc = acc + rs[:, w * Cout:(w + 1) * Cout]
        return acc

    def expand_channels(v):
        # (1, Cout) -> (1, W*Cout) replicated per w; log2(W) doubling concats.
        width = 1
        while 2 * width <= W:
            v = jnp.concatenate([v, v], axis=-1)
            width *= 2
        if width < W:
            v = jnp.concatenate([v, v[:, :(W - width) * Cout]], axis=-1)
        return v

    def bn(x, gamma, beta):
        # training-mode BN (batch statistics, biased variance) on an (Mr, W*Cout) f32 block;
        # gamma/beta folded into a single per-channel scale/shift.
        mean = fold_channels(jnp.sum(x, axis=0, keepdims=True)) * inv_m
        msq = fold_channels(jnp.sum(x * x, axis=0, keepdims=True)) * inv_m
        var = jnp.maximum(msq - mean * mean, 0.0)            # clamp: rsqrt NaN guard
        scale = gamma * jax.lax.rsqrt(var + EPS)
        shift = beta - mean * scale
        return x * expand_channels(scale) + expand_channels(shift)

    # ---- stage 1: conv1 + downsample conv share the shifted patches and one accumulator ----
    x = x_ref[...]                                           # (Mr, W*Cin) bf16
    acc1 = conv_dh(x, rhs1_ref, KC1)                         # (Mr, 2*W*Cout) f32
    h1 = jnp.maximum(bn(acc1[:, :WC], gb_ref[0:1, :], gb_ref[1:2, :]), 0.0)   # conv1->BN->ReLU
    resid = bn(acc1[:, WC:], gb_ref[2:3, :], gb_ref[3:4, :])                  # downsample->BN

    # ---- stage 2: conv2 on bf16 h1 (no padded scratch; same row-shift + mask machinery) ----
    acc2 = conv_dh(h1.astype(jnp.bfloat16), rhs2_ref, WC)    # (Mr, W*Cout) f32
    main = bn(acc2, gb_ref[4:5, :], gb_ref[5:6, :])
    o_ref[...] = jnp.maximum(main + resid, 0.0).astype(o_ref.dtype)           # (Mr, W*Cout)


def _toeplitz_rhs(wflat, cin, cout, W):
    """(27, cin, cout) weights -> (9*W*cin, W*cout): per-(kd,kh) block-Toeplitz tiles (stacked
    along the contraction axis) that fold the 3 W-direction taps and the W boundary into the
    matmul, keeping conv-output lanes (w, cout)-fused.  Built once, wrapper/XLA side."""
    w5 = wflat.reshape(KSIZE, KSIZE, KSIZE, cin, cout)
    wp = jnp.arange(W)[:, None]          # source w'
    wo = jnp.arange(W)[None, :]          # output w
    kw = wp - wo + PAD                   # tap index; valid taps satisfy 0 <= kw < 3
    valid = (kw >= 0) & (kw < KSIZE)
    kw_c = jnp.clip(kw, 0, KSIZE - 1)
    blocks = []
    for kd in range(KSIZE):
        for kh in range(KSIZE):
            m = jnp.where(valid[:, :, None, None], w5[kd, kh][kw_c], 0.0)   # (W, W, cin, cout)
            blocks.append(m.transpose(0, 2, 1, 3).reshape(W * cin, W * cout))
    return jnp.concatenate(blocks, axis=0)


def basic_block3d(x, params):
    """x: (N, D, H, W, Cin) float32 -> (N, D, H, W, Cout)."""
    N, D, H, W, Cin = x.shape
    Cout = params["w1"].shape[-1]
    Mr, WC = N * D * H, W * Cout

    # activations: rows = (n, d, h), lanes = (w, c); cast to bf16 once (MXU input dtype).
    x2d = x.reshape(Mr, W * Cin).astype(jnp.bfloat16)

    # per-tap (kd, kh) row-validity 0/1 masks (D/H halo handled in-kernel; padded to 16 cols).
    d_i = jnp.arange(D)[None, :, None]
    h_i = jnp.arange(H)[None, None, :]
    masks = []
    for kd in range(KSIZE):
        for kh in range(KSIZE):
            ok = ((d_i + kd - PAD >= 0) & (d_i + kd - PAD < D) &
                  (h_i + kh - PAD >= 0) & (h_i + kh - PAD < H))
            masks.append(jnp.broadcast_to(ok, (N, D, H)).reshape(Mr, 1))
    masks += [jnp.zeros((Mr, 1), bool)] * (16 - len(masks))
    tapmask = jnp.concatenate(masks, axis=1).astype(jnp.bfloat16)            # (Mr, 16)

    # conv1 + downsample share patches -> their RHS are concatenated along the output lanes.
    rhs1 = jnp.concatenate([_toeplitz_rhs(params["w1"], Cin, Cout, W),
                            _toeplitz_rhs(params["wd"], Cin, Cout, W)],
                           axis=1).astype(jnp.bfloat16)                      # (9*W*Cin, 2*WC)
    rhs2 = _toeplitz_rhs(params["w2"], Cout, Cout, W).astype(jnp.bfloat16)   # (9*W*Cout, WC)

    # all six gamma/beta vectors in one tiny tile: rows g1, b1, gd, bd, g2, b2
    gb = jnp.concatenate([params["g1"], params["b1"], params["gd"],
                          params["bd"], params["g2"], params["b2"]], axis=0)  # (6, Cout) f32

    def full(shape):
        return pl.BlockSpec(shape, lambda i, _nd=len(shape): (0,) * _nd)

    kernel = functools.partial(_basic_block3d_kernel,
                               N=N, D=D, H=H, W=W, Cin=Cin, Cout=Cout)

    flops = 2 * Mr * (rhs1.shape[0] * rhs1.shape[1] + rhs2.shape[0] * rhs2.shape[1])
    bytes_accessed = (x2d.size * 2 + tapmask.size * 2 + rhs1.size * 2 + rhs2.size * 2
                      + gb.size * 4 + Mr * WC * 4)

    out2d = pl.pallas_call(
        kernel,
        out_shape=jax.ShapeDtypeStruct((Mr, WC), jnp.float32),
        grid=(1,),   # single step: training-mode BN needs global batch statistics (see TODO)
        in_specs=[full(x2d.shape), full(tapmask.shape), full(rhs1.shape),
                  full(rhs2.shape), full(gb.shape)],
        out_specs=full((Mr, WC)),
        compiler_params=pltpu.CompilerParams(
            dimension_semantics=("arbitrary",),
            # footprint here is < 1 MiB; 32 MiB is safe on v5e/v6e/v7x.  Raise on v6e once
            # the grid is row-tiled for larger shapes.
            vmem_limit_bytes=32 * 1024 * 1024),
        cost_estimate=pl.CostEstimate(flops=flops, transcendentals=3 * Cout,
                                      bytes_accessed=bytes_accessed),
    )(x2d, tapmask, rhs1, rhs2, gb)

    return out2d.reshape(N, D, H, W, Cout).astype(x.dtype)


def reference(x, params, conv_dtype=jnp.float32):
    """Pure-JAX reference.  conv_dtype=float32 is the exact PyTorch (f32) semantics;
    conv_dtype=bfloat16 reproduces the kernel's MXU input precision (f32 accumulation)."""
    Cin = x.shape[-1]
    Cout = params["w1"].shape[-1]

    def conv(inp, wflat, cin, cout):
        w = wflat.reshape(KSIZE, KSIZE, KSIZE, cin, cout).astype(conv_dtype)
        return jax.lax.conv_general_dilated(
            inp.astype(conv_dtype), w, (1, 1, 1), [(PAD, PAD)] * 3,
            dimension_numbers=("NDHWC", "DHWIO", "NDHWC"),
            preferred_element_type=jnp.float32)

    def bn(v, g, b):
        mean = v.mean(axis=(0, 1, 2, 3), keepdims=True)
        var = (v * v).mean(axis=(0, 1, 2, 3), keepdims=True) - mean * mean
        return g * (v - mean) * jax.lax.rsqrt(var + EPS) + b

    h1 = jax.nn.relu(bn(conv(x, params["w1"], Cin, Cout),
                        params["g1"], params["b1"]))
    main = bn(conv(h1, params["w2"], Cout, Cout), params["g2"], params["b2"])
    res = bn(conv(x, params["wd"], Cin, Cout), params["gd"], params["bd"])
    return jax.nn.relu(main + res)


if __name__ == "__main__":
    key = jax.random.PRNGKey(0)
    N, Cin, Cout, D, H, W = 2, 4, 8, 8, 8, 8
    ks = jax.random.split(key, 10)
    x = jax.random.normal(ks[0], (N, D, H, W, Cin), jnp.float32)
    params = dict(
        w1=0.1 * jax.random.normal(ks[1], (27, Cin, Cout), jnp.float32),
        w2=0.1 * jax.random.normal(ks[2], (27, Cout, Cout), jnp.float32),
        wd=0.1 * jax.random.normal(ks[3], (27, Cin, Cout), jnp.float32),
        g1=1.0 + 0.1 * jax.random.normal(ks[4], (1, Cout), jnp.float32),
        b1=0.1 * jax.random.normal(ks[5], (1, Cout), jnp.float32),
        g2=1.0 + 0.1 * jax.random.normal(ks[6], (1, Cout), jnp.float32),
        b2=0.1 * jax.random.normal(ks[7], (1, Cout), jnp.float32),
        gd=1.0 + 0.1 * jax.random.normal(ks[8], (1, Cout), jnp.float32),
        bd=0.1 * jax.random.normal(ks[9], (1, Cout), jnp.float32),
    )

    out = jax.block_until_ready(basic_block3d(x, params))
    assert out.shape == (N, D, H, W, Cout)

    # Tight check: reference at the kernel's MXU input precision (bf16 in, f32 accumulate).
    ref_b = reference(x, params, conv_dtype=jnp.bfloat16)
    err_b = float(jnp.max(jnp.abs(out - ref_b)))
    assert jnp.allclose(out, ref_b, atol=5e-3, rtol=5e-3), f"bf16-ref max err {err_b}"

    # Sanity check vs. exact f32 module semantics (bounds bf16 quantisation of the convs).
    ref_f = reference(x, params, conv_dtype=jnp.float32)
    err_f = float(jnp.max(jnp.abs(out - ref_f)))
    assert jnp.allclose(out, ref_f, atol=6e-2, rtol=6e-2), f"f32-ref max err {err_f}"

    print("KERNEL_OK")
</pallas_src>

<mosaic_0001>
module attributes {stable_mosaic.version = 11 : i64} {
  func.func @_basic_block3d_kernel(%arg0: i32, %arg1: memref<128x32xbf16, #tpu.memory_space<vmem>>, %arg2: memref<128x16xbf16, #tpu.memory_space<vmem>>, %arg3: memref<288x128xbf16, #tpu.memory_space<vmem>>, %arg4: memref<576x64xbf16, #tpu.memory_space<vmem>>, %arg5: memref<6x8xf32, #tpu.memory_space<vmem>>, %arg6: memref<128x64xf32, #tpu.memory_space<vmem>>) attributes {dimension_semantics = [#tpu.dimension_semantics<arbitrary>], iteration_bounds = array<i64: 1>, scalar_prefetch = 0 : i64, scratch_operands = 0 : i64, tpu.core_type = #tpu.core_type<tc>, window_params = [{pipeline_mode = #tpu.pipeline_mode<synchronous>, transform_indices = @transform_0, window_bounds = array<i64: 128, 32>}, {pipeline_mode = #tpu.pipeline_mode<synchronous>, transform_indices = @transform_1, window_bounds = array<i64: 128, 16>}, {pipeline_mode = #tpu.pipeline_mode<synchronous>, transform_indices = @transform_2, window_bounds = array<i64: 288, 128>}, {pipeline_mode = #tpu.pipeline_mode<synchronous>, transform_indices = @transform_3, window_bounds = array<i64: 576, 64>}, {pipeline_mode = #tpu.pipeline_mode<synchronous>, transform_indices = @transform_4, window_bounds = array<i64: 6, 8>}, {pipeline_mode = #tpu.pipeline_mode<synchronous>, transform_indices = @transform_5, window_bounds = array<i64: 128, 64>}]} {
    %c0 = arith.constant 0 : index
    %c0_0 = arith.constant 0 : index
    %0 = vector.load %arg1[%c0, %c0_0] : memref<128x32xbf16, #tpu.memory_space<vmem>>, vector<128x32xbf16>
    %cst = arith.constant 0.000000e+00 : bf16
    %1 = vector.broadcast %cst : bf16 to vector<9x32xbf16>
    %2 = vector.extract_strided_slice %0 {offsets = [0, 0], sizes = [119, 32], strides = [1, 1]} : vector<128x32xbf16> to vector<119x32xbf16>
    %3 = tpu.concatenate %1, %2 in 0 : vector<9x32xbf16>, vector<119x32xbf16> -> vector<128x32xbf16>
    %c0_1 = arith.constant 0 : index
    %c0_2 = arith.constant 0 : index
    %4 = vector.load %arg2[%c0_1, %c0_2] : memref<128x16xbf16, #tpu.memory_space<vmem>>, vector<128x1xbf16>
    %5 = vector.broadcast %4 : vector<128x1xbf16> to vector<128x32xbf16>
    %6 = arith.mulf %3, %5 : vector<128x32xbf16>
    %c0_3 = arith.constant 0 : index
    %c0_4 = arith.constant 0 : index
    %7 = vector.load %arg3[%c0_3, %c0_4] : memref<288x128xbf16, #tpu.memory_space<vmem>>, vector<32x128xbf16>
    %cst_5 = arith.constant dense<0.000000e+00> : vector<128x128xf32>
    %8 = tpu.matmul %6, %7, %cst_5 {dimension_numbers = #tpu.dot_dimension_numbers<[1], [0], [0], [1], [0, 0, 1, 1], [], []>} : vector<128x32xbf16>, vector<32x128xbf16>, vector<128x128xf32> -> vector<128x128xf32>
    %cst_6 = arith.constant 0.000000e+00 : bf16
    %9 = vector.broadcast %cst_6 : bf16 to vector<8x32xbf16>
    %10 = vector.extract_strided_slice %0 {offsets = [0, 0], sizes = [120, 32], strides = [1, 1]} : vector<128x32xbf16> to vector<120x32xbf16>
    %11 = tpu.concatenate %9, %10 in 0 : vector<8x32xbf16>, vector<120x32xbf16> -> vector<128x32xbf16>
    %c0_7 = arith.constant 0 : index
    %c1 = arith.constant 1 : index
    %12 = vector.load %arg2[%c0_7, %c1] : memref<128x16xbf16, #tpu.memory_space<vmem>>, vector<128x1xbf16>
    %13 = vector.broadcast %12 : vector<128x1xbf16> to vector<128x32xbf16>
    %14 = arith.mulf %11, %13 : vector<128x32xbf16>
    %c32 = arith.constant 32 : index
    %c0_8 = arith.constant 0 : index
    %15 = vector.load %arg3[%c32, %c0_8] : memref<288x128xbf16, #tpu.memory_space<vmem>>, vector<32x128xbf16>
    %cst_9 = arith.constant dense<0.000000e+00> : vector<128x128xf32>
    %16 = tpu.matmul %14, %15, %cst_9 {dimension_numbers = #tpu.dot_dimension_numbers<[1], [0], [0], [1], [0, 0, 1, 1], [], []>} : vector<128x32xbf16>, vector<32x128xbf16>, vector<128x128xf32> -> vector<128x128xf32>
    %17 = arith.addf %8, %16 : vector<128x128xf32>
    %cst_10 = arith.constant 0.000000e+00 : bf16
    %18 = vector.broadcast %cst_10 : bf16 to vector<7x32xbf16>
    %19 = vector.extract_strided_slice %0 {offsets = [0, 0], sizes = [121, 32], strides = [1, 1]} : vector<128x32xbf16> to vector<121x32xbf16>
    %20 = tpu.concatenate %18, %19 in 0 : vector<7x32xbf16>, vector<121x32xbf16> -> vector<128x32xbf16>
    %c0_11 = arith.constant 0 : index
    %c2 = arith.constant 2 : index
    %21 = vector.load %arg2[%c0_11, %c2] : memref<128x16xbf16, #tpu.memory_space<vmem>>, vector<128x1xbf16>
    %22 = vector.broadcast %21 : vector<128x1xbf16> to vector<128x32xbf16>
    %23 = arith.mulf %20, %22 : vector<128x32xbf16>
    %c64 = arith.constant 64 : index
    %c0_12 = arith.constant 0 : index
    %24 = vector.load %arg3[%c64, %c0_12] : memref<288x128xbf16, #tpu.memory_space<vmem>>, vector<32x128xbf16>
    %cst_13 = arith.constant dense<0.000000e+00> : vector<128x128xf32>
    %25 = tpu.matmul %23, %24, %cst_13 {dimension_numbers = #tpu.dot_dimension_numbers<[1], [0], [0], [1], [0, 0, 1, 1], [], []>} : vector<128x32xbf16>, vector<32x128xbf16>, vector<128x128xf32> -> vector<128x128xf32>
    %26 = arith.addf %17, %25 : vector<128x128xf32>
    %cst_14 = arith.constant 0.000000e+00 : bf16
    %27 = vector.broadcast %cst_14 : bf16 to vector<1x32xbf16>
    %28 = vector.extract_strided_slice %0 {offsets = [0, 0], sizes = [127, 32], strides = [1, 1]} : vector<128x32xbf16> to vector<127x32xbf16>
    %29 = tpu.concatenate %27, %28 in 0 : vector<1x32xbf16>, vector<127x32xbf16> -> vector<128x32xbf16>
    %c0_15 = arith.constant 0 : index
    %c3 = arith.constant 3 : index
    %30 = vector.load %arg2[%c0_15, %c3] : memref<128x16xbf16, #tpu.memory_space<vmem>>, vector<128x1xbf16>
    %31 = vector.broadcast %30 : vector<128x1xbf16> to vector<128x32xbf16>
    %32 = arith.mulf %29, %31 : vector<128x32xbf16>
    %c96 = arith.constant 96 : index
    %c0_16 = arith.constant 0 : index
    %33 = vector.load %arg3[%c96, %c0_16] : memref<288x128xbf16, #tpu.memory_space<vmem>>, vector<32x128xbf16>
    %cst_17 = arith.constant dense<0.000000e+00> : vector<128x128xf32>
    %34 = tpu.matmul %32, %33, %cst_17 {dimension_numbers = #tpu.dot_dimension_numbers<[1], [0], [0], [1], [0, 0, 1, 1], [], []>} : vector<128x32xbf16>, vector<32x128xbf16>, vector<128x128xf32> -> vector<128x128xf32>
    %35 = arith.addf %26, %34 : vector<128x128xf32>
    %c0_18 = arith.constant 0 : index
    %c4 = arith.constant 4 : index
    %36 = vector.load %arg2[%c0_18, %c4] : memref<128x16xbf16, #tpu.memory_space<vmem>>, vector<128x1xbf16>
    %37 = vector.broadcast %36 : vector<128x1xbf16> to vector<128x32xbf16>
    %38 = arith.mulf %0, %37 : vector<128x32xbf16>
    %c128 = arith.constant 128 : index
    %c0_19 = arith.constant 0 : index
    %39 = vector.load %arg3[%c128, %c0_19] : memref<288x128xbf16, #tpu.memory_space<vmem>>, vector<32x128xbf16>
    %cst_20 = arith.constant dense<0.000000e+00> : vector<128x128xf32>
    %40 = tpu.matmul %38, %39, %cst_20 {dimension_numbers = #tpu.dot_dimension_numbers<[1], [0], [0], [1], [0, 0, 1, 1], [], []>} : vector<128x32xbf16>, vector<32x128xbf16>, vector<128x128xf32> -> vector<128x128xf32>
    %41 = arith.addf %35, %40 : vector<128x128xf32>
    %cst_21 = arith.constant 0.000000e+00 : bf16
    %42 = vector.broadcast %cst_21 : bf16 to vector<1x32xbf16>
    %43 = vector.extract_strided_slice %0 {offsets = [1, 0], sizes = [127, 32], strides = [1, 1]} : vector<128x32xbf16> to vector<127x32xbf16>
    %44 = tpu.concatenate %43, %42 in 0 : vector<127x32xbf16>, vector<1x32xbf16> -> vector<128x32xbf16>
    %c0_22 = arith.constant 0 : index
    %c5 = arith.constant 5 : index
    %45 = vector.load %arg2[%c0_22, %c5] : memref<128x16xbf16, #tpu.memory_space<vmem>>, vector<128x1xbf16>
    %46 = vector.broadcast %45 : vector<128x1xbf16> to vector<128x32xbf16>
    %47 = arith.mulf %44, %46 : vector<128x32xbf16>
    %c160 = arith.constant 160 : index
    %c0_23 = arith.constant 0 : index
    %48 = vector.load %arg3[%c160, %c0_23] : memref<288x128xbf16, #tpu.memory_space<vmem>>, vector<32x128xbf16>
    %cst_24 = arith.constant dense<0.000000e+00> : vector<128x128xf32>
    %49 = tpu.matmul %47, %48, %cst_24 {dimension_numbers = #tpu.dot_dimension_numbers<[1], [0], [0], [1], [0, 0, 1, 1], [], []>} : vector<128x32xbf16>, vector<32x128xbf16>, vector<128x128xf32> -> vector<128x128xf32>
    %50 = arith.addf %41, %49 : vector<128x128xf32>
    %cst_25 = arith.constant 0.000000e+00 : bf16
    %51 = vector.broadcast %cst_25 : bf16 to vector<7x32xbf16>
    %52 = vector.extract_strided_slice %0 {offsets = [7, 0], sizes = [121, 32], strides = [1, 1]} : vector<128x32xbf16> to vector<121x32xbf16>
    %53 = tpu.concatenate %52, %51 in 0 : vector<121x32xbf16>, vector<7x32xbf16> -> vector<128x32xbf16>
    %c0_26 = arith.constant 0 : index
    %c6 = arith.constant 6 : index
    %54 = vector.load %arg2[%c0_26, %c6] : memref<128x16xbf16, #tpu.memory_space<vmem>>, vector<128x1xbf16>
    %55 = vector.broadcast %54 : vector<128x1xbf16> to vector<128x32xbf16>
    %56 = arith.mulf %53, %55 : vector<128x32xbf16>
    %c192 = arith.constant 192 : index
    %c0_27 = arith.constant 0 : index
    %57 = vector.load %arg3[%c192, %c0_27] : memref<288x128xbf16, #tpu.memory_space<vmem>>, vector<32x128xbf16>
    %cst_28 = arith.constant dense<0.000000e+00> : vector<128x128xf32>
    %58 = tpu.matmul %56, %57, %cst_28 {dimension_numbers = #tpu.dot_dimension_numbers<[1], [0], [0], [1], [0, 0, 1, 1], [], []>} : vector<128x32xbf16>, vector<32x128xbf16>, vector<128x128xf32> -> vector<128x128xf32>
    %59 = arith.addf %50, %58 : vector<128x128xf32>
    %cst_29 = arith.constant 0.000000e+00 : bf16
    %60 = vector.broadcast %cst_29 : bf16 to vector<8x32xbf16>
    %61 = vector.extract_strided_slice %0 {offsets = [8, 0], sizes = [120, 32], strides = [1, 1]} : vector<128x32xbf16> to vector<120x32xbf16>
    %62 = tpu.concatenate %61, %60 in 0 : vector<120x32xbf16>, vector<8x32xbf16> -> vector<128x32xbf16>
    %c0_30 = arith.constant 0 : index
    %c7 = arith.constant 7 : index
    %63 = vector.load %arg2[%c0_30, %c7] : memref<128x16xbf16, #tpu.memory_space<vmem>>, vector<128x1xbf16>
    %64 = vector.broadcast %63 : vector<128x1xbf16> to vector<128x32xbf16>
    %65 = arith.mulf %62, %64 : vector<128x32xbf16>
    %c224 = arith.constant 224 : index
    %c0_31 = arith.constant 0 : index
    %66 = vector.load %arg3[%c224, %c0_31] : memref<288x128xbf16, #tpu.memory_space<vmem>>, vector<32x128xbf16>
    %cst_32 = arith.constant dense<0.000000e+00> : vector<128x128xf32>
    %67 = tpu.matmul %65, %66, %cst_32 {dimension_numbers = #tpu.dot_dimension_numbers<[1], [0], [0], [1], [0, 0, 1, 1], [], []>} : vector<128x32xbf16>, vector<32x128xbf16>, vector<128x128xf32> -> vector<128x128xf32>
    %68 = arith.addf %59, %67 : vector<128x128xf32>
    %cst_33 = arith.constant 0.000000e+00 : bf16
    %69 = vector.broadcast %cst_33 : bf16 to vector<9x32xbf16>
    %70 = vector.extract_strided_slice %0 {offsets = [9, 0], sizes = [119, 32], strides = [1, 1]} : vector<128x32xbf16> to vector<119x32xbf16>
    %71 = tpu.concatenate %70, %69 in 0 : vector<119x32xbf16>, vector<9x32xbf16> -> vector<128x32xbf16>
    %c0_34 = arith.constant 0 : index
    %c8 = arith.constant 8 : index
    %72 = vector.load %arg2[%c0_34, %c8] : memref<128x16xbf16, #tpu.memory_space<vmem>>, vector<128x1xbf16>
    %73 = vector.broadcast %72 : vector<128x1xbf16> to vector<128x32xbf16>
    %74 = arith.mulf %71, %73 : vector<128x32xbf16>
    %c256 = arith.constant 256 : index
    %c0_35 = arith.constant 0 : index
    %75 = vector.load %arg3[%c256, %c0_35] : memref<288x128xbf16, #tpu.memory_space<vmem>>, vector<32x128xbf16>
    %cst_36 = arith.constant dense<0.000000e+00> : vector<128x128xf32>
    %76 = tpu.matmul %74, %75, %cst_36 {dimension_numbers = #tpu.dot_dimension_numbers<[1], [0], [0], [1], [0, 0, 1, 1], [], []>} : vector<128x32xbf16>, vector<32x128xbf16>, vector<128x128xf32> -> vector<128x128xf32>
    %77 = arith.addf %68, %76 : vector<128x128xf32>
    %78 = vector.extract_strided_slice %77 {offsets = [0, 0], sizes = [128, 64], strides = [1, 1]} : vector<128x128xf32> to vector<128x64xf32>
    %c0_37 = arith.constant 0 : index
    %c0_38 = arith.constant 0 : index
    %79 = vector.load %arg5[%c0_37, %c0_38] : memref<6x8xf32, #tpu.memory_space<vmem>>, vector<1x8xf32>
    %c1_39 = arith.constant 1 : index
    %c0_40 = arith.constant 0 : index
    %80 = vector.load %arg5[%c1_39, %c0_40] : memref<6x8xf32, #tpu.memory_space<vmem>>, vector<1x8xf32>
    %cst_41 = arith.constant dense<0.000000e+00> : vector<64xf32>
    %81 = vector.multi_reduction <add>, %78, %cst_41 [0] : vector<128x64xf32> to vector<64xf32>
    %82 = vector.shape_cast %81 : vector<64xf32> to vector<1x64xf32>
    %83 = vector.extract_strided_slice %82 {offsets = [0, 0], sizes = [1, 32], strides = [1, 1]} : vector<1x64xf32> to vector<1x32xf32>
    %84 = vector.extract_strided_slice %82 {offsets = [0, 32], sizes = [1, 32], strides = [1, 1]} : vector<1x64xf32> to vector<1x32xf32>
    %85 = arith.addf %83, %84 : vector<1x32xf32>
    %86 = vector.extract_strided_slice %85 {offsets = [0, 0], sizes = [1, 16], strides = [1, 1]} : vector<1x32xf32> to vector<1x16xf32>
    %87 = vector.extract_strided_slice %85 {offsets = [0, 16], sizes = [1, 16], strides = [1, 1]} : vector<1x32xf32> to vector<1x16xf32>
    %88 = arith.addf %86, %87 : vector<1x16xf32>
    %89 = vector.extract_strided_slice %88 {offsets = [0, 0], sizes = [1, 8], strides = [1, 1]} : vector<1x16xf32> to vector<1x8xf32>
    %90 = vector.extract_strided_slice %88 {offsets = [0, 8], sizes = [1, 8], strides = [1, 1]} : vector<1x16xf32> to vector<1x8xf32>
    %91 = arith.addf %89, %90 : vector<1x8xf32>
    %cst_42 = arith.constant 9.765625E-4 : f32
    %92 = vector.broadcast %cst_42 : f32 to vector<1x8xf32>
    %93 = arith.mulf %91, %92 : vector<1x8xf32>
    %94 = arith.mulf %78, %78 : vector<128x64xf32>
    %cst_43 = arith.constant dense<0.000000e+00> : vector<64xf32>
    %95 = vector.multi_reduction <add>, %94, %cst_43 [0] : vector<128x64xf32> to vector<64xf32>
    %96 = vector.shape_cast %95 : vector<64xf32> to vector<1x64xf32>
    %97 = vector.extract_strided_slice %96 {offsets = [0, 0], sizes = [1, 32], strides = [1, 1]} : vector<1x64xf32> to vector<1x32xf32>
    %98 = vector.extract_strided_slice %96 {offsets = [0, 32], sizes = [1, 32], strides = [1, 1]} : vector<1x64xf32> to vector<1x32xf32>
    %99 = arith.addf %97, %98 : vector<1x32xf32>
    %100 = vector.extract_strided_slice %99 {offsets = [0, 0], sizes = [1, 16], strides = [1, 1]} : vector<1x32xf32> to vector<1x16xf32>
    %101 = vector.extract_strided_slice %99 {offsets = [0, 16], sizes = [1, 16], strides = [1, 1]} : vector<1x32xf32> to vector<1x16xf32>
    %102 = arith.addf %100, %101 : vector<1x16xf32>
    %103 = vector.extract_strided_slice %102 {offsets = [0, 0], sizes = [1, 8], strides = [1, 1]} : vector<1x16xf32> to vector<1x8xf32>
    %104 = vector.extract_strided_slice %102 {offsets = [0, 8], sizes = [1, 8], strides = [1, 1]} : vector<1x16xf32> to vector<1x8xf32>
    %105 = arith.addf %103, %104 : vector<1x8xf32>
    %cst_44 = arith.constant 9.765625E-4 : f32
    %106 = vector.broadcast %cst_44 : f32 to vector<1x8xf32>
    %107 = arith.mulf %105, %106 : vector<1x8xf32>
    %108 = arith.mulf %93, %93 : vector<1x8xf32>
    %109 = arith.subf %107, %108 : vector<1x8xf32>
    %cst_45 = arith.constant 0.000000e+00 : f32
    %110 = vector.broadcast %cst_45 : f32 to vector<1x8xf32>
    %111 = arith.maximumf %109, %110 : vector<1x8xf32>
    %cst_46 = arith.constant 9.99999974E-6 : f32
    %112 = vector.broadcast %cst_46 : f32 to vector<1x8xf32>
    %113 = arith.addf %111, %112 : vector<1x8xf32>
    %114 = math.rsqrt %113 : vector<1x8xf32>
    %115 = arith.mulf %79, %114 : vector<1x8xf32>
    %116 = arith.mulf %93, %115 : vector<1x8xf32>
    %117 = arith.subf %80, %116 : vector<1x8xf32>
    %118 = tpu.concatenate %115, %115 in 1 : vector<1x8xf32>, vector<1x8xf32> -> vector<1x16xf32>
    %119 = tpu.concatenate %118, %118 in 1 : vector<1x16xf32>, vector<1x16xf32> -> vector<1x32xf32>
    %120 = tpu.concatenate %119, %119 in 1 : vector<1x32xf32>, vector<1x32xf32> -> vector<1x64xf32>
    %121 = vector.broadcast %120 : vector<1x64xf32> to vector<128x64xf32>
    %122 = arith.mulf %78, %121 : vector<128x64xf32>
    %123 = tpu.concatenate %117, %117 in 1 : vector<1x8xf32>, vector<1x8xf32> -> vector<1x16xf32>
    %124 = tpu.concatenate %123, %123 in 1 : vector<1x16xf32>, vector<1x16xf32> -> vector<1x32xf32>
    %125 = tpu.concatenate %124, %124 in 1 : vector<1x32xf32>, vector<1x32xf32> -> vector<1x64xf32>
    %126 = vector.broadcast %125 : vector<1x64xf32> to vector<128x64xf32>
    %127 = arith.addf %122, %126 : vector<128x64xf32>
    %cst_47 = arith.constant 0.000000e+00 : f32
    %128 = vector.broadcast %cst_47 : f32 to vector<128x64xf32>
    %129 = arith.maximumf %127, %128 : vector<128x64xf32>
    %130 = vector.extract_strided_slice %77 {offsets = [0, 64], sizes = [128, 64], strides = [1, 1]} : vector<128x128xf32> to vector<128x64xf32>
    %c2_48 = arith.constant 2 : index
    %c0_49 = arith.constant 0 : index
    %131 = vector.load %arg5[%c2_48, %c0_49] : memref<6x8xf32, #tpu.memory_space<vmem>>, vector<1x8xf32>
    %c3_50 = arith.constant 3 : index
    %c0_51 = arith.constant 0 : index
    %132 = vector.load %arg5[%c3_50, %c0_51] : memref<6x8xf32, #tpu.memory_space<vmem>>, vector<1x8xf32>
    %cst_52 = arith.constant dense<0.000000e+00> : vector<64xf32>
    %133 = vector.multi_reduction <add>, %130, %cst_52 [0] : vector<128x64xf32> to vector<64xf32>
    %134 = vector.shape_cast %133 : vector<64xf32> to vector<1x64xf32>
    %135 = vector.extract_strided_slice %134 {offsets = [0, 0], sizes = [1, 32], strides = [1, 1]} : vector<1x64xf32> to vector<1x32xf32>
    %136 = vector.extract_strided_slice %134 {offsets = [0, 32], sizes = [1, 32], strides = [1, 1]} : vector<1x64xf32> to vector<1x32xf32>
    %137 = arith.addf %135, %136 : vector<1x32xf32>
    %138 = vector.extract_strided_slice %137 {offsets = [0, 0], sizes = [1, 16], strides = [1, 1]} : vector<1x32xf32> to vector<1x16xf32>
    %139 = vector.extract_strided_slice %137 {offsets = [0, 16], sizes = [1, 16], strides = [1, 1]} : vector<1x32xf32> to vector<1x16xf32>
    %140 = arith.addf %138, %139 : vector<1x16xf32>
    %141 = vector.extract_strided_slice %140 {offsets = [0, 0], sizes = [1, 8], strides = [1, 1]} : vector<1x16xf32> to vector<1x8xf32>
    %142 = vector.extract_strided_slice %140 {offsets = [0, 8], sizes = [1, 8], strides = [1, 1]} : vector<1x16xf32> to vector<1x8xf32>
    %143 = arith.addf %141, %142 : vector<1x8xf32>
    %cst_53 = arith.constant 9.765625E-4 : f32
    %144 = vector.broadcast %cst_53 : f32 to vector<1x8xf32>
    %145 = arith.mulf %143, %144 : vector<1x8xf32>
    %146 = arith.mulf %130, %130 : vector<128x64xf32>
    %cst_54 = arith.constant dense<0.000000e+00> : vector<64xf32>
    %147 = vector.multi_reduction <add>, %146, %cst_54 [0] : vector<128x64xf32> to vector<64xf32>
    %148 = vector.shape_cast %147 : vector<64xf32> to vector<1x64xf32>
    %149 = vector.extract_strided_slice %148 {offsets = [0, 0], sizes = [1, 32], strides = [1, 1]} : vector<1x64xf32> to vector<1x32xf32>
    %150 = vector.extract_strided_slice %148 {offsets = [0, 32], sizes = [1, 32], strides = [1, 1]} : vector<1x64xf32> to vector<1x32xf32>
    %151 = arith.addf %149, %150 : vector<1x32xf32>
    %152 = vector.extract_strided_slice %151 {offsets = [0, 0], sizes = [1, 16], strides = [1, 1]} : vector<1x32xf32> to vector<1x16xf32>
    %153 = vector.extract_strided_slice %151 {offsets = [0, 16], sizes = [1, 16], strides = [1, 1]} : vector<1x32xf32> to vector<1x16xf32>
    %154 = arith.addf %152, %153 : vector<1x16xf32>
    %155 = vector.extract_strided_slice %154 {offsets = [0, 0], sizes = [1, 8], strides = [1, 1]} : vector<1x16xf32> to vector<1x8xf32>
    %156 = vector.extract_strided_slice %154 {offsets = [0, 8], sizes = [1, 8], strides = [1, 1]} : vector<1x16xf32> to vector<1x8xf32>
    %157 = arith.addf %155, %156 : vector<1x8xf32>
    %cst_55 = arith.constant 9.765625E-4 : f32
    %158 = vector.broadcast %cst_55 : f32 to vector<1x8xf32>
    %159 = arith.mulf %157, %158 : vector<1x8xf32>
    %160 = arith.mulf %145, %145 : vector<1x8xf32>
    %161 = arith.subf %159, %160 : vector<1x8xf32>
    %cst_56 = arith.constant 0.000000e+00 : f32
    %162 = vector.broadcast %cst_56 : f32 to vector<1x8xf32>
    %163 = arith.maximumf %161, %162 : vector<1x8xf32>
    %cst_57 = arith.constant 9.99999974E-6 : f32
    %164 = vector.broadcast %cst_57 : f32 to vector<1x8xf32>
    %165 = arith.addf %163, %164 : vector<1x8xf32>
    %166 = math.rsqrt %165 : vector<1x8xf32>
    %167 = arith.mulf %131, %166 : vector<1x8xf32>
    %168 = arith.mulf %145, %167 : vector<1x8xf32>
    %169 = arith.subf %132, %168 : vector<1x8xf32>
    %170 = tpu.concatenate %167, %167 in 1 : vector<1x8xf32>, vector<1x8xf32> -> vector<1x16xf32>
    %171 = tpu.concatenate %170, %170 in 1 : vector<1x16xf32>, vector<1x16xf32> -> vector<1x32xf32>
    %172 = tpu.concatenate %171, %171 in 1 : vector<1x32xf32>, vector<1x32xf32> -> vector<1x64xf32>
    %173 = vector.broadcast %172 : vector<1x64xf32> to vector<128x64xf32>
    %174 = arith.mulf %130, %173 : vector<128x64xf32>
    %175 = tpu.concatenate %169, %169 in 1 : vector<1x8xf32>, vector<1x8xf32> -> vector<1x16xf32>
    %176 = tpu.concatenate %175, %175 in 1 : vector<1x16xf32>, vector<1x16xf32> -> vector<1x32xf32>
    %177 = tpu.concatenate %176, %176 in 1 : vector<1x32xf32>, vector<1x32xf32> -> vector<1x64xf32>
    %178 = vector.broadcast %177 : vector<1x64xf32> to vector<128x64xf32>
    %179 = arith.addf %174, %178 : vector<128x64xf32>
    %180 = arith.truncf %129 : vector<128x64xf32> to vector<128x64xbf16>
    %cst_58 = arith.constant 0.000000e+00 : bf16
    %181 = vector.broadcast %cst_58 : bf16 to vector<9x64xbf16>
    %182 = vector.extract_strided_slice %180 {offsets = [0, 0], sizes = [119, 64], strides = [1, 1]} : vector<128x64xbf16> to vector<119x64xbf16>
    %183 = tpu.concatenate %181, %182 in 0 : vector<9x64xbf16>, vector<119x64xbf16> -> vector<128x64xbf16>
    %c0_59 = arith.constant 0 : index
    %c0_60 = arith.constant 0 : index
    %184 = vector.load %arg2[%c0_59, %c0_60] : memref<128x16xbf16, #tpu.memory_space<vmem>>, vector<128x1xbf16>
    %185 = vector.broadcast %184 : vector<128x1xbf16> to vector<128x64xbf16>
    %186 = arith.mulf %183, %185 : vector<128x64xbf16>
    %c0_61 = arith.constant 0 : index
    %c0_62 = arith.constant 0 : index
    %187 = vector.load %arg4[%c0_61, %c0_62] : memref<576x64xbf16, #tpu.memory_space<vmem>>, vector<64x64xbf16>
    %cst_63 = arith.constant dense<0.000000e+00> : vector<128x64xf32>
    %188 = tpu.matmul %186, %187, %cst_63 {dimension_numbers = #tpu.dot_dimension_numbers<[1], [0], [0], [1], [0, 0, 1, 1], [], []>} : vector<128x64xbf16>, vector<64x64xbf16>, vector<128x64xf32> -> vector<128x64xf32>
    %cst_64 = arith.constant 0.000000e+00 : bf16
    %189 = vector.broadcast %cst_64 : bf16 to vector<8x64xbf16>
    %190 = vector.extract_strided_slice %180 {offsets = [0, 0], sizes = [120, 64], strides = [1, 1]} : vector<128x64xbf16> to vector<120x64xbf16>
    %191 = tpu.concatenate %189, %190 in 0 : vector<8x64xbf16>, vector<120x64xbf16> -> vector<128x64xbf16>
    %c0_65 = arith.constant 0 : index
    %c1_66 = arith.constant 1 : index
    %192 = vector.load %arg2[%c0_65, %c1_66] : memref<128x16xbf16, #tpu.memory_space<vmem>>, vector<128x1xbf16>
    %193 = vector.broadcast %192 : vector<128x1xbf16> to vector<128x64xbf16>
    %194 = arith.mulf %191, %193 : vector<128x64xbf16>
    %c64_67 = arith.constant 64 : index
    %c0_68 = arith.constant 0 : index
    %195 = vector.load %arg4[%c64_67, %c0_68] : memref<576x64xbf16, #tpu.memory_space<vmem>>, vector<64x64xbf16>
    %cst_69 = arith.constant dense<0.000000e+00> : vector<128x64xf32>
    %196 = tpu.matmul %194, %195, %cst_69 {dimension_numbers = #tpu.dot_dimension_numbers<[1], [0], [0], [1], [0, 0, 1, 1], [], []>} : vector<128x64xbf16>, vector<64x64xbf16>, vector<128x64xf32> -> vector<128x64xf32>
    %197 = arith.addf %188, %196 : vector<128x64xf32>
    %cst_70 = arith.constant 0.000000e+00 : bf16
    %198 = vector.broadcast %cst_70 : bf16 to vector<7x64xbf16>
    %199 = vector.extract_strided_slice %180 {offsets = [0, 0], sizes = [121, 64], strides = [1, 1]} : vector<128x64xbf16> to vector<121x64xbf16>
    %200 = tpu.concatenate %198, %199 in 0 : vector<7x64xbf16>, vector<121x64xbf16> -> vector<128x64xbf16>
    %c0_71 = arith.constant 0 : index
    %c2_72 = arith.constant 2 : index
    %201 = vector.load %arg2[%c0_71, %c2_72] : memref<128x16xbf16, #tpu.memory_space<vmem>>, vector<128x1xbf16>
    %202 = vector.broadcast %201 : vector<128x1xbf16> to vector<128x64xbf16>
    %203 = arith.mulf %200, %202 : vector<128x64xbf16>
    %c128_73 = arith.constant 128 : index
    %c0_74 = arith.constant 0 : index
    %204 = vector.load %arg4[%c128_73, %c0_74] : memref<576x64xbf16, #tpu.memory_space<vmem>>, vector<64x64xbf16>
    %cst_75 = arith.constant dense<0.000000e+00> : vector<128x64xf32>
    %205 = tpu.matmul %203, %204, %cst_75 {dimension_numbers = #tpu.dot_dimension_numbers<[1], [0], [0], [1], [0, 0, 1, 1], [], []>} : vector<128x64xbf16>, vector<64x64xbf16>, vector<128x64xf32> -> vector<128x64xf32>
    %206 = arith.addf %197, %205 : vector<128x64xf32>
    %cst_76 = arith.constant 0.000000e+00 : bf16
    %207 = vector.broadcast %cst_76 : bf16 to vector<1x64xbf16>
    %208 = vector.extract_strided_slice %180 {offsets = [0, 0], sizes = [127, 64], strides = [1, 1]} : vector<128x64xbf16> to vector<127x64xbf16>
    %209 = tpu.concatenate %207, %208 in 0 : vector<1x64xbf16>, vector<127x64xbf16> -> vector<128x64xbf16>
    %c0_77 = arith.constant 0 : index
    %c3_78 = arith.constant 3 : index
    %210 = vector.load %arg2[%c0_77, %c3_78] : memref<128x16xbf16, #tpu.memory_space<vmem>>, vector<128x1xbf16>
    %211 = vector.broadcast %210 : vector<128x1xbf16> to vector<128x64xbf16>
    %212 = arith.mulf %209, %211 : vector<128x64xbf16>
    %c192_79 = arith.constant 192 : index
    %c0_80 = arith.constant 0 : index
    %213 = vector.load %arg4[%c192_79, %c0_80] : memref<576x64xbf16, #tpu.memory_space<vmem>>, vector<64x64xbf16>
    %cst_81 = arith.constant dense<0.000000e+00> : vector<128x64xf32>
    %214 = tpu.matmul %212, %213, %cst_81 {dimension_numbers = #tpu.dot_dimension_numbers<[1], [0], [0], [1], [0, 0, 1, 1], [], []>} : vector<128x64xbf16>, vector<64x64xbf16>, vector<128x64xf32> -> vector<128x64xf32>
    %215 = arith.addf %206, %214 : vector<128x64xf32>
    %c0_82 = arith.constant 0 : index
    %c4_83 = arith.constant 4 : index
    %216 = vector.load %arg2[%c0_82, %c4_83] : memref<128x16xbf16, #tpu.memory_space<vmem>>, vector<128x1xbf16>
    %217 = vector.broadcast %216 : vector<128x1xbf16> to vector<128x64xbf16>
    %218 = arith.mulf %180, %217 : vector<128x64xbf16>
    %c256_84 = arith.constant 256 : index
    %c0_85 = arith.constant 0 : index
    %219 = vector.load %arg4[%c256_84, %c0_85] : memref<576x64xbf16, #tpu.memory_space<vmem>>, vector<64x64xbf16>
    %cst_86 = arith.constant dense<0.000000e+00> : vector<128x64xf32>
    %220 = tpu.matmul %218, %219, %cst_86 {dimension_numbers = #tpu.dot_dimension_numbers<[1], [0], [0], [1], [0, 0, 1, 1], [], []>} : vector<128x64xbf16>, vector<64x64xbf16>, vector<128x64xf32> -> vector<128x64xf32>
    %221 = arith.addf %215, %220 : vector<128x64xf32>
    %cst_87 = arith.constant 0.000000e+00 : bf16
    %222 = vector.broadcast %cst_87 : bf16 to vector<1x64xbf16>
    %223 = vector.extract_strided_slice %180 {offsets = [1, 0], sizes = [127, 64], strides = [1, 1]} : vector<128x64xbf16> to vector<127x64xbf16>
    %224 = tpu.concatenate %223, %222 in 0 : vector<127x64xbf16>, vector<1x64xbf16> -> vector<128x64xbf16>
    %c0_88 = arith.constant 0 : index
    %c5_89 = arith.constant 5 : index
    %225 = vector.load %arg2[%c0_88, %c5_89] : memref<128x16xbf16, #tpu.memory_space<vmem>>, vector<128x1xbf16>
    %226 = vector.broadcast %225 : vector<128x1xbf16> to vector<128x64xbf16>
    %227 = arith.mulf %224, %226 : vector<128x64xbf16>
    %c320 = arith.constant 320 : index
    %c0_90 = arith.constant 0 : index
    %228 = vector.load %arg4[%c320, %c0_90] : memref<576x64xbf16, #tpu.memory_space<vmem>>, vector<64x64xbf16>
    %cst_91 = arith.constant dense<0.000000e+00> : vector<128x64xf32>
    %229 = tpu.matmul %227, %228, %cst_91 {dimension_numbers = #tpu.dot_dimension_numbers<[1], [0], [0], [1], [0, 0, 1, 1], [], []>} : vector<128x64xbf16>, vector<64x64xbf16>, vector<128x64xf32> -> vector<128x64xf32>
    %230 = arith.addf %221, %229 : vector<128x64xf32>
    %cst_92 = arith.constant 0.000000e+00 : bf16
    %231 = vector.broadcast %cst_92 : bf16 to vector<7x64xbf16>
    %232 = vector.extract_strided_slice %180 {offsets = [7, 0], sizes = [121, 64], strides = [1, 1]} : vector<128x64xbf16> to vector<121x64xbf16>
    %233 = tpu.concatenate %232, %231 in 0 : vector<121x64xbf16>, vector<7x64xbf16> -> vector<128x64xbf16>
    %c0_93 = arith.constant 0 : index
    %c6_94 = arith.constant 6 : index
    %234 = vector.load %arg2[%c0_93, %c6_94] : memref<128x16xbf16, #tpu.memory_space<vmem>>, vector<128x1xbf16>
    %235 = vector.broadcast %234 : vector<128x1xbf16> to vector<128x64xbf16>
    %236 = arith.mulf %233, %235 : vector<128x64xbf16>
    %c384 = arith.constant 384 : index
    %c0_95 = arith.constant 0 : index
    %237 = vector.load %arg4[%c384, %c0_95] : memref<576x64xbf16, #tpu.memory_space<vmem>>, vector<64x64xbf16>
    %cst_96 = arith.constant dense<0.000000e+00> : vector<128x64xf32>
    %238 = tpu.matmul %236, %237, %cst_96 {dimension_numbers = #tpu.dot_dimension_numbers<[1], [0], [0], [1], [0, 0, 1, 1], [], []>} : vector<128x64xbf16>, vector<64x64xbf16>, vector<128x64xf32> -> vector<128x64xf32>
    %239 = arith.addf %230, %238 : vector<128x64xf32>
    %cst_97 = arith.constant 0.000000e+00 : bf16
    %240 = vector.broadcast %cst_97 : bf16 to vector<8x64xbf16>
    %241 = vector.extract_strided_slice %180 {offsets = [8, 0], sizes = [120, 64], strides = [1, 1]} : vector<128x64xbf16> to vector<120x64xbf16>
    %242 = tpu.concatenate %241, %240 in 0 : vector<120x64xbf16>, vector<8x64xbf16> -> vector<128x64xbf16>
    %c0_98 = arith.constant 0 : index
    %c7_99 = arith.constant 7 : index
    %243 = vector.load %arg2[%c0_98, %c7_99] : memref<128x16xbf16, #tpu.memory_space<vmem>>, vector<128x1xbf16>
    %244 = vector.broadcast %243 : vector<128x1xbf16> to vector<128x64xbf16>
    %245 = arith.mulf %242, %244 : vector<128x64xbf16>
    %c448 = arith.constant 448 : index
    %c0_100 = arith.constant 0 : index
    %246 = vector.load %arg4[%c448, %c0_100] : memref<576x64xbf16, #tpu.memory_space<vmem>>, vector<64x64xbf16>
    %cst_101 = arith.constant dense<0.000000e+00> : vector<128x64xf32>
    %247 = tpu.matmul %245, %246, %cst_101 {dimension_numbers = #tpu.dot_dimension_numbers<[1], [0], [0], [1], [0, 0, 1, 1], [], []>} : vector<128x64xbf16>, vector<64x64xbf16>, vector<128x64xf32> -> vector<128x64xf32>
    %248 = arith.addf %239, %247 : vector<128x64xf32>
    %cst_102 = arith.constant 0.000000e+00 : bf16
    %249 = vector.broadcast %cst_102 : bf16 to vector<9x64xbf16>
    %250 = vector.extract_strided_slice %180 {offsets = [9, 0], sizes = [119, 64], strides = [1, 1]} : vector<128x64xbf16> to vector<119x64xbf16>
    %251 = tpu.concatenate %250, %249 in 0 : vector<119x64xbf16>, vector<9x64xbf16> -> vector<128x64xbf16>
    %c0_103 = arith.constant 0 : index
    %c8_104 = arith.constant 8 : index
    %252 = vector.load %arg2[%c0_103, %c8_104] : memref<128x16xbf16, #tpu.memory_space<vmem>>, vector<128x1xbf16>
    %253 = vector.broadcast %252 : vector<128x1xbf16> to vector<128x64xbf16>
    %254 = arith.mulf %251, %253 : vector<128x64xbf16>
    %c512 = arith.constant 512 : index
    %c0_105 = arith.constant 0 : index
    %255 = vector.load %arg4[%c512, %c0_105] : memref<576x64xbf16, #tpu.memory_space<vmem>>, vector<64x64xbf16>
    %cst_106 = arith.constant dense<0.000000e+00> : vector<128x64xf32>
    %256 = tpu.matmul %254, %255, %cst_106 {dimension_numbers = #tpu.dot_dimension_numbers<[1], [0], [0], [1], [0, 0, 1, 1], [], []>} : vector<128x64xbf16>, vector<64x64xbf16>, vector<128x64xf32> -> vector<128x64xf32>
    %257 = arith.addf %248, %256 : vector<128x64xf32>
    %c4_107 = arith.constant 4 : index
    %c0_108 = arith.constant 0 : index
    %258 = vector.load %arg5[%c4_107, %c0_108] : memref<6x8xf32, #tpu.memory_space<vmem>>, vector<1x8xf32>
    %c5_109 = arith.constant 5 : index
    %c0_110 = arith.constant 0 : index
    %259 = vector.load %arg5[%c5_109, %c0_110] : memref<6x8xf32, #tpu.memory_space<vmem>>, vector<1x8xf32>
    %cst_111 = arith.constant dense<0.000000e+00> : vector<64xf32>
    %260 = vector.multi_reduction <add>, %257, %cst_111 [0] : vector<128x64xf32> to vector<64xf32>
    %261 = vector.shape_cast %260 : vector<64xf32> to vector<1x64xf32>
    %262 = vector.extract_strided_slice %261 {offsets = [0, 0], sizes = [1, 32], strides = [1, 1]} : vector<1x64xf32> to vector<1x32xf32>
    %263 = vector.extract_strided_slice %261 {offsets = [0, 32], sizes = [1, 32], strides = [1, 1]} : vector<1x64xf32> to vector<1x32xf32>
    %264 = arith.addf %262, %263 : vector<1x32xf32>
    %265 = vector.extract_strided_slice %264 {offsets = [0, 0], sizes = [1, 16], strides = [1, 1]} : vector<1x32xf32> to vector<1x16xf32>
    %266 = vector.extract_strided_slice %264 {offsets = [0, 16], sizes = [1, 16], strides = [1, 1]} : vector<1x32xf32> to vector<1x16xf32>
    %267 = arith.addf %265, %266 : vector<1x16xf32>
    %268 = vector.extract_strided_slice %267 {offsets = [0, 0], sizes = [1, 8], strides = [1, 1]} : vector<1x16xf32> to vector<1x8xf32>
    %269 = vector.extract_strided_slice %267 {offsets = [0, 8], sizes = [1, 8], strides = [1, 1]} : vector<1x16xf32> to vector<1x8xf32>
    %270 = arith.addf %268, %269 : vector<1x8xf32>
    %cst_112 = arith.constant 9.765625E-4 : f32
    %271 = vector.broadcast %cst_112 : f32 to vector<1x8xf32>
    %272 = arith.mulf %270, %271 : vector<1x8xf32>
    %273 = arith.mulf %257, %257 : vector<128x64xf32>
    %cst_113 = arith.constant dense<0.000000e+00> : vector<64xf32>
    %274 = vector.multi_reduction <add>, %273, %cst_113 [0] : vector<128x64xf32> to vector<64xf32>
    %275 = vector.shape_cast %274 : vector<64xf32> to vector<1x64xf32>
    %276 = vector.extract_strided_slice %275 {offsets = [0, 0], sizes = [1, 32], strides = [1, 1]} : vector<1x64xf32> to vector<1x32xf32>
    %277 = vector.extract_strided_slice %275 {offsets = [0, 32], sizes = [1, 32], strides = [1, 1]} : vector<1x64xf32> to vector<1x32xf32>
    %278 = arith.addf %276, %277 : vector<1x32xf32>
    %279 = vector.extract_strided_slice %278 {offsets = [0, 0], sizes = [1, 16], strides = [1, 1]} : vector<1x32xf32> to vector<1x16xf32>
    %280 = vector.extract_strided_slice %278 {offsets = [0, 16], sizes = [1, 16], strides = [1, 1]} : vector<1x32xf32> to vector<1x16xf32>
    %281 = arith.addf %279, %280 : vector<1x16xf32>
    %282 = vector.extract_strided_slice %281 {offsets = [0, 0], sizes = [1, 8], strides = [1, 1]} : vector<1x16xf32> to vector<1x8xf32>
    %283 = vector.extract_strided_slice %281 {offsets = [0, 8], sizes = [1, 8], strides = [1, 1]} : vector<1x16xf32> to vector<1x8xf32>
    %284 = arith.addf %282, %283 : vector<1x8xf32>
    %cst_114 = arith.constant 9.765625E-4 : f32
    %285 = vector.broadcast %cst_114 : f32 to vector<1x8xf32>
    %286 = arith.mulf %284, %285 : vector<1x8xf32>
    %287 = arith.mulf %272, %272 : vector<1x8xf32>
    %288 = arith.subf %286, %287 : vector<1x8xf32>
    %cst_115 = arith.constant 0.000000e+00 : f32
    %289 = vector.broadcast %cst_115 : f32 to vector<1x8xf32>
    %290 = arith.maximumf %288, %289 : vector<1x8xf32>
    %cst_116 = arith.constant 9.99999974E-6 : f32
    %291 = vector.broadcast %cst_116 : f32 to vector<1x8xf32>
    %292 = arith.addf %290, %291 : vector<1x8xf32>
    %293 = math.rsqrt %292 : vector<1x8xf32>
    %294 = arith.mulf %258, %293 : vector<1x8xf32>
    %295 = arith.mulf %272, %294 : vector<1x8xf32>
    %296 = arith.subf %259, %295 : vector<1x8xf32>
    %297 = tpu.concatenate %294, %294 in 1 : vector<1x8xf32>, vector<1x8xf32> -> vector<1x16xf32>
    %298 = tpu.concatenate %297, %297 in 1 : vector<1x16xf32>, vector<1x16xf32> -> vector<1x32xf32>
    %299 = tpu.concatenate %298, %298 in 1 : vector<1x32xf32>, vector<1x32xf32> -> vector<1x64xf32>
    %300 = vector.broadcast %299 : vector<1x64xf32> to vector<128x64xf32>
    %301 = arith.mulf %257, %300 : vector<128x64xf32>
    %302 = tpu.concatenate %296, %296 in 1 : vector<1x8xf32>, vector<1x8xf32> -> vector<1x16xf32>
    %303 = tpu.concatenate %302, %302 in 1 : vector<1x16xf32>, vector<1x16xf32> -> vector<1x32xf32>
    %304 = tpu.concatenate %303, %303 in 1 : vector<1x32xf32>, vector<1x32xf32> -> vector<1x64xf32>
    %305 = vector.broadcast %304 : vector<1x64xf32> to vector<128x64xf32>
    %306 = arith.addf %301, %305 : vector<128x64xf32>
    %307 = arith.addf %306, %179 : vector<128x64xf32>
    %cst_117 = arith.constant 0.000000e+00 : f32
    %308 = vector.broadcast %cst_117 : f32 to vector<128x64xf32>
    %309 = arith.maximumf %307, %308 : vector<128x64xf32>
    %c0_118 = arith.constant 0 : index
    %c0_119 = arith.constant 0 : index
    %310 = vector.load %arg6[%c0_118, %c0_119] : memref<128x64xf32, #tpu.memory_space<vmem>>, vector<128x64xf32>
    tpu.vector_store %arg6[%c0_118, %c0_119], %309 {strides = array<i32>} : memref<128x64xf32, #tpu.memory_space<vmem>>, vector<128x64xf32>,
    return
  }
  func.func @transform_0(%arg0: i32) -> (i32, i32) {
    %c0_i32 = arith.constant 0 : i32
    %c0_i32_0 = arith.constant 0 : i32
    %c0_i32_1 = arith.constant 0 : i32
    return %c0_i32, %c0_i32_0 : i32, i32
  }
  func.func @transform_1(%arg0: i32) -> (i32, i32) {
    %c0_i32 = arith.constant 0 : i32
    %c0_i32_0 = arith.constant 0 : i32
    %c0_i32_1 = arith.constant 0 : i32
    return %c0_i32, %c0_i32_0 : i32, i32
  }
  func.func @transform_2(%arg0: i32) -> (i32, i32) {
    %c0_i32 = arith.constant 0 : i32
    %c0_i32_0 = arith.constant 0 : i32
    %c0_i32_1 = arith.constant 0 : i32
    return %c0_i32, %c0_i32_0 : i32, i32
  }
  func.func @transform_3(%arg0: i32) -> (i32, i32) {
    %c0_i32 = arith.constant 0 : i32
    %c0_i32_0 = arith.constant 0 : i32
    %c0_i32_1 = arith.constant 0 : i32
    return %c0_i32, %c0_i32_0 : i32, i32
  }
  func.func @transform_4(%arg0: i32) -> (i32, i32) {
    %c0_i32 = arith.constant 0 : i32
    %c0_i32_0 = arith.constant 0 : i32
    %c0_i32_1 = arith.constant 0 : i32
    return %c0_i32, %c0_i32_0 : i32, i32
  }
  func.func @transform_5(%arg0: i32) -> (i32, i32) {
    %c0_i32 = arith.constant 0 : i32
    %c0_i32_0 = arith.constant 0 : i32
    %c0_i32_1 = arith.constant 0 : i32
    return %c0_i32, %c0_i32_0 : i32, i32
  }
}

</mosaic_0001>

<llo_original>
// kernel: tpu_custom_call.1
$region0: #{tpu_custom_call.1}
  #allocation0 [shape = 'u32[]', space=smem, size = 0x4, offset = 0x4, fixed_abs, tag = 'smem constant byte address 0x4 - core index']
  #allocation1 [shape = 'u32[144,128]{1,0:T(1,128)}', space=vmem, size = 0x12000, scoped, tag = 'internal scratch']
  %s0 = inlined_call_operand.vmem [shape: bf16[128,32], index: 0, kind: input, shape index: {}]
  %s1 = inlined_call_operand.vmem [shape: bf16[128,16], index: 1, kind: input, shape index: {}]
  %s2 = inlined_call_operand.vmem [shape: bf16[288,128], index: 2, kind: input, shape index: {}]
  %s3 = inlined_call_operand.vmem [shape: bf16[576,64], index: 3, kind: input, shape index: {}]
  %s4 = inlined_call_operand.vmem [shape: f32[6,8], index: 4, kind: input, shape index: {}]
  %s5 = inlined_call_operand.vmem [shape: f32[128,64], index: 5, kind: output, shape index: {}]
  %s6 = sld [smem:[#allocation0]]
  $region30: #{tpu_custom_call.1} parent=0
    _
  %s8 = ssub.s32 1, %s6
  %s9 = scalar_select 0, %s8, %s6
  // Predicated region
  $region2: #{tpu_custom_call.1} parent=0 // pred_check
    _
  $region3: #{tpu_custom_call.1} parent=0 // pred_check_branch
    %11 = sbr.rel (0) target = $region5
  $region4: #{tpu_custom_call.1} parent=0 // pred_region
    _
  $region5: #{tpu_custom_call.1} parent=0 // pred_fallthru
    _
  // Predicated region
  $region6: #{tpu_custom_call.1} parent=0 // pred_check
    _
  $region7: #{tpu_custom_call.1} parent=0 // pred_check_branch
    %13 = sbr.rel (0) target = $region9
  $region8: #{tpu_custom_call.1} parent=0 // pred_region
    _
  $region9: #{tpu_custom_call.1} parent=0 // pred_fallthru
    _
  // Predicated region
  $region10: #{tpu_custom_call.1} parent=0 // pred_check
    _
  $region11: #{tpu_custom_call.1} parent=0 // pred_check_branch
    %15 = sbr.rel (0) target = $region13
  $region12: #{tpu_custom_call.1} parent=0 // pred_region
    _
  $region13: #{tpu_custom_call.1} parent=0 // pred_fallthru
    _
  // Predicated region
  $region14: #{tpu_custom_call.1} parent=0 // pred_check
    _
  $region15: #{tpu_custom_call.1} parent=0 // pred_check_branch
    %17 = sbr.rel (0) target = $region17
  $region16: #{tpu_custom_call.1} parent=0 // pred_region
    _
  $region17: #{tpu_custom_call.1} parent=0 // pred_fallthru
    _
  // Predicated region
  $region18: #{tpu_custom_call.1} parent=0 // pred_check
    _
  $region19: #{tpu_custom_call.1} parent=0 // pred_check_branch
    %19 = sbr.rel (0) target = $region21
  $region20: #{tpu_custom_call.1} parent=0 // pred_region
    _
  $region21: #{tpu_custom_call.1} parent=0 // pred_fallthru
    _
  %v21 = vld [vmem:[%s0] sm:$0xf]
  %v22 = vld [vmem:[%s0 + $0x4] sm:$0xf]
  %v23 = vld [vmem:[%s0 + $0x8] sm:$0xf]
  %v24 = vld [vmem:[%s0 + $0xc] sm:$0xf]
  %v25 = vld [vmem:[%s0 + $0x10] sm:$0xf]
  %v26 = vld [vmem:[%s0 + $0x14] sm:$0xf]
  %v27 = vld [vmem:[%s0 + $0x18] sm:$0xf]
  %v28 = vld [vmem:[%s0 + $0x1c] sm:$0xf]
  %v29 = vld [vmem:[%s0 + $0x20] sm:$0xf]
  %v30 = vld [vmem:[%s0 + $0x24] sm:$0xf]
  %v31 = vld [vmem:[%s0 + $0x28] sm:$0xf]
  %v32 = vld [vmem:[%s0 + $0x2c] sm:$0xf]
  %v33 = vld [vmem:[%s0 + $0x30] sm:$0xf]
  %v34 = vld [vmem:[%s0 + $0x34] sm:$0xf]
  %v35 = vld [vmem:[%s0 + $0x38] sm:$0xf]
  %v36 = vld [vmem:[%s0 + $0x3c] sm:$0xf]
  %v52 = vunpack.c.l.b16 %v21
  %v53 = vunpack.c.l.b16 %v22
  %v54 = vunpack.c.l.b16 %v23
  %v55 = vunpack.c.l.b16 %v24
  %v56 = vunpack.c.l.b16 %v25
  %v57 = vunpack.c.l.b16 %v26
  %v58 = vunpack.c.l.b16 %v27
  %v59 = vunpack.c.l.b16 %v28
  %v60 = vunpack.c.l.b16 %v29
  %v61 = vunpack.c.l.b16 %v30
  %v62 = vunpack.c.l.b16 %v31
  %v63 = vunpack.c.l.b16 %v32
  %v64 = vunpack.c.l.b16 %v33
  %v65 = vunpack.c.l.b16 %v34
  %v66 = vunpack.c.l.b16 %v35
  %v67 = vpack.c.b16 %v53, %v52
  %v68 = vpack.c.b16 %v55, %v54
  %v69 = vpack.c.b16 %v57, %v56
  %v70 = vpack.c.b16 %v59, %v58
  %v71 = vpack.c.b16 %v61, %v60
  %v72 = vpack.c.b16 %v63, %v62
  %v73 = vpack.c.b16 %v65, %v64
  %v74 = vpack.c.b16 %v66, %v66
  %vm75 = vsmask.f32 4352
  %v77 = vshrl.u32 %v67, 16
  %v79 = vrot.slane %v77, 3
  %v80 = vshll.u32 %v67, 16
  %v82 = vrot.slane %v80, 4
  %v83 = vor.u32 %v79, %v82
  %v85 = vshrl.u32 %v68, 16
  %v87 = vrot.slane %v85, 3
  %v88 = vshll.u32 %v68, 16
  %v90 = vrot.slane %v88, 4
  %v91 = vor.u32 %v87, %v90
  %v92 = vsel %vm75, %v83, %v91
  %v94 = vshrl.u32 %v69, 16
  %v96 = vrot.slane %v94, 3
  %v97 = vshll.u32 %v69, 16
  %v99 = vrot.slane %v97, 4
  %v100 = vor.u32 %v96, %v99
  %v101 = vsel %vm75, %v91, %v100
  %v103 = vshrl.u32 %v70, 16
  %v105 = vrot.slane %v103, 3
  %v106 = vshll.u32 %v70, 16
  %v108 = vrot.slane %v106, 4
  %v109 = vor.u32 %v105, %v108
  %v110 = vsel %vm75, %v100, %v109
  %v112 = vshrl.u32 %v71, 16
  %v114 = vrot.slane %v112, 3
  %v115 = vshll.u32 %v71, 16
  %v117 = vrot.slane %v115, 4
  %v118 = vor.u32 %v114, %v117
  %v119 = vsel %vm75, %v109, %v118
  %v121 = vshrl.u32 %v72, 16
  %v123 = vrot.slane %v121, 3
  %v124 = vshll.u32 %v72, 16
  %v126 = vrot.slane %v124, 4
  %v127 = vor.u32 %v123, %v126
  %v128 = vsel %vm75, %v118, %v127
  %v130 = vshrl.u32 %v73, 16
  %v132 = vrot.slane %v130, 3
  %v133 = vshll.u32 %v73, 16
  %v135 = vrot.slane %v133, 4
  %v136 = vor.u32 %v132, %v135
  %v137 = vsel %vm75, %v127, %v136
  %v139 = vshrl.u32 %v74, 16
  %v141 = vrot.slane %v139, 3
  %v142 = vshll.u32 %v74, 16
  %v144 = vrot.slane %v142, 4
  %v145 = vor.u32 %v141, %v144
  %v146 = vsel %vm75, %v136, %v145
  %vm155 = vcmask 1044480
  %vm156 = vmand %vm155, %vm75
  %v157 = vsel %vm156, 0, %v83
  %v158 = vld [vmem:[%s1] sm:$0xf]
  %v159 = vld [vmem:[%s1 + $0x4] sm:$0xf]
  %v160 = vld [vmem:[%s1 + $0x8] sm:$0xf]
  %v161 = vld [vmem:[%s1 + $0xc] sm:$0xf]
  %v162 = vld [vmem:[%s1 + $0x10] sm:$0xf]
  %v163 = vld [vmem:[%s1 + $0x14] sm:$0xf]
  %v164 = vld [vmem:[%s1 + $0x18] sm:$0xf]
  %v165 = vld [vmem:[%s1 + $0x1c] sm:$0xf]
  %v166 = vld [vmem:[%s1 + $0x20] sm:$0xf]
  %v167 = vld [vmem:[%s1 + $0x24] sm:$0xf]
  %v168 = vld [vmem:[%s1 + $0x28] sm:$0xf]
  %v169 = vld [vmem:[%s1 + $0x2c] sm:$0xf]
  %v170 = vld [vmem:[%s1 + $0x30] sm:$0xf]
  %v171 = vld [vmem:[%s1 + $0x34] sm:$0xf]
  %v172 = vld [vmem:[%s1 + $0x38] sm:$0xf]
  %v173 = vld [vmem:[%s1 + $0x3c] sm:$0xf]
  %175 = vset.pattern.permute.xlu0 0
  %176 = vperm.xlu0 %175, %v158
  %v177 = vpop.permute.xlu0 %176
  %v180 = vunpack.c.l.s4 839922192
  %v181 = vunpack.c.0.s8 %v180
  %v182 = vlaneseq
  %v183 = vshrl.u32 %v182, 7
  %v184 = vsub.s32 %v181, %v183
  %v185 = vrot.slane %v177, %v184
  %187 = vset.pattern.permute.xlu0 0
  %188 = vperm.xlu0 %187, %v159
  %v189 = vpop.permute.xlu0 %188
  %v192 = vunpack.c.l.s4 839922192
  %v193 = vunpack.c.0.s8 %v192
  %v194 = vlaneseq
  %v195 = vshrl.u32 %v194, 7
  %v196 = vsub.s32 %v193, %v195
  %v197 = vrot.slane %v189, %v196
  %199 = vset.pattern.permute.xlu0 0
  %200 = vperm.xlu0 %199, %v160
  %v201 = vpop.permute.xlu0 %200
  %v204 = vunpack.c.l.s4 839922192
  %v205 = vunpack.c.0.s8 %v204
  %v206 = vlaneseq
  %v207 = vshrl.u32 %v206, 7
  %v208 = vsub.s32 %v205, %v207
  %v209 = vrot.slane %v201, %v208
  %211 = vset.pattern.permute.xlu0 0
  %212 = vperm.xlu0 %211, %v161
  %v213 = vpop.permute.xlu0 %212
  %v216 = vunpack.c.l.s4 839922192
  %v217 = vunpack.c.0.s8 %v216
  %v218 = vlaneseq
  %v219 = vshrl.u32 %v218, 7
  %v220 = vsub.s32 %v217, %v219
  %v221 = vrot.slane %v213, %v220
  %223 = vset.pattern.permute.xlu0 0
  %224 = vperm.xlu0 %223, %v162
  %v225 = vpop.permute.xlu0 %224
  %v228 = vunpack.c.l.s4 839922192
  %v229 = vunpack.c.0.s8 %v228
  %v230 = vlaneseq
  %v231 = vshrl.u32 %v230, 7
  %v232 = vsub.s32 %v229, %v231
  %v233 = vrot.slane %v225, %v232
  %235 = vset.pattern.permute.xlu0 0
  %236 = vperm.xlu0 %235, %v163
  %v237 = vpop.permute.xlu0 %236
  %v240 = vunpack.c.l.s4 839922192
  %v241 = vunpack.c.0.s8 %v240
  %v242 = vlaneseq
  %v243 = vshrl.u32 %v242, 7
  %v244 = vsub.s32 %v241, %v243
  %v245 = vrot.slane %v237, %v244
  %247 = vset.pattern.permute.xlu0 0
  %248 = vperm.xlu0 %247, %v164
  %v249 = vpop.permute.xlu0 %248
  %v252 = vunpack.c.l.s4 839922192
  %v253 = vunpack.c.0.s8 %v252
  %v254 = vlaneseq
  %v255 = vshrl.u32 %v254, 7
  %v256 = vsub.s32 %v253, %v255
  %v257 = vrot.slane %v249, %v256
  %259 = vset.pattern.permute.xlu0 0
  %260 = vperm.xlu0 %259, %v165
  %v261 = vpop.permute.xlu0 %260
  %v264 = vunpack.c.l.s4 839922192
  %v265 = vunpack.c.0.s8 %v264
  %v266 = vlaneseq
  %v267 = vshrl.u32 %v266, 7
  %v268 = vsub.s32 %v265, %v267
  %v269 = vrot.slane %v261, %v268
  %271 = vset.pattern.permute.xlu0 0
  %272 = vperm.xlu0 %271, %v166
  %v273 = vpop.permute.xlu0 %272
  %v276 = vunpack.c.l.s4 839922192
  %v277 = vunpack.c.0.s8 %v276
  %v278 = vlaneseq
  %v279 = vshrl.u32 %v278, 7
  %v280 = vsub.s32 %v277, %v279
  %v281 = vrot.slane %v273, %v280
  %283 = vset.pattern.permute.xlu0 0
  %284 = vperm.xlu0 %283, %v167
  %v285 = vpop.permute.xlu0 %284
  %v288 = vunpack.c.l.s4 839922192
  %v289 = vunpack.c.0.s8 %v288
  %v290 = vlaneseq
  %v291 = vshrl.u32 %v290, 7
  %v292 = vsub.s32 %v289, %v291
  %v293 = vrot.slane %v285, %v292
  %295 = vset.pattern.permute.xlu0 0
  %296 = vperm.xlu0 %295, %v168
  %v297 = vpop.permute.xlu0 %296
  %v300 = vunpack.c.l.s4 839922192
  %v301 = vunpack.c.0.s8 %v300
  %v302 = vlaneseq
  %v303 = vshrl.u32 %v302, 7
  %v304 = vsub.s32 %v301, %v303
  %v305 = vrot.slane %v297, %v304
  %307 = vset.pattern.permute.xlu0 0
  %308 = vperm.xlu0 %307, %v169
  %v309 = vpop.permute.xlu0 %308
  %v312 = vunpack.c.l.s4 839922192
  %v313 = vunpack.c.0.s8 %v312
  %v314 = vlaneseq
  %v315 = vshrl.u32 %v314, 7
  %v316 = vsub.s32 %v313, %v315
  %v317 = vrot.slane %v309, %v316
  %319 = vset.pattern.permute.xlu0 0
  %320 = vperm.xlu0 %319, %v170
  %v321 = vpop.permute.xlu0 %320
  %v324 = vunpack.c.l.s4 839922192
  %v325 = vunpack.c.0.s8 %v324
  %v326 = vlaneseq
  %v327 = vshrl.u32 %v326, 7
  %v328 = vsub.s32 %v325, %v327
  %v329 = vrot.slane %v321, %v328
  %331 = vset.pattern.permute.xlu0 0
  %332 = vperm.xlu0 %331, %v171
  %v333 = vpop.permute.xlu0 %332
  %v336 = vunpack.c.l.s4 839922192
  %v337 = vunpack.c.0.s8 %v336
  %v338 = vlaneseq
  %v339 = vshrl.u32 %v338, 7
  %v340 = vsub.s32 %v337, %v339
  %v341 = vrot.slane %v333, %v340
  %343 = vset.pattern.permute.xlu0 0
  %344 = vperm.xlu0 %343, %v172
  %v345 = vpop.permute.xlu0 %344
  %v348 = vunpack.c.l.s4 839922192
  %v349 = vunpack.c.0.s8 %v348
  %v350 = vlaneseq
  %v351 = vshrl.u32 %v350, 7
  %v352 = vsub.s32 %v349, %v351
  %v353 = vrot.slane %v345, %v352
  %355 = vset.pattern.permute.xlu0 0
  %356 = vperm.xlu0 %355, %v173
  %v357 = vpop.permute.xlu0 %356
  %v360 = vunpack.c.l.s4 839922192
  %v361 = vunpack.c.0.s8 %v360
  %v362 = vlaneseq
  %v363 = vshrl.u32 %v362, 7
  %v364 = vsub.s32 %v361, %v363
  %v365 = vrot.slane %v357, %v364
  %v382 = vunpack.c.l.b16 %v185
  %v383 = vunpack.c.l.b16 %v197
  %v384 = vunpack.c.l.b16 %v209
  %v385 = vunpack.c.l.b16 %v221
  %v386 = vunpack.c.l.b16 %v233
  %v387 = vunpack.c.l.b16 %v245
  %v388 = vunpack.c.l.b16 %v257
  %v389 = vunpack.c.l.b16 %v269
  %v390 = vunpack.c.l.b16 %v281
  %v391 = vunpack.c.l.b16 %v293
  %v392 = vunpack.c.l.b16 %v305
  %v393 = vunpack.c.l.b16 %v317
  %v394 = vunpack.c.l.b16 %v329
  %v395 = vunpack.c.l.b16 %v341
  %v396 = vunpack.c.l.b16 %v353
  %v397 = vunpack.c.l.b16 %v365
  %v398 = vpack.c.b16 %v383, %v382
  %v399 = vpack.c.b16 %v385, %v384
  %v400 = vpack.c.b16 %v387, %v386
  %v401 = vpack.c.b16 %v389, %v388
  %v402 = vpack.c.b16 %v391, %v390
  %v403 = vpack.c.b16 %v393, %v392
  %v404 = vpack.c.b16 %v395, %v394
  %v405 = vpack.c.b16 %v397, %v396
  %v414 = vmul.bf16 %v157, %v398
  %v415 = vmul.bf16 %v92, %v399
  %v416 = vmul.bf16 %v101, %v400
  %v417 = vmul.bf16 %v110, %v401
  %v418 = vmul.bf16 %v119, %v402
  %v419 = vmul.bf16 %v128, %v403
  %v420 = vmul.bf16 %v137, %v404
  %v421 = vmul.bf16 %v146, %v405
  %v422 = vld [vmem:[%s2] sm:$0xf]
  %v423 = vld [vmem:[%s2 + $0x4] sm:$0xf]
  %v424 = vld [vmem:[%s2 + $0x8] sm:$0xf]
  %v425 = vld [vmem:[%s2 + $0xc] sm:$0xf]
  %v426 = vpack.c.b16 %v52, %v52
  %v427 = vpack.c.b16 %v54, %v53
  %v428 = vpack.c.b16 %v56, %v55
  %v429 = vpack.c.b16 %v58, %v57
  %v430 = vpack.c.b16 %v60, %v59
  %v431 = vpack.c.b16 %v62, %v61
  %v432 = vpack.c.b16 %v64, %v63
  %v433 = vpack.c.b16 %v66, %v65
  %vm441 = vcmask 1043456
  %v444 = vsel %vm441, 0, %v426
  %446 = vset.pattern.permute.xlu0 1
  %447 = vperm.xlu0 %446, %v158
  %v448 = vpop.permute.xlu0 %447
  %v451 = vunpack.c.l.s4 839922192
  %v452 = vunpack.c.0.s8 %v451
  %v453 = vlaneseq
  %v454 = vshrl.u32 %v453, 7
  %v455 = vsub.s32 %v452, %v454
  %v456 = vrot.slane %v448, %v455
  %457 = vset.pattern.permute.xlu0 1
  %458 = vperm.xlu0 %457, %v159
  %v459 = vpop.permute.xlu0 %458
  %v462 = vunpack.c.l.s4 839922192
  %v463 = vunpack.c.0.s8 %v462
  %v464 = vlaneseq
  %v465 = vshrl.u32 %v464, 7
  %v466 = vsub.s32 %v463, %v465
  %v467 = vrot.slane %v459, %v466
  %468 = vset.pattern.permute.xlu0 1
  %469 = vperm.xlu0 %468, %v160
  %v470 = vpop.permute.xlu0 %469
  %v473 = vunpack.c.l.s4 839922192
  %v474 = vunpack.c.0.s8 %v473
  %v475 = vlaneseq
  %v476 = vshrl.u32 %v475, 7
  %v477 = vsub.s32 %v474, %v476
  %v478 = vrot.slane %v470, %v477
  %479 = vset.pattern.permute.xlu0 1
  %480 = vperm.xlu0 %479, %v161
  %v481 = vpop.permute.xlu0 %480
  %v484 = vunpack.c.l.s4 839922192
  %v485 = vunpack.c.0.s8 %v484
  %v486 = vlaneseq
  %v487 = vshrl.u32 %v486, 7
  %v488 = vsub.s32 %v485, %v487
  %v489 = vrot.slane %v481, %v488
  %490 = vset.pattern.permute.xlu0 1
  %491 = vperm.xlu0 %490, %v162
  %v492 = vpop.permute.xlu0 %491
  %v495 = vunpack.c.l.s4 839922192
  %v496 = vunpack.c.0.s8 %v495
  %v497 = vlaneseq
  %v498 = vshrl.u32 %v497, 7
  %v499 = vsub.s32 %v496, %v498
  %v500 = vrot.slane %v492, %v499
  %501 = vset.pattern.permute.xlu0 1
  %502 = vperm.xlu0 %501, %v163
  %v503 = vpop.permute.xlu0 %502
  %v506 = vunpack.c.l.s4 839922192
  %v507 = vunpack.c.0.s8 %v506
  %v508 = vlaneseq
  %v509 = vshrl.u32 %v508, 7
  %v510 = vsub.s32 %v507, %v509
  %v511 = vrot.slane %v503, %v510
  %512 = vset.pattern.permute.xlu0 1
  %513 = vperm.xlu0 %512, %v164
  %v514 = vpop.permute.xlu0 %513
  %v517 = vunpack.c.l.s4 839922192
  %v518 = vunpack.c.0.s8 %v517
  %v519 = vlaneseq
  %v520 = vshrl.u32 %v519, 7
  %v521 = vsub.s32 %v518, %v520
  %v522 = vrot.slane %v514, %v521
  %523 = vset.pattern.permute.xlu0 1
  %524 = vperm.xlu0 %523, %v165
  %v525 = vpop.permute.xlu0 %524
  %v528 = vunpack.c.l.s4 839922192
  %v529 = vunpack.c.0.s8 %v528
  %v530 = vlaneseq
  %v531 = vshrl.u32 %v530, 7
  %v532 = vsub.s32 %v529, %v531
  %v533 = vrot.slane %v525, %v532
  %534 = vset.pattern.permute.xlu0 1
  %535 = vperm.xlu0 %534, %v166
  %v536 = vpop.permute.xlu0 %535
  %v539 = vunpack.c.l.s4 839922192
  %v540 = vunpack.c.0.s8 %v539
  %v541 = vlaneseq
  %v542 = vshrl.u32 %v541, 7
  %v543 = vsub.s32 %v540, %v542
  %v544 = vrot.slane %v536, %v543
  %545 = vset.pattern.permute.xlu0 1
  %546 = vperm.xlu0 %545, %v167
  %v547 = vpop.permute.xlu0 %546
  %v550 = vunpack.c.l.s4 839922192
  %v551 = vunpack.c.0.s8 %v550
  %v552 = vlaneseq
  %v553 = vshrl.u32 %v552, 7
  %v554 = vsub.s32 %v551, %v553
  %v555 = vrot.slane %v547, %v554
  %556 = vset.pattern.permute.xlu0 1
  %557 = vperm.xlu0 %556, %v168
  %v558 = vpop.permute.xlu0 %557
  %v561 = vunpack.c.l.s4 839922192
  %v562 = vunpack.c.0.s8 %v561
  %v563 = vlaneseq
  %v564 = vshrl.u32 %v563, 7
  %v565 = vsub.s32 %v562, %v564
  %v566 = vrot.slane %v558, %v565
  %567 = vset.pattern.permute.xlu0 1
  %568 = vperm.xlu0 %567, %v169
  %v569 = vpop.permute.xlu0 %568
  %v572 = vunpack.c.l.s4 839922192
  %v573 = vunpack.c.0.s8 %v572
  %v574 = vlaneseq
  %v575 = vshrl.u32 %v574, 7
  %v576 = vsub.s32 %v573, %v575
  %v577 = vrot.slane %v569, %v576
  %578 = vset.pattern.permute.xlu0 1
  %579 = vperm.xlu0 %578, %v170
  %v580 = vpop.permute.xlu0 %579
  %v583 = vunpack.c.l.s4 839922192
  %v584 = vunpack.c.0.s8 %v583
  %v585 = vlaneseq
  %v586 = vshrl.u32 %v585, 7
  %v587 = vsub.s32 %v584, %v586
  %v588 = vrot.slane %v580, %v587
  %589 = vset.pattern.permute.xlu0 1
  %590 = vperm.xlu0 %589, %v171
  %v591 = vpop.permute.xlu0 %590
  %v594 = vunpack.c.l.s4 839922192
  %v595 = vunpack.c.0.s8 %v594
  %v596 = vlaneseq
  %v597 = vshrl.u32 %v596, 7
  %v598 = vsub.s32 %v595, %v597
  %v599 = vrot.slane %v591, %v598
  %600 = vset.pattern.permute.xlu0 1
  %601 = vperm.xlu0 %600, %v172
  %v602 = vpop.permute.xlu0 %601
  %v605 = vunpack.c.l.s4 839922192
  %v606 = vunpack.c.0.s8 %v605
  %v607 = vlaneseq
  %v608 = vshrl.u32 %v607, 7
  %v609 = vsub.s32 %v606, %v608
  %v610 = vrot.slane %v602, %v609
  %611 = vset.pattern.permute.xlu0 1
  %612 = vperm.xlu0 %611, %v173
  %v613 = vpop.permute.xlu0 %612
  %v616 = vunpack.c.l.s4 839922192
  %v617 = vunpack.c.0.s8 %v616
  %v618 = vlaneseq
  %v619 = vshrl.u32 %v618, 7
  %v620 = vsub.s32 %v617, %v619
  %v621 = vrot.slane %v613, %v620
  %v638 = vunpack.c.l.b16 %v456
  %v639 = vunpack.c.l.b16 %v467
  %v640 = vunpack.c.l.b16 %v478
  %v641 = vunpack.c.l.b16 %v489
  %v642 = vunpack.c.l.b16 %v500
  %v643 = vunpack.c.l.b16 %v511
  %v644 = vunpack.c.l.b16 %v522
  %v645 = vunpack.c.l.b16 %v533
  %v646 = vunpack.c.l.b16 %v544
  %v647 = vunpack.c.l.b16 %v555
  %v648 = vunpack.c.l.b16 %v566
  %v649 = vunpack.c.l.b16 %v577
  %v650 = vunpack.c.l.b16 %v588
  %v651 = vunpack.c.l.b16 %v599
  %v652 = vunpack.c.l.b16 %v610
  %v653 = vunpack.c.l.b16 %v621
  %v654 = vpack.c.b16 %v639, %v638
  %v655 = vpack.c.b16 %v641, %v640
  %v656 = vpack.c.b16 %v643, %v642
  %v657 = vpack.c.b16 %v645, %v644
  %v658 = vpack.c.b16 %v647, %v646
  %v659 = vpack.c.b16 %v649, %v648
  %v660 = vpack.c.b16 %v651, %v650
  %v661 = vpack.c.b16 %v653, %v652
  %v670 = vmul.bf16 %v444, %v654
  %v671 = vmul.bf16 %v427, %v655
  %v672 = vmul.bf16 %v428, %v656
  %v673 = vmul.bf16 %v429, %v657
  %v674 = vmul.bf16 %v430, %v658
  %v675 = vmul.bf16 %v431, %v659
  %v676 = vmul.bf16 %v432, %v660
  %v677 = vmul.bf16 %v433, %v661
  %v678 = vld [vmem:[%s2 + $0x10] sm:$0xf]
  %v679 = vld [vmem:[%s2 + $0x14] sm:$0xf]
  %v680 = vld [vmem:[%s2 + $0x18] sm:$0xf]
  %v681 = vld [vmem:[%s2 + $0x1c] sm:$0xf]
  %v686 = vunpack.c.l.b16 %v678
  %v687 = vunpack.c.l.b16 %v679
  %v688 = vunpack.c.l.b16 %v680
  %v689 = vunpack.c.l.b16 %v681
  %v690 = vpack.c.b16 %v687, %v686
  %v691 = vpack.c.b16 %v689, %v688
  %vm694 = vcmask 261120
  %v696 = vsel %vm694, %v670, 0
  %v699 = vsel %vm694, %v671, 0
  %v702 = vsel %vm694, %v672, 0
  %v705 = vsel %vm694, %v673, 0
  %v708 = vsel %vm694, %v674, 0
  %v711 = vsel %vm694, %v675, 0
  %v714 = vsel %vm694, %v676, 0
  %v717 = vsel %vm694, %v677, 0
  %719 = vmatprep.subr.bf16.mxu0 0
  %720 = vmatpush1.bf16.msra.mxu0 %v690
  %721 = vmatprep.subr.bf16.mxu0 0
  %722 = vmatpush1.bf16.msra.mxu0 %v691
  %723 = vmatprep.subr.bf16.mxu0 0
  %724 = vmatpush1.bf16.msra.mxu0 0
  %725 = vmatprep.subr.bf16.mxu0 0
  %726 = vmatpush1.bf16.msra.mxu0 0
  %727 = vmatprep.subr.bf16.mxu0 0
  %728 = vmatpush1.bf16.msra.mxu0 0
  %729 = vmatprep.subr.bf16.mxu0 0
  %730 = vmatpush1.bf16.msra.mxu0 0
  %731 = vmatprep.subr.bf16.mxu0 0
  %732 = vmatpush1.bf16.msra.mxu0 0
  %733 = vmatprep.subr.bf16.mxu0 0
  %734 = vmatpush1.bf16.msra.mxu0 0
  %735 = vmatprep.subr.bf16.mxu0 0
  %736 = vmatpush1.bf16.msra.mxu0 0
  %737 = vmatprep.subr.bf16.mxu0 0
  %738 = vmatpush1.bf16.msra.mxu0 0
  %739 = vmatprep.subr.bf16.mxu0 0
  %740 = vmatpush1.bf16.msra.mxu0 0
  %741 = vmatprep.subr.bf16.mxu0 0
  %742 = vmatpush1.bf16.msra.mxu0 0
  %743 = vmatprep.subr.bf16.mxu0 0
  %744 = vmatpush1.bf16.msra.mxu0 0
  %745 = vmatprep.subr.bf16.mxu0 0
  %746 = vmatpush1.bf16.msra.mxu0 0
  %747 = vmatprep.subr.bf16.mxu0 0
  %748 = vmatpush1.bf16.msra.mxu0 0
  %749 = vmatprep.subr.bf16.mxu0 0
  %750 = vmatpush1.bf16.msra.mxu0 0
  %751 = vmatprep.mubr.bf16.mxu0 0
  %752 = vmatmul.mubr.bf16.gmra.mrb[0].mxu0 %v696
  %v753 = vpop.f32.mrb[0].mxu0
  %v754 = vadd.f32 0.0, %v753
  %v755 = vpop.f32.mrb[0].mxu0
  %v756 = vpop.f32.mrb[0].mxu0
  %v757 = vadd.f32 0.0, %v756
  %v758 = vpop.f32.mrb[0].mxu0
  %759 = vmatprep.mubr.bf16.mxu0 0
  %760 = vmatmul.mubr.bf16.gmra.mrb[0].mxu0 %v699
  %v761 = vpop.f32.mrb[0].mxu0
  %v762 = vadd.f32 0.0, %v761
  %v763 = vpop.f32.mrb[0].mxu0
  %v764 = vpop.f32.mrb[0].mxu0
  %v765 = vadd.f32 0.0, %v764
  %v766 = vpop.f32.mrb[0].mxu0
  %767 = vmatprep.mubr.bf16.mxu0 0
  %768 = vmatmul.mubr.bf16.gmra.mrb[0].mxu0 %v702
  %v769 = vpop.f32.mrb[0].mxu0
  %v770 = vadd.f32 0.0, %v769
  %v771 = vpop.f32.mrb[0].mxu0
  %v772 = vpop.f32.mrb[0].mxu0
  %v773 = vadd.f32 0.0, %v772
  %v774 = vpop.f32.mrb[0].mxu0
  %775 = vmatprep.mubr.bf16.mxu0 0
  %776 = vmatmul.mubr.bf16.gmra.mrb[0].mxu0 %v705
  %v777 = vpop.f32.mrb[0].mxu0
  %v778 = vadd.f32 0.0, %v777
  %v779 = vpop.f32.mrb[0].mxu0
  %v780 = vpop.f32.mrb[0].mxu0
  %v781 = vadd.f32 0.0, %v780
  %v782 = vpop.f32.mrb[0].mxu0
  %783 = vmatprep.mubr.bf16.mxu0 0
  %784 = vmatmul.mubr.bf16.gmra.mrb[0].mxu0 %v708
  %v785 = vpop.f32.mrb[0].mxu0
  %v786 = vadd.f32 0.0, %v785
  %v787 = vpop.f32.mrb[0].mxu0
  %v788 = vpop.f32.mrb[0].mxu0
  %v789 = vadd.f32 0.0, %v788
  %v790 = vpop.f32.mrb[0].mxu0
  %791 = vmatprep.mubr.bf16.mxu0 0
  %792 = vmatmul.mubr.bf16.gmra.mrb[0].mxu0 %v711
  %v793 = vpop.f32.mrb[0].mxu0
  %v794 = vadd.f32 0.0, %v793
  %v795 = vpop.f32.mrb[0].mxu0
  %v796 = vpop.f32.mrb[0].mxu0
  %v797 = vadd.f32 0.0, %v796
  %v798 = vpop.f32.mrb[0].mxu0
  %799 = vmatprep.mubr.bf16.mxu0 0
  %800 = vmatmul.mubr.bf16.gmra.mrb[0].mxu0 %v714
  %v801 = vpop.f32.mrb[0].mxu0
  %v802 = vadd.f32 0.0, %v801
  %v803 = vpop.f32.mrb[0].mxu0
  %v804 = vpop.f32.mrb[0].mxu0
  %v805 = vadd.f32 0.0, %v804
  %v806 = vpop.f32.mrb[0].mxu0
  %807 = vmatprep.mubr.bf16.mxu0 0
  %808 = vmatmul.mubr.bf16.gmra.mrb[0].mxu0 %v717
  %v809 = vpop.f32.mrb[0].mxu0
  %v810 = vadd.f32 0.0, %v809
  %v811 = vpop.f32.mrb[0].mxu0
  %v812 = vpop.f32.mrb[0].mxu0
  %v813 = vadd.f32 0.0, %v812
  %v814 = vpop.f32.mrb[0].mxu0
  %815 = vdwg.mxu0
  %v820 = vunpack.c.l.b16 %v422
  %v821 = vunpack.c.l.b16 %v423
  %v822 = vunpack.c.l.b16 %v424
  %v823 = vunpack.c.l.b16 %v425
  %v824 = vpack.c.b16 %v821, %v820
  %v825 = vpack.c.b16 %v823, %v822
  %v829 = vsel %vm694, %v414, 0
  %v832 = vsel %vm694, %v415, 0
  %v835 = vsel %vm694, %v416, 0
  %v838 = vsel %vm694, %v417, 0
  %v841 = vsel %vm694, %v418, 0
  %v844 = vsel %vm694, %v419, 0
  %v847 = vsel %vm694, %v420, 0
  %v850 = vsel %vm694, %v421, 0
  %852 = vmatprep.subr.bf16.mxu0 0
  %853 = vmatpush1.bf16.msra.mxu0 %v824
  %854 = vmatprep.subr.bf16.mxu0 0
  %855 = vmatpush1.bf16.msra.mxu0 %v825
  %856 = vmatprep.subr.bf16.mxu0 0
  %857 = vmatpush1.bf16.msra.mxu0 0
  %858 = vmatprep.subr.bf16.mxu0 0
  %859 = vmatpush1.bf16.msra.mxu0 0
  %860 = vmatprep.subr.bf16.mxu0 0
  %861 = vmatpush1.bf16.msra.mxu0 0
  %862 = vmatprep.subr.bf16.mxu0 0
  %863 = vmatpush1.bf16.msra.mxu0 0
  %864 = vmatprep.subr.bf16.mxu0 0
  %865 = vmatpush1.bf16.msra.mxu0 0
  %866 = vmatprep.subr.bf16.mxu0 0
  %867 = vmatpush1.bf16.msra.mxu0 0
  %868 = vmatprep.subr.bf16.mxu0 0
  %869 = vmatpush1.bf16.msra.mxu0 0
  %870 = vmatprep.subr.bf16.mxu0 0
  %871 = vmatpush1.bf16.msra.mxu0 0
  %872 = vmatprep.subr.bf16.mxu0 0
  %873 = vmatpush1.bf16.msra.mxu0 0
  %874 = vmatprep.subr.bf16.mxu0 0
  %875 = vmatpush1.bf16.msra.mxu0 0
  %876 = vmatprep.subr.bf16.mxu0 0
  %877 = vmatpush1.bf16.msra.mxu0 0
  %878 = vmatprep.subr.bf16.mxu0 0
  %879 = vmatpush1.bf16.msra.mxu0 0
  %880 = vmatprep.subr.bf16.mxu0 0
  %881 = vmatpush1.bf16.msra.mxu0 0
  %882 = vmatprep.subr.bf16.mxu0 0
  %883 = vmatpush1.bf16.msra.mxu0 0
  %884 = vmatprep.mubr.bf16.mxu0 0
  %885 = vmatmul.mubr.bf16.gmra.mrb[0].mxu0 %v829
  %v886 = vpop.f32.mrb[0].mxu0
  %v887 = vadd.f32 %v754, %v886
  %v888 = vpop.f32.mrb[0].mxu0
  %v889 = vpop.f32.mrb[0].mxu0
  %v890 = vadd.f32 %v757, %v889
  %v891 = vpop.f32.mrb[0].mxu0
  %892 = vmatprep.mubr.bf16.mxu0 0
  %893 = vmatmul.mubr.bf16.gmra.mrb[0].mxu0 %v832
  %v894 = vpop.f32.mrb[0].mxu0
  %v895 = vadd.f32 %v762, %v894
  %v896 = vpop.f32.mrb[0].mxu0
  %v897 = vpop.f32.mrb[0].mxu0
  %v898 = vadd.f32 %v765, %v897
  %v899 = vpop.f32.mrb[0].mxu0
  %900 = vmatprep.mubr.bf16.mxu0 0
  %901 = vmatmul.mubr.bf16.gmra.mrb[0].mxu0 %v835
  %v902 = vpop.f32.mrb[0].mxu0
  %v903 = vadd.f32 %v770, %v902
  %v904 = vpop.f32.mrb[0].mxu0
  %v905 = vpop.f32.mrb[0].mxu0
  %v906 = vadd.f32 %v773, %v905
  %v907 = vpop.f32.mrb[0].mxu0
  %908 = vmatprep.mubr.bf16.mxu0 0
  %909 = vmatmul.mubr.bf16.gmra.mrb[0].mxu0 %v838
  %v910 = vpop.f32.mrb[0].mxu0
  %v911 = vadd.f32 %v778, %v910
  %v912 = vpop.f32.mrb[0].mxu0
  %v913 = vpop.f32.mrb[0].mxu0
  %v914 = vadd.f32 %v781, %v913
  %v915 = vpop.f32.mrb[0].mxu0
  %916 = vmatprep.mubr.bf16.mxu0 0
  %917 = vmatmul.mubr.bf16.gmra.mrb[0].mxu0 %v841
  %v918 = vpop.f32.mrb[0].mxu0
  %v919 = vadd.f32 %v786, %v918
  %v920 = vpop.f32.mrb[0].mxu0
  %v921 = vpop.f32.mrb[0].mxu0
  %v922 = vadd.f32 %v789, %v921
  %v923 = vpop.f32.mrb[0].mxu0
  %924 = vmatprep.mubr.bf16.mxu0 0
  %925 = vmatmul.mubr.bf16.gmra.mrb[0].mxu0 %v844
  %v926 = vpop.f32.mrb[0].mxu0
  %v927 = vadd.f32 %v794, %v926
  %v928 = vpop.f32.mrb[0].mxu0
  %v929 = vpop.f32.mrb[0].mxu0
  %v930 = vadd.f32 %v797, %v929
  %v931 = vpop.f32.mrb[0].mxu0
  %932 = vmatprep.mubr.bf16.mxu0 0
  %933 = vmatmul.mubr.bf16.gmra.mrb[0].mxu0 %v847
  %v934 = vpop.f32.mrb[0].mxu0
  %v935 = vadd.f32 %v802, %v934
  %v936 = vpop.f32.mrb[0].mxu0
  %v937 = vpop.f32.mrb[0].mxu0
  %v938 = vadd.f32 %v805, %v937
  %v939 = vpop.f32.mrb[0].mxu0
  %940 = vmatprep.mubr.bf16.mxu0 0
  %941 = vmatmul.mubr.bf16.gmra.mrb[0].mxu0 %v850
  %v942 = vpop.f32.mrb[0].mxu0
  %v943 = vadd.f32 %v810, %v942
  %v944 = vpop.f32.mrb[0].mxu0
  %v945 = vpop.f32.mrb[0].mxu0
  %v946 = vadd.f32 %v813, %v945
  %v947 = vpop.f32.mrb[0].mxu0
  %948 = vdwg.mxu0
  %v950 = vunpack.c.l.b16 %v36
  %v951 = vpack.c.b16 %v950, %v66
  %vm952 = vsmask.f32 3328
  %v953 = vrot.slane %v77, 4
  %v954 = vrot.slane %v80, 5
  %v955 = vor.u32 %v953, %v954
  %v956 = vrot.slane %v85, 4
  %v957 = vrot.slane %v88, 5
  %v958 = vor.u32 %v956, %v957
  %v959 = vsel %vm952, %v955, %v958
  %v960 = vrot.slane %v94, 4
  %v961 = vrot.slane %v97, 5
  %v962 = vor.u32 %v960, %v961
  %v963 = vsel %vm952, %v958, %v962
  %v964 = vrot.slane %v103, 4
  %v965 = vrot.slane %v106, 5
  %v966 = vor.u32 %v964, %v965
  %v967 = vsel %vm952, %v962, %v966
  %v968 = vrot.slane %v112, 4
  %v969 = vrot.slane %v115, 5
  %v970 = vor.u32 %v968, %v969
  %v971 = vsel %vm952, %v966, %v970
  %v972 = vrot.slane %v121, 4
  %v973 = vrot.slane %v124, 5
  %v974 = vor.u32 %v972, %v973
  %v975 = vsel %vm952, %v970, %v974
  %v976 = vrot.slane %v130, 4
  %v977 = vrot.slane %v133, 5
  %v978 = vor.u32 %v976, %v977
  %v979 = vsel %vm952, %v974, %v978
  %v981 = vshrl.u32 %v951, 16
  %v983 = vrot.slane %v981, 4
  %v984 = vshll.u32 %v951, 16
  %v986 = vrot.slane %v984, 5
  %v987 = vor.u32 %v983, %v986
  %v988 = vsel %vm952, %v978, %v987
  %vm997 = vcmask 1043456
  %vm998 = vmand %vm997, %vm952
  %v999 = vsel %vm998, 0, %v955
  %1000 = vset.pattern.permute.xlu0 2
  %1001 = vperm.xlu0 %1000, %v158
  %v1002 = vpop.permute.xlu0 %1001
  %v1005 = vunpack.c.l.s4 839922192
  %v1006 = vunpack.c.0.s8 %v1005
  %v1007 = vlaneseq
  %v1008 = vshrl.u32 %v1007, 7
  %v1009 = vsub.s32 %v1006, %v1008
  %v1010 = vrot.slane %v1002, %v1009
  %1011 = vset.pattern.permute.xlu0 2
  %1012 = vperm.xlu0 %1011, %v159
  %v1013 = vpop.permute.xlu0 %1012
  %v1016 = vunpack.c.l.s4 839922192
  %v1017 = vunpack.c.0.s8 %v1016
  %v1018 = vlaneseq
  %v1019 = vshrl.u32 %v1018, 7
  %v1020 = vsub.s32 %v1017, %v1019
  %v1021 = vrot.slane %v1013, %v1020
  %1022 = vset.pattern.permute.xlu0 2
  %1023 = vperm.xlu0 %1022, %v160
  %v1024 = vpop.permute.xlu0 %1023
  %v1027 = vunpack.c.l.s4 839922192
  %v1028 = vunpack.c.0.s8 %v1027
  %v1029 = vlaneseq
  %v1030 = vshrl.u32 %v1029, 7
  %v1031 = vsub.s32 %v1028, %v1030
  %v1032 = vrot.slane %v1024, %v1031
  %1033 = vset.pattern.permute.xlu0 2
  %1034 = vperm.xlu0 %1033, %v161
  %v1035 = vpop.permute.xlu0 %1034
  %v1038 = vunpack.c.l.s4 839922192
  %v1039 = vunpack.c.0.s8 %v1038
  %v1040 = vlaneseq
  %v1041 = vshrl.u32 %v1040, 7
  %v1042 = vsub.s32 %v1039, %v1041
  %v1043 = vrot.slane %v1035, %v1042
  %1044 = vset.pattern.permute.xlu0 2
  %1045 = vperm.xlu0 %1044, %v162
  %v1046 = vpop.permute.xlu0 %1045
  %v1049 = vunpack.c.l.s4 839922192
  %v1050 = vunpack.c.0.s8 %v1049
  %v1051 = vlaneseq
  %v1052 = vshrl.u32 %v1051, 7
  %v1053 = vsub.s32 %v1050, %v1052
  %v1054 = vrot.slane %v1046, %v1053
  %1055 = vset.pattern.permute.xlu0 2
  %1056 = vperm.xlu0 %1055, %v163
  %v1057 = vpop.permute.xlu0 %1056
  %v1060 = vunpack.c.l.s4 839922192
  %v1061 = vunpack.c.0.s8 %v1060
  %v1062 = vlaneseq
  %v1063 = vshrl.u32 %v1062, 7
  %v1064 = vsub.s32 %v1061, %v1063
  %v1065 = vrot.slane %v1057, %v1064
  %1066 = vset.pattern.permute.xlu0 2
  %1067 = vperm.xlu0 %1066, %v164
  %v1068 = vpop.permute.xlu0 %1067
  %v1071 = vunpack.c.l.s4 839922192
  %v1072 = vunpack.c.0.s8 %v1071
  %v1073 = vlaneseq
  %v1074 = vshrl.u32 %v1073, 7
  %v1075 = vsub.s32 %v1072, %v1074
  %v1076 = vrot.slane %v1068, %v1075
  %1077 = vset.pattern.permute.xlu0 2
  %1078 = vperm.xlu0 %1077, %v165
  %v1079 = vpop.permute.xlu0 %1078
  %v1082 = vunpack.c.l.s4 839922192
  %v1083 = vunpack.c.0.s8 %v1082
  %v1084 = vlaneseq
  %v1085 = vshrl.u32 %v1084, 7
  %v1086 = vsub.s32 %v1083, %v1085
  %v1087 = vrot.slane %v1079, %v1086
  %1088 = vset.pattern.permute.xlu0 2
  %1089 = vperm.xlu0 %1088, %v166
  %v1090 = vpop.permute.xlu0 %1089
  %v1093 = vunpack.c.l.s4 839922192
  %v1094 = vunpack.c.0.s8 %v1093
  %v1095 = vlaneseq
  %v1096 = vshrl.u32 %v1095, 7
  %v1097 = vsub.s32 %v1094, %v1096
  %v1098 = vrot.slane %v1090, %v1097
  %1099 = vset.pattern.permute.xlu0 2
  %1100 = vperm.xlu0 %1099, %v167
  %v1101 = vpop.permute.xlu0 %1100
  %v1104 = vunpack.c.l.s4 839922192
  %v1105 = vunpack.c.0.s8 %v1104
  %v1106 = vlaneseq
  %v1107 = vshrl.u32 %v1106, 7
  %v1108 = vsub.s32 %v1105, %v1107
  %v1109 = vrot.slane %v1101, %v1108
  %1110 = vset.pattern.permute.xlu0 2
  %1111 = vperm.xlu0 %1110, %v168
  %v1112 = vpop.permute.xlu0 %1111
  %v1115 = vunpack.c.l.s4 839922192
  %v1116 = vunpack.c.0.s8 %v1115
  %v1117 = vlaneseq
  %v1118 = vshrl.u32 %v1117, 7
  %v1119 = vsub.s32 %v1116, %v1118
  %v1120 = vrot.slane %v1112, %v1119
  %1121 = vset.pattern.permute.xlu0 2
  %1122 = vperm.xlu0 %1121, %v169
  %v1123 = vpop.permute.xlu0 %1122
  %v1126 = vunpack.c.l.s4 839922192
  %v1127 = vunpack.c.0.s8 %v1126
  %v1128 = vlaneseq
  %v1129 = vshrl.u32 %v1128, 7
  %v1130 = vsub.s32 %v1127, %v1129
  %v1131 = vrot.slane %v1123, %v1130
  %1132 = vset.pattern.permute.xlu0 2
  %1133 = vperm.xlu0 %1132, %v170
  %v1134 = vpop.permute.xlu0 %1133
  %v1137 = vunpack.c.l.s4 839922192
  %v1138 = vunpack.c.0.s8 %v1137
  %v1139 = vlaneseq
  %v1140 = vshrl.u32 %v1139, 7
  %v1141 = vsub.s32 %v1138, %v1140
  %v1142 = vrot.slane %v1134, %v1141
  %1143 = vset.pattern.permute.xlu0 2
  %1144 = vperm.xlu0 %1143, %v171
  %v1145 = vpop.permute.xlu0 %1144
  %v1148 = vunpack.c.l.s4 839922192
  %v1149 = vunpack.c.0.s8 %v1148
  %v1150 = vlaneseq
  %v1151 = vshrl.u32 %v1150, 7
  %v1152 = vsub.s32 %v1149, %v1151
  %v1153 = vrot.slane %v1145, %v1152
  %1154 = vset.pattern.permute.xlu0 2
  %1155 = vperm.xlu0 %1154, %v172
  %v1156 = vpop.permute.xlu0 %1155
  %v1159 = vunpack.c.l.s4 839922192
  %v1160 = vunpack.c.0.s8 %v1159
  %v1161 = vlaneseq
  %v1162 = vshrl.u32 %v1161, 7
  %v1163 = vsub.s32 %v1160, %v1162
  %v1164 = vrot.slane %v1156, %v1163
  %1165 = vset.pattern.permute.xlu0 2
  %1166 = vperm.xlu0 %1165, %v173
  %v1167 = vpop.permute.xlu0 %1166
  %v1170 = vunpack.c.l.s4 839922192
  %v1171 = vunpack.c.0.s8 %v1170
  %v1172 = vlaneseq
  %v1173 = vshrl.u32 %v1172, 7
  %v1174 = vsub.s32 %v1171, %v1173
  %v1175 = vrot.slane %v1167, %v1174
  %v1192 = vunpack.c.l.b16 %v1010
  %v1193 = vunpack.c.l.b16 %v1021
  %v1194 = vunpack.c.l.b16 %v1032
  %v1195 = vunpack.c.l.b16 %v1043
  %v1196 = vunpack.c.l.b16 %v1054
  %v1197 = vunpack.c.l.b16 %v1065
  %v1198 = vunpack.c.l.b16 %v1076
  %v1199 = vunpack.c.l.b16 %v1087
  %v1200 = vunpack.c.l.b16 %v1098
  %v1201 = vunpack.c.l.b16 %v1109
  %v1202 = vunpack.c.l.b16 %v1120
  %v1203 = vunpack.c.l.b16 %v1131
  %v1204 = vunpack.c.l.b16 %v1142
  %v1205 = vunpack.c.l.b16 %v1153
  %v1206 = vunpack.c.l.b16 %v1164
  %v1207 = vunpack.c.l.b16 %v1175
  %v1208 = vpack.c.b16 %v1193, %v1192
  %v1209 = vpack.c.b16 %v1195, %v1194
  %v1210 = vpack.c.b16 %v1197, %v1196
  %v1211 = vpack.c.b16 %v1199, %v1198
  %v1212 = vpack.c.b16 %v1201, %v1200
  %v1213 = vpack.c.b16 %v1203, %v1202
  %v1214 = vpack.c.b16 %v1205, %v1204
  %v1215 = vpack.c.b16 %v1207, %v1206
  %v1224 = vmul.bf16 %v999, %v1208
  %v1225 = vmul.bf16 %v959, %v1209
  %v1226 = vmul.bf16 %v963, %v1210
  %v1227 = vmul.bf16 %v967, %v1211
  %v1228 = vmul.bf16 %v971, %v1212
  %v1229 = vmul.bf16 %v975, %v1213
  %v1230 = vmul.bf16 %v979, %v1214
  %v1231 = vmul.bf16 %v988, %v1215
  %v1232 = vld [vmem:[%s2 + $0x20] sm:$0xf]
  %v1233 = vld [vmem:[%s2 + $0x24] sm:$0xf]
  %v1234 = vld [vmem:[%s2 + $0x28] sm:$0xf]
  %v1235 = vld [vmem:[%s2 + $0x2c] sm:$0xf]
  %v1240 = vunpack.c.l.b16 %v1232
  %v1241 = vunpack.c.l.b16 %v1233
  %v1242 = vunpack.c.l.b16 %v1234
  %v1243 = vunpack.c.l.b16 %v1235
  %v1244 = vpack.c.b16 %v1241, %v1240
  %v1245 = vpack.c.b16 %v1243, %v1242
  %v1249 = vsel %vm694, %v1224, 0
  %v1252 = vsel %vm694, %v1225, 0
  %v1255 = vsel %vm694, %v1226, 0
  %v1258 = vsel %vm694, %v1227, 0
  %v1261 = vsel %vm694, %v1228, 0
  %v1264 = vsel %vm694, %v1229, 0
  %v1267 = vsel %vm694, %v1230, 0
  %v1270 = vsel %vm694, %v1231, 0
  %1272 = vmatprep.subr.bf16.mxu0 0
  %1273 = vmatpush1.bf16.msra.mxu0 %v1244
  %1274 = vmatprep.subr.bf16.mxu0 0
  %1275 = vmatpush1.bf16.msra.mxu0 %v1245
  %1276 = vmatprep.subr.bf16.mxu0 0
  %1277 = vmatpush1.bf16.msra.mxu0 0
  %1278 = vmatprep.subr.bf16.mxu0 0
  %1279 = vmatpush1.bf16.msra.mxu0 0
  %1280 = vmatprep.subr.bf16.mxu0 0
  %1281 = vmatpush1.bf16.msra.mxu0 0
  %1282 = vmatprep.subr.bf16.mxu0 0
  %1283 = vmatpush1.bf16.msra.mxu0 0
  %1284 = vmatprep.subr.bf16.mxu0 0
  %1285 = vmatpush1.bf16.msra.mxu0 0
  %1286 = vmatprep.subr.bf16.mxu0 0
  %1287 = vmatpush1.bf16.msra.mxu0 0
  %1288 = vmatprep.subr.bf16.mxu0 0
  %1289 = vmatpush1.bf16.msra.mxu0 0
  %1290 = vmatprep.subr.bf16.mxu0 0
  %1291 = vmatpush1.bf16.msra.mxu0 0
  %1292 = vmatprep.subr.bf16.mxu0 0
  %1293 = vmatpush1.bf16.msra.mxu0 0
  %1294 = vmatprep.subr.bf16.mxu0 0
  %1295 = vmatpush1.bf16.msra.mxu0 0
  %1296 = vmatprep.subr.bf16.mxu0 0
  %1297 = vmatpush1.bf16.msra.mxu0 0
  %1298 = vmatprep.subr.bf16.mxu0 0
  %1299 = vmatpush1.bf16.msra.mxu0 0
  %1300 = vmatprep.subr.bf16.mxu0 0
  %1301 = vmatpush1.bf16.msra.mxu0 0
  %1302 = vmatprep.subr.bf16.mxu0 0
  %1303 = vmatpush1.bf16.msra.mxu0 0
  %1304 = vmatprep.mubr.bf16.mxu0 0
  %1305 = vmatmul.mubr.bf16.gmra.mrb[0].mxu0 %v1249
  %v1306 = vpop.f32.mrb[0].mxu0
  %v1307 = vadd.f32 0.0, %v1306
  %v1308 = vpop.f32.mrb[0].mxu0
  %v1309 = vpop.f32.mrb[0].mxu0
  %v1310 = vadd.f32 0.0, %v1309
  %v1311 = vpop.f32.mrb[0].mxu0
  %1312 = vmatprep.mubr.bf16.mxu0 0
  %1313 = vmatmul.mubr.bf16.gmra.mrb[0].mxu0 %v1252
  %v1314 = vpop.f32.mrb[0].mxu0
  %v1315 = vadd.f32 0.0, %v1314
  %v1316 = vpop.f32.mrb[0].mxu0
  %v1317 = vpop.f32.mrb[0].mxu0
  %v1318 = vadd.f32 0.0, %v1317
  %v1319 = vpop.f32.mrb[0].mxu0
  %1320 = vmatprep.mubr.bf16.mxu0 0
  %1321 = vmatmul.mubr.bf16.gmra.mrb[0].mxu0 %v1255
  %v1322 = vpop.f32.mrb[0].mxu0
  %v1323 = vadd.f32 0.0, %v1322
  %v1324 = vpop.f32.mrb[0].mxu0
  %v1325 = vpop.f32.mrb[0].mxu0
  %v1326 = vadd.f32 0.0, %v1325
  %v1327 = vpop.f32.mrb[0].mxu0
  %1328 = vmatprep.mubr.bf16.mxu0 0
  %1329 = vmatmul.mubr.bf16.gmra.mrb[0].mxu0 %v1258
  %v1330 = vpop.f32.mrb[0].mxu0
  %v1331 = vadd.f32 0.0, %v1330
  %v1332 = vpop.f32.mrb[0].mxu0
  %v1333 = vpop.f32.mrb[0].mxu0
  %v1334 = vadd.f32 0.0, %v1333
  %v1335 = vpop.f32.mrb[0].mxu0
  %1336 = vmatprep.mubr.bf16.mxu0 0
  %1337 = vmatmul.mubr.bf16.gmra.mrb[0].mxu0 %v1261
  %v1338 = vpop.f32.mrb[0].mxu0
  %v1339 = vadd.f32 0.0, %v1338
  %v1340 = vpop.f32.mrb[0].mxu0
  %v1341 = vpop.f32.mrb[0].mxu0
  %v1342 = vadd.f32 0.0, %v1341
  %v1343 = vpop.f32.mrb[0].mxu0
  %1344 = vmatprep.mubr.bf16.mxu0 0
  %1345 = vmatmul.mubr.bf16.gmra.mrb[0].mxu0 %v1264
  %v1346 = vpop.f32.mrb[0].mxu0
  %v1347 = vadd.f32 0.0, %v1346
  %v1348 = vpop.f32.mrb[0].mxu0
  %v1349 = vpop.f32.mrb[0].mxu0
  %v1350 = vadd.f32 0.0, %v1349
  %v1351 = vpop.f32.mrb[0].mxu0
  %1352 = vmatprep.mubr.bf16.mxu0 0
  %1353 = vmatmul.mubr.bf16.gmra.mrb[0].mxu0 %v1267
  %v1354 = vpop.f32.mrb[0].mxu0
  %v1355 = vadd.f32 0.0, %v1354
  %v1356 = vpop.f32.mrb[0].mxu0
  %v1357 = vpop.f32.mrb[0].mxu0
  %v1358 = vadd.f32 0.0, %v1357
  %v1359 = vpop.f32.mrb[0].mxu0
  %1360 = vmatprep.mubr.bf16.mxu0 0
  %1361 = vmatmul.mubr.bf16.gmra.mrb[0].mxu0 %v1270
  %v1362 = vpop.f32.mrb[0].mxu0
  %v1363 = vadd.f32 0.0, %v1362
  %v1364 = vpop.f32.mrb[0].mxu0
  %v1365 = vpop.f32.mrb[0].mxu0
  %v1366 = vadd.f32 0.0, %v1365
  %v1367 = vpop.f32.mrb[0].mxu0
  %1368 = vdwg.mxu0
  %v1369 = vadd.f32 %v887, %v1307
  %v1370 = vadd.f32 %v890, %v1310
  %v1371 = vadd.f32 %v895, %v1315
  %v1372 = vadd.f32 %v898, %v1318
  %v1373 = vadd.f32 %v903, %v1323
  %v1374 = vadd.f32 %v906, %v1326
  %v1375 = vadd.f32 %v911, %v1331
  %v1376 = vadd.f32 %v914, %v1334
  %v1377 = vadd.f32 %v919, %v1339
  %v1378 = vadd.f32 %v922, %v1342
  %v1379 = vadd.f32 %v927, %v1347
  %v1380 = vadd.f32 %v930, %v1350
  %v1381 = vadd.f32 %v935, %v1355
  %v1382 = vadd.f32 %v938, %v1358
  %v1383 = vadd.f32 %v943, %v1363
  %v1384 = vadd.f32 %v946, %v1366
  %vm1385 = vsmask.f32 256
  %v1386 = vrot.slane %v77, 7
  %v1387 = vor.u32 %v1386, %v80
  %v1388 = vrot.slane %v85, 7
  %v1389 = vor.u32 %v1388, %v88
  %v1390 = vsel %vm1385, %v1386, %v1389
  %v1391 = vrot.slane %v94, 7
  %v1392 = vor.u32 %v1391, %v97
  %v1393 = vsel %vm1385, %v1388, %v1392
  %v1394 = vrot.slane %v103, 7
  %v1395 = vor.u32 %v1394, %v106
  %v1396 = vsel %vm1385, %v1391, %v1395
  %v1397 = vrot.slane %v112, 7
  %v1398 = vor.u32 %v1397, %v115
  %v1399 = vsel %vm1385, %v1394, %v1398
  %v1400 = vrot.slane %v121, 7
  %v1401 = vor.u32 %v1400, %v124
  %v1402 = vsel %vm1385, %v1397, %v1401
  %v1403 = vrot.slane %v130, 7
  %v1404 = vor.u32 %v1403, %v133
  %v1405 = vsel %vm1385, %v1400, %v1404
  %v1406 = vrot.slane %v981, 7
  %v1407 = vor.u32 %v1406, %v984
  %v1408 = vsel %vm1385, %v1403, %v1407
  %vm1417 = vcmask 1040384
  %vm1418 = vmand %vm1417, %vm1385
  %v1419 = vsel %vm1418, 0, %v1387
  %1420 = vset.pattern.permute.xlu0 3
  %1421 = vperm.xlu0 %1420, %v158
  %v1422 = vpop.permute.xlu0 %1421
  %v1425 = vunpack.c.l.s4 839922192
  %v1426 = vunpack.c.0.s8 %v1425
  %v1427 = vlaneseq
  %v1428 = vshrl.u32 %v1427, 7
  %v1429 = vsub.s32 %v1426, %v1428
  %v1430 = vrot.slane %v1422, %v1429
  %1431 = vset.pattern.permute.xlu0 3
  %1432 = vperm.xlu0 %1431, %v159
  %v1433 = vpop.permute.xlu0 %1432
  %v1436 = vunpack.c.l.s4 839922192
  %v1437 = vunpack.c.0.s8 %v1436
  %v1438 = vlaneseq
  %v1439 = vshrl.u32 %v1438, 7
  %v1440 = vsub.s32 %v1437, %v1439
  %v1441 = vrot.slane %v1433, %v1440
  %1442 = vset.pattern.permute.xlu0 3
  %1443 = vperm.xlu0 %1442, %v160
  %v1444 = vpop.permute.xlu0 %1443
  %v1447 = vunpack.c.l.s4 839922192
  %v1448 = vunpack.c.0.s8 %v1447
  %v1449 = vlaneseq
  %v1450 = vshrl.u32 %v1449, 7
  %v1451 = vsub.s32 %v1448, %v1450
  %v1452 = vrot.slane %v1444, %v1451
  %1453 = vset.pattern.permute.xlu0 3
  %1454 = vperm.xlu0 %1453, %v161
  %v1455 = vpop.permute.xlu0 %1454
  %v1458 = vunpack.c.l.s4 839922192
  %v1459 = vunpack.c.0.s8 %v1458
  %v1460 = vlaneseq
  %v1461 = vshrl.u32 %v1460, 7
  %v1462 = vsub.s32 %v1459, %v1461
  %v1463 = vrot.slane %v1455, %v1462
  %1464 = vset.pattern.permute.xlu0 3
  %1465 = vperm.xlu0 %1464, %v162
  %v1466 = vpop.permute.xlu0 %1465
  %v1469 = vunpack.c.l.s4 839922192
  %v1470 = vunpack.c.0.s8 %v1469
  %v1471 = vlaneseq
  %v1472 = vshrl.u32 %v1471, 7
  %v1473 = vsub.s32 %v1470, %v1472
  %v1474 = vrot.slane %v1466, %v1473
  %1475 = vset.pattern.permute.xlu0 3
  %1476 = vperm.xlu0 %1475, %v163
  %v1477 = vpop.permute.xlu0 %1476
  %v1480 = vunpack.c.l.s4 839922192
  %v1481 = vunpack.c.0.s8 %v1480
  %v1482 = vlaneseq
  %v1483 = vshrl.u32 %v1482, 7
  %v1484 = vsub.s32 %v1481, %v1483
  %v1485 = vrot.slane %v1477, %v1484
  %1486 = vset.pattern.permute.xlu0 3
  %1487 = vperm.xlu0 %1486, %v164
  %v1488 = vpop.permute.xlu0 %1487
  %v1491 = vunpack.c.l.s4 839922192
  %v1492 = vunpack.c.0.s8 %v1491
  %v1493 = vlaneseq
  %v1494 = vshrl.u32 %v1493, 7
  %v1495 = vsub.s32 %v1492, %v1494
  %v1496 = vrot.slane %v1488, %v1495
  %1497 = vset.pattern.permute.xlu0 3
  %1498 = vperm.xlu0 %1497, %v165
  %v1499 = vpop.permute.xlu0 %1498
  %v1502 = vunpack.c.l.s4 839922192
  %v1503 = vunpack.c.0.s8 %v1502
  %v1504 = vlaneseq
  %v1505 = vshrl.u32 %v1504, 7
  %v1506 = vsub.s32 %v1503, %v1505
  %v1507 = vrot.slane %v1499, %v1506
  %1508 = vset.pattern.permute.xlu0 3
  %1509 = vperm.xlu0 %1508, %v166
  %v1510 = vpop.permute.xlu0 %1509
  %v1513 = vunpack.c.l.s4 839922192
  %v1514 = vunpack.c.0.s8 %v1513
  %v1515 = vlaneseq
  %v1516 = vshrl.u32 %v1515, 7
  %v1517 = vsub.s32 %v1514, %v1516
  %v1518 = vrot.slane %v1510, %v1517
  %1519 = vset.pattern.permute.xlu0 3
  %1520 = vperm.xlu0 %1519, %v167
  %v1521 = vpop.permute.xlu0 %1520
  %v1524 = vunpack.c.l.s4 839922192
  %v1525 = vunpack.c.0.s8 %v1524
  %v1526 = vlaneseq
  %v1527 = vshrl.u32 %v1526, 7
  %v1528 = vsub.s32 %v1525, %v1527
  %v1529 = vrot.slane %v1521, %v1528
  %1530 = vset.pattern.permute.xlu0 3
  %1531 = vperm.xlu0 %1530, %v168
  %v1532 = vpop.permute.xlu0 %1531
  %v1535 = vunpack.c.l.s4 839922192
  %v1536 = vunpack.c.0.s8 %v1535
  %v1537 = vlaneseq
  %v1538 = vshrl.u32 %v1537, 7
  %v1539 = vsub.s32 %v1536, %v1538
  %v1540 = vrot.slane %v1532, %v1539
  %1541 = vset.pattern.permute.xlu0 3
  %1542 = vperm.xlu0 %1541, %v169
  %v1543 = vpop.permute.xlu0 %1542
  %v1546 = vunpack.c.l.s4 839922192
  %v1547 = vunpack.c.0.s8 %v1546
  %v1548 = vlaneseq
  %v1549 = vshrl.u32 %v1548, 7
  %v1550 = vsub.s32 %v1547, %v1549
  %v1551 = vrot.slane %v1543, %v1550
  %1552 = vset.pattern.permute.xlu0 3
  %1553 = vperm.xlu0 %1552, %v170
  %v1554 = vpop.permute.xlu0 %1553
  %v1557 = vunpack.c.l.s4 839922192
  %v1558 = vunpack.c.0.s8 %v1557
  %v1559 = vlaneseq
  %v1560 = vshrl.u32 %v1559, 7
  %v1561 = vsub.s32 %v1558, %v1560
  %v1562 = vrot.slane %v1554, %v1561
  %1563 = vset.pattern.permute.xlu0 3
  %1564 = vperm.xlu0 %1563, %v171
  %v1565 = vpop.permute.xlu0 %1564
  %v1568 = vunpack.c.l.s4 839922192
  %v1569 = vunpack.c.0.s8 %v1568
  %v1570 = vlaneseq
  %v1571 = vshrl.u32 %v1570, 7
  %v1572 = vsub.s32 %v1569, %v1571
  %v1573 = vrot.slane %v1565, %v1572
  %1574 = vset.pattern.permute.xlu0 3
  %1575 = vperm.xlu0 %1574, %v172
  %v1576 = vpop.permute.xlu0 %1575
  %v1579 = vunpack.c.l.s4 839922192
  %v1580 = vunpack.c.0.s8 %v1579
  %v1581 = vlaneseq
  %v1582 = vshrl.u32 %v1581, 7
  %v1583 = vsub.s32 %v1580, %v1582
  %v1584 = vrot.slane %v1576, %v1583
  %1585 = vset.pattern.permute.xlu0 3
  %1586 = vperm.xlu0 %1585, %v173
  %v1587 = vpop.permute.xlu0 %1586
  %v1590 = vunpack.c.l.s4 839922192
  %v1591 = vunpack.c.0.s8 %v1590
  %v1592 = vlaneseq
  %v1593 = vshrl.u32 %v1592, 7
  %v1594 = vsub.s32 %v1591, %v1593
  %v1595 = vrot.slane %v1587, %v1594
  %v1612 = vunpack.c.l.b16 %v1430
  %v1613 = vunpack.c.l.b16 %v1441
  %v1614 = vunpack.c.l.b16 %v1452
  %v1615 = vunpack.c.l.b16 %v1463
  %v1616 = vunpack.c.l.b16 %v1474
  %v1617 = vunpack.c.l.b16 %v1485
  %v1618 = vunpack.c.l.b16 %v1496
  %v1619 = vunpack.c.l.b16 %v1507
  %v1620 = vunpack.c.l.b16 %v1518
  %v1621 = vunpack.c.l.b16 %v1529
  %v1622 = vunpack.c.l.b16 %v1540
  %v1623 = vunpack.c.l.b16 %v1551
  %v1624 = vunpack.c.l.b16 %v1562
  %v1625 = vunpack.c.l.b16 %v1573
  %v1626 = vunpack.c.l.b16 %v1584
  %v1627 = vunpack.c.l.b16 %v1595
  %v1628 = vpack.c.b16 %v1613, %v1612
  %v1629 = vpack.c.b16 %v1615, %v1614
  %v1630 = vpack.c.b16 %v1617, %v1616
  %v1631 = vpack.c.b16 %v1619, %v1618
  %v1632 = vpack.c.b16 %v1621, %v1620
  %v1633 = vpack.c.b16 %v1623, %v1622
  %v1634 = vpack.c.b16 %v1625, %v1624
  %v1635 = vpack.c.b16 %v1627, %v1626
  %v1644 = vmul.bf16 %v1419, %v1628
  %v1645 = vmul.bf16 %v1390, %v1629
  %v1646 = vmul.bf16 %v1393, %v1630
  %v1647 = vmul.bf16 %v1396, %v1631
  %v1648 = vmul.bf16 %v1399, %v1632
  %v1649 = vmul.bf16 %v1402, %v1633
  %v1650 = vmul.bf16 %v1405, %v1634
  %v1651 = vmul.bf16 %v1408, %v1635
  %v1652 = vld [vmem:[%s2 + $0x30] sm:$0xf]
  %v1653 = vld [vmem:[%s2 + $0x34] sm:$0xf]
  %v1654 = vld [vmem:[%s2 + $0x38] sm:$0xf]
  %v1655 = vld [vmem:[%s2 + $0x3c] sm:$0xf]
  %v1660 = vunpack.c.l.b16 %v1652
  %v1661 = vunpack.c.l.b16 %v1653
  %v1662 = vunpack.c.l.b16 %v1654
  %v1663 = vunpack.c.l.b16 %v1655
  %v1664 = vpack.c.b16 %v1661, %v1660
  %v1665 = vpack.c.b16 %v1663, %v1662
  %v1669 = vsel %vm694, %v1644, 0
  %v1672 = vsel %vm694, %v1645, 0
  %v1675 = vsel %vm694, %v1646, 0
  %v1678 = vsel %vm694, %v1647, 0
  %v1681 = vsel %vm694, %v1648, 0
  %v1684 = vsel %vm694, %v1649, 0
  %v1687 = vsel %vm694, %v1650, 0
  %v1690 = vsel %vm694, %v1651, 0
  %1692 = vmatprep.subr.bf16.mxu0 0
  %1693 = vmatpush1.bf16.msra.mxu0 %v1664
  %1694 = vmatprep.subr.bf16.mxu0 0
  %1695 = vmatpush1.bf16.msra.mxu0 %v1665
  %1696 = vmatprep.subr.bf16.mxu0 0
  %1697 = vmatpush1.bf16.msra.mxu0 0
  %1698 = vmatprep.subr.bf16.mxu0 0
  %1699 = vmatpush1.bf16.msra.mxu0 0
  %1700 = vmatprep.subr.bf16.mxu0 0
  %1701 = vmatpush1.bf16.msra.mxu0 0
  %1702 = vmatprep.subr.bf16.mxu0 0
  %1703 = vmatpush1.bf16.msra.mxu0 0
  %1704 = vmatprep.subr.bf16.mxu0 0
  %1705 = vmatpush1.bf16.msra.mxu0 0
  %1706 = vmatprep.subr.bf16.mxu0 0
  %1707 = vmatpush1.bf16.msra.mxu0 0
  %1708 = vmatprep.subr.bf16.mxu0 0
  %1709 = vmatpush1.bf16.msra.mxu0 0
  %1710 = vmatprep.subr.bf16.mxu0 0
  %1711 = vmatpush1.bf16.msra.mxu0 0
  %1712 = vmatprep.subr.bf16.mxu0 0
  %1713 = vmatpush1.bf16.msra.mxu0 0
  %1714 = vmatprep.subr.bf16.mxu0 0
  %1715 = vmatpush1.bf16.msra.mxu0 0
  %1716 = vmatprep.subr.bf16.mxu0 0
  %1717 = vmatpush1.bf16.msra.mxu0 0
  %1718 = vmatprep.subr.bf16.mxu0 0
  %1719 = vmatpush1.bf16.msra.mxu0 0
  %1720 = vmatprep.subr.bf16.mxu0 0
  %1721 = vmatpush1.bf16.msra.mxu0 0
  %1722 = vmatprep.subr.bf16.mxu0 0
  %1723 = vmatpush1.bf16.msra.mxu0 0
  %1724 = vmatprep.mubr.bf16.mxu0 0
  %1725 = vmatmul.mubr.bf16.gmra.mrb[0].mxu0 %v1669
  %v1726 = vpop.f32.mrb[0].mxu0
  %v1727 = vadd.f32 0.0, %v1726
  %v1728 = vpop.f32.mrb[0].mxu0
  %v1729 = vpop.f32.mrb[0].mxu0
  %v1730 = vadd.f32 0.0, %v1729
  %v1731 = vpop.f32.mrb[0].mxu0
  %1732 = vmatprep.mubr.bf16.mxu0 0
  %1733 = vmatmul.mubr.bf16.gmra.mrb[0].mxu0 %v1672
  %v1734 = vpop.f32.mrb[0].mxu0
  %v1735 = vadd.f32 0.0, %v1734
  %v1736 = vpop.f32.mrb[0].mxu0
  %v1737 = vpop.f32.mrb[0].mxu0
  %v1738 = vadd.f32 0.0, %v1737
  %v1739 = vpop.f32.mrb[0].mxu0
  %1740 = vmatprep.mubr.bf16.mxu0 0
  %1741 = vmatmul.mubr.bf16.gmra.mrb[0].mxu0 %v1675
  %v1742 = vpop.f32.mrb[0].mxu0
  %v1743 = vadd.f32 0.0, %v1742
  %v1744 = vpop.f32.mrb[0].mxu0
  %v1745 = vpop.f32.mrb[0].mxu0
  %v1746 = vadd.f32 0.0, %v1745
  %v1747 = vpop.f32.mrb[0].mxu0
  %1748 = vmatprep.mubr.bf16.mxu0 0
  %1749 = vmatmul.mubr.bf16.gmra.mrb[0].mxu0 %v1678
  %v1750 = vpop.f32.mrb[0].mxu0
  %v1751 = vadd.f32 0.0, %v1750
  %v1752 = vpop.f32.mrb[0].mxu0
  %v1753 = vpop.f32.mrb[0].mxu0
  %v1754 = vadd.f32 0.0, %v1753
  %v1755 = vpop.f32.mrb[0].mxu0
  %1756 = vmatprep.mubr.bf16.mxu0 0
  %1757 = vmatmul.mubr.bf16.gmra.mrb[0].mxu0 %v1681
  %v1758 = vpop.f32.mrb[0].mxu0
  %v1759 = vadd.f32 0.0, %v1758
  %v1760 = vpop.f32.mrb[0].mxu0
  %v1761 = vpop.f32.mrb[0].mxu0
  %v1762 = vadd.f32 0.0, %v1761
  %v1763 = vpop.f32.mrb[0].mxu0
  %1764 = vmatprep.mubr.bf16.mxu0 0
  %1765 = vmatmul.mubr.bf16.gmra.mrb[0].mxu0 %v1684
  %v1766 = vpop.f32.mrb[0].mxu0
  %v1767 = vadd.f32 0.0, %v1766
  %v1768 = vpop.f32.mrb[0].mxu0
  %v1769 = vpop.f32.mrb[0].mxu0
  %v1770 = vadd.f32 0.0, %v1769
  %v1771 = vpop.f32.mrb[0].mxu0
  %1772 = vmatprep.mubr.bf16.mxu0 0
  %1773 = vmatmul.mubr.bf16.gmra.mrb[0].mxu0 %v1687
  %v1774 = vpop.f32.mrb[0].mxu0
  %v1775 = vadd.f32 0.0, %v1774
  %v1776 = vpop.f32.mrb[0].mxu0
  %v1777 = vpop.f32.mrb[0].mxu0
  %v1778 = vadd.f32 0.0, %v1777
  %v1779 = vpop.f32.mrb[0].mxu0
  %1780 = vmatprep.mubr.bf16.mxu0 0
  %1781 = vmatmul.mubr.bf16.gmra.mrb[0].mxu0 %v1690
  %v1782 = vpop.f32.mrb[0].mxu0
  %v1783 = vadd.f32 0.0, %v1782
  %v1784 = vpop.f32.mrb[0].mxu0
  %v1785 = vpop.f32.mrb[0].mxu0
  %v1786 = vadd.f32 0.0, %v1785
  %v1787 = vpop.f32.mrb[0].mxu0
  %1788 = vdwg.mxu0
  %v1789 = vadd.f32 %v1369, %v1727
  %v1790 = vadd.f32 %v1370, %v1730
  %v1791 = vadd.f32 %v1371, %v1735
  %v1792 = vadd.f32 %v1372, %v1738
  %v1793 = vadd.f32 %v1373, %v1743
  %v1794 = vadd.f32 %v1374, %v1746
  %v1795 = vadd.f32 %v1375, %v1751
  %v1796 = vadd.f32 %v1376, %v1754
  %v1797 = vadd.f32 %v1377, %v1759
  %v1798 = vadd.f32 %v1378, %v1762
  %v1799 = vadd.f32 %v1379, %v1767
  %v1800 = vadd.f32 %v1380, %v1770
  %v1801 = vadd.f32 %v1381, %v1775
  %v1802 = vadd.f32 %v1382, %v1778
  %v1803 = vadd.f32 %v1383, %v1783
  %v1804 = vadd.f32 %v1384, %v1786
  %1805 = vset.pattern.permute.xlu0 4
  %1806 = vperm.xlu0 %1805, %v158
  %v1807 = vpop.permute.xlu0 %1806
  %v1810 = vunpack.c.l.s4 839922192
  %v1811 = vunpack.c.0.s8 %v1810
  %v1812 = vlaneseq
  %v1813 = vshrl.u32 %v1812, 7
  %v1814 = vsub.s32 %v1811, %v1813
  %v1815 = vrot.slane %v1807, %v1814
  %1816 = vset.pattern.permute.xlu0 4
  %1817 = vperm.xlu0 %1816, %v159
  %v1818 = vpop.permute.xlu0 %1817
  %v1821 = vunpack.c.l.s4 839922192
  %v1822 = vunpack.c.0.s8 %v1821
  %v1823 = vlaneseq
  %v1824 = vshrl.u32 %v1823, 7
  %v1825 = vsub.s32 %v1822, %v1824
  %v1826 = vrot.slane %v1818, %v1825
  %1827 = vset.pattern.permute.xlu0 4
  %1828 = vperm.xlu0 %1827, %v160
  %v1829 = vpop.permute.xlu0 %1828
  %v1832 = vunpack.c.l.s4 839922192
  %v1833 = vunpack.c.0.s8 %v1832
  %v1834 = vlaneseq
  %v1835 = vshrl.u32 %v1834, 7
  %v1836 = vsub.s32 %v1833, %v1835
  %v1837 = vrot.slane %v1829, %v1836
  %1838 = vset.pattern.permute.xlu0 4
  %1839 = vperm.xlu0 %1838, %v161
  %v1840 = vpop.permute.xlu0 %1839
  %v1843 = vunpack.c.l.s4 839922192
  %v1844 = vunpack.c.0.s8 %v1843
  %v1845 = vlaneseq
  %v1846 = vshrl.u32 %v1845, 7
  %v1847 = vsub.s32 %v1844, %v1846
  %v1848 = vrot.slane %v1840, %v1847
  %1849 = vset.pattern.permute.xlu0 4
  %1850 = vperm.xlu0 %1849, %v162
  %v1851 = vpop.permute.xlu0 %1850
  %v1854 = vunpack.c.l.s4 839922192
  %v1855 = vunpack.c.0.s8 %v1854
  %v1856 = vlaneseq
  %v1857 = vshrl.u32 %v1856, 7
  %v1858 = vsub.s32 %v1855, %v1857
  %v1859 = vrot.slane %v1851, %v1858
  %1860 = vset.pattern.permute.xlu0 4
  %1861 = vperm.xlu0 %1860, %v163
  %v1862 = vpop.permute.xlu0 %1861
  %v1865 = vunpack.c.l.s4 839922192
  %v1866 = vunpack.c.0.s8 %v1865
  %v1867 = vlaneseq
  %v1868 = vshrl.u32 %v1867, 7
  %v1869 = vsub.s32 %v1866, %v1868
  %v1870 = vrot.slane %v1862, %v1869
  %1871 = vset.pattern.permute.xlu0 4
  %1872 = vperm.xlu0 %1871, %v164
  %v1873 = vpop.permute.xlu0 %1872
  %v1876 = vunpack.c.l.s4 839922192
  %v1877 = vunpack.c.0.s8 %v1876
  %v1878 = vlaneseq
  %v1879 = vshrl.u32 %v1878, 7
  %v1880 = vsub.s32 %v1877, %v1879
  %v1881 = vrot.slane %v1873, %v1880
  %1882 = vset.pattern.permute.xlu0 4
  %1883 = vperm.xlu0 %1882, %v165
  %v1884 = vpop.permute.xlu0 %1883
  %v1887 = vunpack.c.l.s4 839922192
  %v1888 = vunpack.c.0.s8 %v1887
  %v1889 = vlaneseq
  %v1890 = vshrl.u32 %v1889, 7
  %v1891 = vsub.s32 %v1888, %v1890
  %v1892 = vrot.slane %v1884, %v1891
  %1893 = vset.pattern.permute.xlu0 4
  %1894 = vperm.xlu0 %1893, %v166
  %v1895 = vpop.permute.xlu0 %1894
  %v1898 = vunpack.c.l.s4 839922192
  %v1899 = vunpack.c.0.s8 %v1898
  %v1900 = vlaneseq
  %v1901 = vshrl.u32 %v1900, 7
  %v1902 = vsub.s32 %v1899, %v1901
  %v1903 = vrot.slane %v1895, %v1902
  %1904 = vset.pattern.permute.xlu0 4
  %1905 = vperm.xlu0 %1904, %v167
  %v1906 = vpop.permute.xlu0 %1905
  %v1909 = vunpack.c.l.s4 839922192
  %v1910 = vunpack.c.0.s8 %v1909
  %v1911 = vlaneseq
  %v1912 = vshrl.u32 %v1911, 7
  %v1913 = vsub.s32 %v1910, %v1912
  %v1914 = vrot.slane %v1906, %v1913
  %1915 = vset.pattern.permute.xlu0 4
  %1916 = vperm.xlu0 %1915, %v168
  %v1917 = vpop.permute.xlu0 %1916
  %v1920 = vunpack.c.l.s4 839922192
  %v1921 = vunpack.c.0.s8 %v1920
  %v1922 = vlaneseq
  %v1923 = vshrl.u32 %v1922, 7
  %v1924 = vsub.s32 %v1921, %v1923
  %v1925 = vrot.slane %v1917, %v1924
  %1926 = vset.pattern.permute.xlu0 4
  %1927 = vperm.xlu0 %1926, %v169
  %v1928 = vpop.permute.xlu0 %1927
  %v1931 = vunpack.c.l.s4 839922192
  %v1932 = vunpack.c.0.s8 %v1931
  %v1933 = vlaneseq
  %v1934 = vshrl.u32 %v1933, 7
  %v1935 = vsub.s32 %v1932, %v1934
  %v1936 = vrot.slane %v1928, %v1935
  %1937 = vset.pattern.permute.xlu0 4
  %1938 = vperm.xlu0 %1937, %v170
  %v1939 = vpop.permute.xlu0 %1938
  %v1942 = vunpack.c.l.s4 839922192
  %v1943 = vunpack.c.0.s8 %v1942
  %v1944 = vlaneseq
  %v1945 = vshrl.u32 %v1944, 7
  %v1946 = vsub.s32 %v1943, %v1945
  %v1947 = vrot.slane %v1939, %v1946
  %1948 = vset.pattern.permute.xlu0 4
  %1949 = vperm.xlu0 %1948, %v171
  %v1950 = vpop.permute.xlu0 %1949
  %v1953 = vunpack.c.l.s4 839922192
  %v1954 = vunpack.c.0.s8 %v1953
  %v1955 = vlaneseq
  %v1956 = vshrl.u32 %v1955, 7
  %v1957 = vsub.s32 %v1954, %v1956
  %v1958 = vrot.slane %v1950, %v1957
  %1959 = vset.pattern.permute.xlu0 4
  %1960 = vperm.xlu0 %1959, %v172
  %v1961 = vpop.permute.xlu0 %1960
  %v1964 = vunpack.c.l.s4 839922192
  %v1965 = vunpack.c.0.s8 %v1964
  %v1966 = vlaneseq
  %v1967 = vshrl.u32 %v1966, 7
  %v1968 = vsub.s32 %v1965, %v1967
  %v1969 = vrot.slane %v1961, %v1968
  %1970 = vset.pattern.permute.xlu0 4
  %1971 = vperm.xlu0 %1970, %v173
  %v1972 = vpop.permute.xlu0 %1971
  %v1975 = vunpack.c.l.s4 839922192
  %v1976 = vunpack.c.0.s8 %v1975
  %v1977 = vlaneseq
  %v1978 = vshrl.u32 %v1977, 7
  %v1979 = vsub.s32 %v1976, %v1978
  %v1980 = vrot.slane %v1972, %v1979
  %v1981 = vmul.bf16 %v21, %v1815
  %v1982 = vmul.bf16 %v22, %v1826
  %v1983 = vmul.bf16 %v23, %v1837
  %v1984 = vmul.bf16 %v24, %v1848
  %v1985 = vmul.bf16 %v25, %v1859
  %v1986 = vmul.bf16 %v26, %v1870
  %v1987 = vmul.bf16 %v27, %v1881
  %v1988 = vmul.bf16 %v28, %v1892
  %v1989 = vmul.bf16 %v29, %v1903
  %v1990 = vmul.bf16 %v30, %v1914
  %v1991 = vmul.bf16 %v31, %v1925
  %v1992 = vmul.bf16 %v32, %v1936
  %v1993 = vmul.bf16 %v33, %v1947
  %v1994 = vmul.bf16 %v34, %v1958
  %v1995 = vmul.bf16 %v35, %v1969
  %v1996 = vmul.bf16 %v36, %v1980
  %v1997 = vld [vmem:[%s2 + $0x40] sm:$0xf]
  %v1998 = vld [vmem:[%s2 + $0x44] sm:$0xf]
  %v1999 = vld [vmem:[%s2 + $0x48] sm:$0xf]
  %v2000 = vld [vmem:[%s2 + $0x4c] sm:$0xf]
  %v2017 = vunpack.c.l.b16 %v1981
  %v2018 = vunpack.c.l.b16 %v1982
  %v2019 = vunpack.c.l.b16 %v1983
  %v2020 = vunpack.c.l.b16 %v1984
  %v2021 = vunpack.c.l.b16 %v1985
  %v2022 = vunpack.c.l.b16 %v1986
  %v2023 = vunpack.c.l.b16 %v1987
  %v2024 = vunpack.c.l.b16 %v1988
  %v2025 = vunpack.c.l.b16 %v1989
  %v2026 = vunpack.c.l.b16 %v1990
  %v2027 = vunpack.c.l.b16 %v1991
  %v2028 = vunpack.c.l.b16 %v1992
  %v2029 = vunpack.c.l.b16 %v1993
  %v2030 = vunpack.c.l.b16 %v1994
  %v2031 = vunpack.c.l.b16 %v1995
  %v2032 = vunpack.c.l.b16 %v1996
  %v2033 = vpack.c.b16 %v2018, %v2017
  %v2034 = vpack.c.b16 %v2020, %v2019
  %v2035 = vpack.c.b16 %v2022, %v2021
  %v2036 = vpack.c.b16 %v2024, %v2023
  %v2037 = vpack.c.b16 %v2026, %v2025
  %v2038 = vpack.c.b16 %v2028, %v2027
  %v2039 = vpack.c.b16 %v2030, %v2029
  %v2040 = vpack.c.b16 %v2032, %v2031
  %v2045 = vunpack.c.l.b16 %v1997
  %v2046 = vunpack.c.l.b16 %v1998
  %v2047 = vunpack.c.l.b16 %v1999
  %v2048 = vunpack.c.l.b16 %v2000
  %v2049 = vpack.c.b16 %v2046, %v2045
  %v2050 = vpack.c.b16 %v2048, %v2047
  %v2054 = vsel %vm694, %v2033, 0
  %v2057 = vsel %vm694, %v2034, 0
  %v2060 = vsel %vm694, %v2035, 0
  %v2063 = vsel %vm694, %v2036, 0
  %v2066 = vsel %vm694, %v2037, 0
  %v2069 = vsel %vm694, %v2038, 0
  %v2072 = vsel %vm694, %v2039, 0
  %v2075 = vsel %vm694, %v2040, 0
  %2077 = vmatprep.subr.bf16.mxu0 0
  %2078 = vmatpush1.bf16.msra.mxu0 %v2049
  %2079 = vmatprep.subr.bf16.mxu0 0
  %2080 = vmatpush1.bf16.msra.mxu0 %v2050
  %2081 = vmatprep.subr.bf16.mxu0 0
  %2082 = vmatpush1.bf16.msra.mxu0 0
  %2083 = vmatprep.subr.bf16.mxu0 0
  %2084 = vmatpush1.bf16.msra.mxu0 0
  %2085 = vmatprep.subr.bf16.mxu0 0
  %2086 = vmatpush1.bf16.msra.mxu0 0
  %2087 = vmatprep.subr.bf16.mxu0 0
  %2088 = vmatpush1.bf16.msra.mxu0 0
  %2089 = vmatprep.subr.bf16.mxu0 0
  %2090 = vmatpush1.bf16.msra.mxu0 0
  %2091 = vmatprep.subr.bf16.mxu0 0
  %2092 = vmatpush1.bf16.msra.mxu0 0
  %2093 = vmatprep.subr.bf16.mxu0 0
  %2094 = vmatpush1.bf16.msra.mxu0 0
  %2095 = vmatprep.subr.bf16.mxu0 0
  %2096 = vmatpush1.bf16.msra.mxu0 0
  %2097 = vmatprep.subr.bf16.mxu0 0
  %2098 = vmatpush1.bf16.msra.mxu0 0
  %2099 = vmatprep.subr.bf16.mxu0 0
  %2100 = vmatpush1.bf16.msra.mxu0 0
  %2101 = vmatprep.subr.bf16.mxu0 0
  %2102 = vmatpush1.bf16.msra.mxu0 0
  %2103 = vmatprep.subr.bf16.mxu0 0
  %2104 = vmatpush1.bf16.msra.mxu0 0
  %2105 = vmatprep.subr.bf16.mxu0 0
  %2106 = vmatpush1.bf16.msra.mxu0 0
  %2107 = vmatprep.subr.bf16.mxu0 0
  %2108 = vmatpush1.bf16.msra.mxu0 0
  %2109 = vmatprep.mubr.bf16.mxu0 0
  %2110 = vmatmul.mubr.bf16.gmra.mrb[0].mxu0 %v2054
  %v2111 = vpop.f32.mrb[0].mxu0
  %v2112 = vadd.f32 0.0, %v2111
  %v2113 = vpop.f32.mrb[0].mxu0
  %v2114 = vpop.f32.mrb[0].mxu0
  %v2115 = vadd.f32 0.0, %v2114
  %v2116 = vpop.f32.mrb[0].mxu0
  %2117 = vmatprep.mubr.bf16.mxu0 0
  %2118 = vmatmul.mubr.bf16.gmra.mrb[0].mxu0 %v2057
  %v2119 = vpop.f32.mrb[0].mxu0
  %v2120 = vadd.f32 0.0, %v2119
  %v2121 = vpop.f32.mrb[0].mxu0
  %v2122 = vpop.f32.mrb[0].mxu0
  %v2123 = vadd.f32 0.0, %v2122
  %v2124 = vpop.f32.mrb[0].mxu0
  %2125 = vmatprep.mubr.bf16.mxu0 0
  %2126 = vmatmul.mubr.bf16.gmra.mrb[0].mxu0 %v2060
  %v2127 = vpop.f32.mrb[0].mxu0
  %v2128 = vadd.f32 0.0, %v2127
  %v2129 = vpop.f32.mrb[0].mxu0
  %v2130 = vpop.f32.mrb[0].mxu0
  %v2131 = vadd.f32 0.0, %v2130
  %v2132 = vpop.f32.mrb[0].mxu0
  %2133 = vmatprep.mubr.bf16.mxu0 0
  %2134 = vmatmul.mubr.bf16.gmra.mrb[0].mxu0 %v2063
  %v2135 = vpop.f32.mrb[0].mxu0
  %v2136 = vadd.f32 0.0, %v2135
  %v2137 = vpop.f32.mrb[0].mxu0
  %v2138 = vpop.f32.mrb[0].mxu0
  %v2139 = vadd.f32 0.0, %v2138
  %v2140 = vpop.f32.mrb[0].mxu0
  %2141 = vmatprep.mubr.bf16.mxu0 0
  %2142 = vmatmul.mubr.bf16.gmra.mrb[0].mxu0 %v2066
  %v2143 = vpop.f32.mrb[0].mxu0
  %v2144 = vadd.f32 0.0, %v2143
  %v2145 = vpop.f32.mrb[0].mxu0
  %v2146 = vpop.f32.mrb[0].mxu0
  %v2147 = vadd.f32 0.0, %v2146
  %v2148 = vpop.f32.mrb[0].mxu0
  %2149 = vmatprep.mubr.bf16.mxu0 0
  %2150 = vmatmul.mubr.bf16.gmra.mrb[0].mxu0 %v2069
  %v2151 = vpop.f32.mrb[0].mxu0
  %v2152 = vadd.f32 0.0, %v2151
  %v2153 = vpop.f32.mrb[0].mxu0
  %v2154 = vpop.f32.mrb[0].mxu0
  %v2155 = vadd.f32 0.0, %v2154
  %v2156 = vpop.f32.mrb[0].mxu0
  %2157 = vmatprep.mubr.bf16.mxu0 0
  %2158 = vmatmul.mubr.bf16.gmra.mrb[0].mxu0 %v2072
  %v2159 = vpop.f32.mrb[0].mxu0
  %v2160 = vadd.f32 0.0, %v2159
  %v2161 = vpop.f32.mrb[0].mxu0
  %v2162 = vpop.f32.mrb[0].mxu0
  %v2163 = vadd.f32 0.0, %v2162
  %v2164 = vpop.f32.mrb[0].mxu0
  %2165 = vmatprep.mubr.bf16.mxu0 0
  %2166 = vmatmul.mubr.bf16.gmra.mrb[0].mxu0 %v2075
  %v2167 = vpop.f32.mrb[0].mxu0
  %v2168 = vadd.f32 0.0, %v2167
  %v2169 = vpop.f32.mrb[0].mxu0
  %v2170 = vpop.f32.mrb[0].mxu0
  %v2171 = vadd.f32 0.0, %v2170
  %v2172 = vpop.f32.mrb[0].mxu0
  %2173 = vdwg.mxu0
  %v2174 = vadd.f32 %v1789, %v2112
  %v2175 = vadd.f32 %v1790, %v2115
  %v2176 = vadd.f32 %v1791, %v2120
  %v2177 = vadd.f32 %v1792, %v2123
  %v2178 = vadd.f32 %v1793, %v2128
  %v2179 = vadd.f32 %v1794, %v2131
  %v2180 = vadd.f32 %v1795, %v2136
  %v2181 = vadd.f32 %v1796, %v2139
  %v2182 = vadd.f32 %v1797, %v2144
  %v2183 = vadd.f32 %v1798, %v2147
  %v2184 = vadd.f32 %v1799, %v2152
  %v2185 = vadd.f32 %v1800, %v2155
  %v2186 = vadd.f32 %v1801, %v2160
  %v2187 = vadd.f32 %v1802, %v2163
  %v2188 = vadd.f32 %v1803, %v2168
  %v2189 = vadd.f32 %v1804, %v2171
  %vm2190 = vsmask.f32 7424
  %v2191 = vrot.slane %v80, 1
  %v2192 = vor.u32 %v77, %v2191
  %v2193 = vrot.slane %v88, 1
  %v2194 = vsel %vm2190, %v2192, %v2193
  %v2195 = vor.u32 %v85, %v2193
  %v2196 = vrot.slane %v97, 1
  %v2197 = vsel %vm2190, %v2195, %v2196
  %v2198 = vor.u32 %v94, %v2196
  %v2199 = vrot.slane %v106, 1
  %v2200 = vsel %vm2190, %v2198, %v2199
  %v2201 = vor.u32 %v103, %v2199
  %v2202 = vrot.slane %v115, 1
  %v2203 = vsel %vm2190, %v2201, %v2202
  %v2204 = vor.u32 %v112, %v2202
  %v2205 = vrot.slane %v124, 1
  %v2206 = vsel %vm2190, %v2204, %v2205
  %v2207 = vor.u32 %v121, %v2205
  %v2208 = vrot.slane %v133, 1
  %v2209 = vsel %vm2190, %v2207, %v2208
  %v2210 = vor.u32 %v130, %v2208
  %v2211 = vrot.slane %v984, 1
  %v2212 = vsel %vm2190, %v2210, %v2211
  %v2213 = vor.u32 %v981, %v2211
  %vm2222 = vcmask 1047552
  %vm2223 = vmand %vm2222, %vm2190
  %v2224 = vsel %vm2223, %v2213, 0
  %2225 = vset.pattern.permute.xlu0 5
  %2226 = vperm.xlu0 %2225, %v158
  %v2227 = vpop.permute.xlu0 %2226
  %v2230 = vunpack.c.l.s4 839922192
  %v2231 = vunpack.c.0.s8 %v2230
  %v2232 = vlaneseq
  %v2233 = vshrl.u32 %v2232, 7
  %v2234 = vsub.s32 %v2231, %v2233
  %v2235 = vrot.slane %v2227, %v2234
  %2236 = vset.pattern.permute.xlu0 5
  %2237 = vperm.xlu0 %2236, %v159
  %v2238 = vpop.permute.xlu0 %2237
  %v2241 = vunpack.c.l.s4 839922192
  %v2242 = vunpack.c.0.s8 %v2241
  %v2243 = vlaneseq
  %v2244 = vshrl.u32 %v2243, 7
  %v2245 = vsub.s32 %v2242, %v2244
  %v2246 = vrot.slane %v2238, %v2245
  %2247 = vset.pattern.permute.xlu0 5
  %2248 = vperm.xlu0 %2247, %v160
  %v2249 = vpop.permute.xlu0 %2248
  %v2252 = vunpack.c.l.s4 839922192
  %v2253 = vunpack.c.0.s8 %v2252
  %v2254 = vlaneseq
  %v2255 = vshrl.u32 %v2254, 7
  %v2256 = vsub.s32 %v2253, %v2255
  %v2257 = vrot.slane %v2249, %v2256
  %2258 = vset.pattern.permute.xlu0 5
  %2259 = vperm.xlu0 %2258, %v161
  %v2260 = vpop.permute.xlu0 %2259
  %v2263 = vunpack.c.l.s4 839922192
  %v2264 = vunpack.c.0.s8 %v2263
  %v2265 = vlaneseq
  %v2266 = vshrl.u32 %v2265, 7
  %v2267 = vsub.s32 %v2264, %v2266
  %v2268 = vrot.slane %v2260, %v2267
  %2269 = vset.pattern.permute.xlu0 5
  %2270 = vperm.xlu0 %2269, %v162
  %v2271 = vpop.permute.xlu0 %2270
  %v2274 = vunpack.c.l.s4 839922192
  %v2275 = vunpack.c.0.s8 %v2274
  %v2276 = vlaneseq
  %v2277 = vshrl.u32 %v2276, 7
  %v2278 = vsub.s32 %v2275, %v2277
  %v2279 = vrot.slane %v2271, %v2278
  %2280 = vset.pattern.permute.xlu0 5
  %2281 = vperm.xlu0 %2280, %v163
  %v2282 = vpop.permute.xlu0 %2281
  %v2285 = vunpack.c.l.s4 839922192
  %v2286 = vunpack.c.0.s8 %v2285
  %v2287 = vlaneseq
  %v2288 = vshrl.u32 %v2287, 7
  %v2289 = vsub.s32 %v2286, %v2288
  %v2290 = vrot.slane %v2282, %v2289
  %2291 = vset.pattern.permute.xlu0 5
  %2292 = vperm.xlu0 %2291, %v164
  %v2293 = vpop.permute.xlu0 %2292
  %v2296 = vunpack.c.l.s4 839922192
  %v2297 = vunpack.c.0.s8 %v2296
  %v2298 = vlaneseq
  %v2299 = vshrl.u32 %v2298, 7
  %v2300 = vsub.s32 %v2297, %v2299
  %v2301 = vrot.slane %v2293, %v2300
  %2302 = vset.pattern.permute.xlu0 5
  %2303 = vperm.xlu0 %2302, %v165
  %v2304 = vpop.permute.xlu0 %2303
  %v2307 = vunpack.c.l.s4 839922192
  %v2308 = vunpack.c.0.s8 %v2307
  %v2309 = vlaneseq
  %v2310 = vshrl.u32 %v2309, 7
  %v2311 = vsub.s32 %v2308, %v2310
  %v2312 = vrot.slane %v2304, %v2311
  %2313 = vset.pattern.permute.xlu0 5
  %2314 = vperm.xlu0 %2313, %v166
  %v2315 = vpop.permute.xlu0 %2314
  %v2318 = vunpack.c.l.s4 839922192
  %v2319 = vunpack.c.0.s8 %v2318
  %v2320 = vlaneseq
  %v2321 = vshrl.u32 %v2320, 7
  %v2322 = vsub.s32 %v2319, %v2321
  %v2323 = vrot.slane %v2315, %v2322
  %2324 = vset.pattern.permute.xlu0 5
  %2325 = vperm.xlu0 %2324, %v167
  %v2326 = vpop.permute.xlu0 %2325
  %v2329 = vunpack.c.l.s4 839922192
  %v2330 = vunpack.c.0.s8 %v2329
  %v2331 = vlaneseq
  %v2332 = vshrl.u32 %v2331, 7
  %v2333 = vsub.s32 %v2330, %v2332
  %v2334 = vrot.slane %v2326, %v2333
  %2335 = vset.pattern.permute.xlu0 5
  %2336 = vperm.xlu0 %2335, %v168
  %v2337 = vpop.permute.xlu0 %2336
  %v2340 = vunpack.c.l.s4 839922192
  %v2341 = vunpack.c.0.s8 %v2340
  %v2342 = vlaneseq
  %v2343 = vshrl.u32 %v2342, 7
  %v2344 = vsub.s32 %v2341, %v2343
  %v2345 = vrot.slane %v2337, %v2344
  %2346 = vset.pattern.permute.xlu0 5
  %2347 = vperm.xlu0 %2346, %v169
  %v2348 = vpop.permute.xlu0 %2347
  %v2351 = vunpack.c.l.s4 839922192
  %v2352 = vunpack.c.0.s8 %v2351
  %v2353 = vlaneseq
  %v2354 = vshrl.u32 %v2353, 7
  %v2355 = vsub.s32 %v2352, %v2354
  %v2356 = vrot.slane %v2348, %v2355
  %2357 = vset.pattern.permute.xlu0 5
  %2358 = vperm.xlu0 %2357, %v170
  %v2359 = vpop.permute.xlu0 %2358
  %v2362 = vunpack.c.l.s4 839922192
  %v2363 = vunpack.c.0.s8 %v2362
  %v2364 = vlaneseq
  %v2365 = vshrl.u32 %v2364, 7
  %v2366 = vsub.s32 %v2363, %v2365
  %v2367 = vrot.slane %v2359, %v2366
  %2368 = vset.pattern.permute.xlu0 5
  %2369 = vperm.xlu0 %2368, %v171
  %v2370 = vpop.permute.xlu0 %2369
  %v2373 = vunpack.c.l.s4 839922192
  %v2374 = vunpack.c.0.s8 %v2373
  %v2375 = vlaneseq
  %v2376 = vshrl.u32 %v2375, 7
  %v2377 = vsub.s32 %v2374, %v2376
  %v2378 = vrot.slane %v2370, %v2377
  %2379 = vset.pattern.permute.xlu0 5
  %2380 = vperm.xlu0 %2379, %v172
  %v2381 = vpop.permute.xlu0 %2380
  %v2384 = vunpack.c.l.s4 839922192
  %v2385 = vunpack.c.0.s8 %v2384
  %v2386 = vlaneseq
  %v2387 = vshrl.u32 %v2386, 7
  %v2388 = vsub.s32 %v2385, %v2387
  %v2389 = vrot.slane %v2381, %v2388
  %2390 = vset.pattern.permute.xlu0 5
  %2391 = vperm.xlu0 %2390, %v173
  %v2392 = vpop.permute.xlu0 %2391
  %v2395 = vunpack.c.l.s4 839922192
  %v2396 = vunpack.c.0.s8 %v2395
  %v2397 = vlaneseq
  %v2398 = vshrl.u32 %v2397, 7
  %v2399 = vsub.s32 %v2396, %v2398
  %v2400 = vrot.slane %v2392, %v2399
  %v2417 = vunpack.c.l.b16 %v2235
  %v2418 = vunpack.c.l.b16 %v2246
  %v2419 = vunpack.c.l.b16 %v2257
  %v2420 = vunpack.c.l.b16 %v2268
  %v2421 = vunpack.c.l.b16 %v2279
  %v2422 = vunpack.c.l.b16 %v2290
  %v2423 = vunpack.c.l.b16 %v2301
  %v2424 = vunpack.c.l.b16 %v2312
  %v2425 = vunpack.c.l.b16 %v2323
  %v2426 = vunpack.c.l.b16 %v2334
  %v2427 = vunpack.c.l.b16 %v2345
  %v2428 = vunpack.c.l.b16 %v2356
  %v2429 = vunpack.c.l.b16 %v2367
  %v2430 = vunpack.c.l.b16 %v2378
  %v2431 = vunpack.c.l.b16 %v2389
  %v2432 = vunpack.c.l.b16 %v2400
  %v2433 = vpack.c.b16 %v2418, %v2417
  %v2434 = vpack.c.b16 %v2420, %v2419
  %v2435 = vpack.c.b16 %v2422, %v2421
  %v2436 = vpack.c.b16 %v2424, %v2423
  %v2437 = vpack.c.b16 %v2426, %v2425
  %v2438 = vpack.c.b16 %v2428, %v2427
  %v2439 = vpack.c.b16 %v2430, %v2429
  %v2440 = vpack.c.b16 %v2432, %v2431
  %v2449 = vmul.bf16 %v2194, %v2433
  %v2450 = vmul.bf16 %v2197, %v2434
  %v2451 = vmul.bf16 %v2200, %v2435
  %v2452 = vmul.bf16 %v2203, %v2436
  %v2453 = vmul.bf16 %v2206, %v2437
  %v2454 = vmul.bf16 %v2209, %v2438
  %v2455 = vmul.bf16 %v2212, %v2439
  %v2456 = vmul.bf16 %v2224, %v2440
  %v2457 = vld [vmem:[%s2 + $0x50] sm:$0xf]
  %v2458 = vld [vmem:[%s2 + $0x54] sm:$0xf]
  %v2459 = vld [vmem:[%s2 + $0x58] sm:$0xf]
  %v2460 = vld [vmem:[%s2 + $0x5c] sm:$0xf]
  %v2465 = vunpack.c.l.b16 %v2457
  %v2466 = vunpack.c.l.b16 %v2458
  %v2467 = vunpack.c.l.b16 %v2459
  %v2468 = vunpack.c.l.b16 %v2460
  %v2469 = vpack.c.b16 %v2466, %v2465
  %v2470 = vpack.c.b16 %v2468, %v2467
  %v2474 = vsel %vm694, %v2449, 0
  %v2477 = vsel %vm694, %v2450, 0
  %v2480 = vsel %vm694, %v2451, 0
  %v2483 = vsel %vm694, %v2452, 0
  %v2486 = vsel %vm694, %v2453, 0
  %v2489 = vsel %vm694, %v2454, 0
  %v2492 = vsel %vm694, %v2455, 0
  %v2495 = vsel %vm694, %v2456, 0
  %2497 = vmatprep.subr.bf16.mxu0 0
  %2498 = vmatpush1.bf16.msra.mxu0 %v2469
  %2499 = vmatprep.subr.bf16.mxu0 0
  %2500 = vmatpush1.bf16.msra.mxu0 %v2470
  %2501 = vmatprep.subr.bf16.mxu0 0
  %2502 = vmatpush1.bf16.msra.mxu0 0
  %2503 = vmatprep.subr.bf16.mxu0 0
  %2504 = vmatpush1.bf16.msra.mxu0 0
  %2505 = vmatprep.subr.bf16.mxu0 0
  %2506 = vmatpush1.bf16.msra.mxu0 0
  %2507 = vmatprep.subr.bf16.mxu0 0
  %2508 = vmatpush1.bf16.msra.mxu0 0
  %2509 = vmatprep.subr.bf16.mxu0 0
  %2510 = vmatpush1.bf16.msra.mxu0 0
  %2511 = vmatprep.subr.bf16.mxu0 0
  %2512 = vmatpush1.bf16.msra.mxu0 0
  %2513 = vmatprep.subr.bf16.mxu0 0
  %2514 = vmatpush1.bf16.msra.mxu0 0
  %2515 = vmatprep.subr.bf16.mxu0 0
  %2516 = vmatpush1.bf16.msra.mxu0 0
  %2517 = vmatprep.subr.bf16.mxu0 0
  %2518 = vmatpush1.bf16.msra.mxu0 0
  %2519 = vmatprep.subr.bf16.mxu0 0
  %2520 = vmatpush1.bf16.msra.mxu0 0
  %2521 = vmatprep.subr.bf16.mxu0 0
  %2522 = vmatpush1.bf16.msra.mxu0 0
  %2523 = vmatprep.subr.bf16.mxu0 0
  %2524 = vmatpush1.bf16.msra.mxu0 0
  %2525 = vmatprep.subr.bf16.mxu0 0
  %2526 = vmatpush1.bf16.msra.mxu0 0
  %2527 = vmatprep.subr.bf16.mxu0 0
  %2528 = vmatpush1.bf16.msra.mxu0 0
  %2529 = vmatprep.mubr.bf16.mxu0 0
  %2530 = vmatmul.mubr.bf16.gmra.mrb[0].mxu0 %v2474
  %v2531 = vpop.f32.mrb[0].mxu0
  %v2532 = vadd.f32 0.0, %v2531
  %v2533 = vpop.f32.mrb[0].mxu0
  %v2534 = vpop.f32.mrb[0].mxu0
  %v2535 = vadd.f32 0.0, %v2534
  %v2536 = vpop.f32.mrb[0].mxu0
  %2537 = vmatprep.mubr.bf16.mxu0 0
  %2538 = vmatmul.mubr.bf16.gmra.mrb[0].mxu0 %v2477
  %v2539 = vpop.f32.mrb[0].mxu0
  %v2540 = vadd.f32 0.0, %v2539
  %v2541 = vpop.f32.mrb[0].mxu0
  %v2542 = vpop.f32.mrb[0].mxu0
  %v2543 = vadd.f32 0.0, %v2542
  %v2544 = vpop.f32.mrb[0].mxu0
  %2545 = vmatprep.mubr.bf16.mxu0 0
  %2546 = vmatmul.mubr.bf16.gmra.mrb[0].mxu0 %v2480
  %v2547 = vpop.f32.mrb[0].mxu0
  %v2548 = vadd.f32 0.0, %v2547
  %v2549 = vpop.f32.mrb[0].mxu0
  %v2550 = vpop.f32.mrb[0].mxu0
  %v2551 = vadd.f32 0.0, %v2550
  %v2552 = vpop.f32.mrb[0].mxu0
  %2553 = vmatprep.mubr.bf16.mxu0 0
  %2554 = vmatmul.mubr.bf16.gmra.mrb[0].mxu0 %v2483
  %v2555 = vpop.f32.mrb[0].mxu0
  %v2556 = vadd.f32 0.0, %v2555
  %v2557 = vpop.f32.mrb[0].mxu0
  %v2558 = vpop.f32.mrb[0].mxu0
  %v2559 = vadd.f32 0.0, %v2558
  %v2560 = vpop.f32.mrb[0].mxu0
  %2561 = vmatprep.mubr.bf16.mxu0 0
  %2562 = vmatmul.mubr.bf16.gmra.mrb[0].mxu0 %v2486
  %v2563 = vpop.f32.mrb[0].mxu0
  %v2564 = vadd.f32 0.0, %v2563
  %v2565 = vpop.f32.mrb[0].mxu0
  %v2566 = vpop.f32.mrb[0].mxu0
  %v2567 = vadd.f32 0.0, %v2566
  %v2568 = vpop.f32.mrb[0].mxu0
  %2569 = vmatprep.mubr.bf16.mxu0 0
  %2570 = vmatmul.mubr.bf16.gmra.mrb[0].mxu0 %v2489
  %v2571 = vpop.f32.mrb[0].mxu0
  %v2572 = vadd.f32 0.0, %v2571
  %v2573 = vpop.f32.mrb[0].mxu0
  %v2574 = vpop.f32.mrb[0].mxu0
  %v2575 = vadd.f32 0.0, %v2574
  %v2576 = vpop.f32.mrb[0].mxu0
  %2577 = vmatprep.mubr.bf16.mxu0 0
  %2578 = vmatmul.mubr.bf16.gmra.mrb[0].mxu0 %v2492
  %v2579 = vpop.f32.mrb[0].mxu0
  %v2580 = vadd.f32 0.0, %v2579
  %v2581 = vpop.f32.mrb[0].mxu0
  %v2582 = vpop.f32.mrb[0].mxu0
  %v2583 = vadd.f32 0.0, %v2582
  %v2584 = vpop.f32.mrb[0].mxu0
  %2585 = vmatprep.mubr.bf16.mxu0 0
  %2586 = vmatmul.mubr.bf16.gmra.mrb[0].mxu0 %v2495
  %v2587 = vpop.f32.mrb[0].mxu0
  %v2588 = vadd.f32 0.0, %v2587
  %v2589 = vpop.f32.mrb[0].mxu0
  %v2590 = vpop.f32.mrb[0].mxu0
  %v2591 = vadd.f32 0.0, %v2590
  %v2592 = vpop.f32.mrb[0].mxu0
  %2593 = vdwg.mxu0
  %v2594 = vadd.f32 %v2174, %v2532
  %v2595 = vadd.f32 %v2175, %v2535
  %v2596 = vadd.f32 %v2176, %v2540
  %v2597 = vadd.f32 %v2177, %v2543
  %v2598 = vadd.f32 %v2178, %v2548
  %v2599 = vadd.f32 %v2179, %v2551
  %v2600 = vadd.f32 %v2180, %v2556
  %v2601 = vadd.f32 %v2181, %v2559
  %v2602 = vadd.f32 %v2182, %v2564
  %v2603 = vadd.f32 %v2183, %v2567
  %v2604 = vadd.f32 %v2184, %v2572
  %v2605 = vadd.f32 %v2185, %v2575
  %v2606 = vadd.f32 %v2186, %v2580
  %v2607 = vadd.f32 %v2187, %v2583
  %v2608 = vadd.f32 %v2188, %v2588
  %v2609 = vadd.f32 %v2189, %v2591
  %v2610 = vrot.slane %v981, 3
  %v2611 = vrot.slane %v984, 4
  %v2612 = vor.u32 %v2610, %v2611
  %v2613 = vsel %vm75, %v136, %v2612
  %v2616 = vsel %vm156, %v2612, 0
  %2617 = vset.pattern.permute.xlu0 6
  %2618 = vperm.xlu0 %2617, %v158
  %v2619 = vpop.permute.xlu0 %2618
  %v2622 = vunpack.c.l.s4 839922192
  %v2623 = vunpack.c.0.s8 %v2622
  %v2624 = vlaneseq
  %v2625 = vshrl.u32 %v2624, 7
  %v2626 = vsub.s32 %v2623, %v2625
  %v2627 = vrot.slane %v2619, %v2626
  %2628 = vset.pattern.permute.xlu0 6
  %2629 = vperm.xlu0 %2628, %v159
  %v2630 = vpop.permute.xlu0 %2629
  %v2633 = vunpack.c.l.s4 839922192
  %v2634 = vunpack.c.0.s8 %v2633
  %v2635 = vlaneseq
  %v2636 = vshrl.u32 %v2635, 7
  %v2637 = vsub.s32 %v2634, %v2636
  %v2638 = vrot.slane %v2630, %v2637
  %2639 = vset.pattern.permute.xlu0 6
  %2640 = vperm.xlu0 %2639, %v160
  %v2641 = vpop.permute.xlu0 %2640
  %v2644 = vunpack.c.l.s4 839922192
  %v2645 = vunpack.c.0.s8 %v2644
  %v2646 = vlaneseq
  %v2647 = vshrl.u32 %v2646, 7
  %v2648 = vsub.s32 %v2645, %v2647
  %v2649 = vrot.slane %v2641, %v2648
  %2650 = vset.pattern.permute.xlu0 6
  %2651 = vperm.xlu0 %2650, %v161
  %v2652 = vpop.permute.xlu0 %2651
  %v2655 = vunpack.c.l.s4 839922192
  %v2656 = vunpack.c.0.s8 %v2655
  %v2657 = vlaneseq
  %v2658 = vshrl.u32 %v2657, 7
  %v2659 = vsub.s32 %v2656, %v2658
  %v2660 = vrot.slane %v2652, %v2659
  %2661 = vset.pattern.permute.xlu0 6
  %2662 = vperm.xlu0 %2661, %v162
  %v2663 = vpop.permute.xlu0 %2662
  %v2666 = vunpack.c.l.s4 839922192
  %v2667 = vunpack.c.0.s8 %v2666
  %v2668 = vlaneseq
  %v2669 = vshrl.u32 %v2668, 7
  %v2670 = vsub.s32 %v2667, %v2669
  %v2671 = vrot.slane %v2663, %v2670
  %2672 = vset.pattern.permute.xlu0 6
  %2673 = vperm.xlu0 %2672, %v163
  %v2674 = vpop.permute.xlu0 %2673
  %v2677 = vunpack.c.l.s4 839922192
  %v2678 = vunpack.c.0.s8 %v2677
  %v2679 = vlaneseq
  %v2680 = vshrl.u32 %v2679, 7
  %v2681 = vsub.s32 %v2678, %v2680
  %v2682 = vrot.slane %v2674, %v2681
  %2683 = vset.pattern.permute.xlu0 6
  %2684 = vperm.xlu0 %2683, %v164
  %v2685 = vpop.permute.xlu0 %2684
  %v2688 = vunpack.c.l.s4 839922192
  %v2689 = vunpack.c.0.s8 %v2688
  %v2690 = vlaneseq
  %v2691 = vshrl.u32 %v2690, 7
  %v2692 = vsub.s32 %v2689, %v2691
  %v2693 = vrot.slane %v2685, %v2692
  %2694 = vset.pattern.permute.xlu0 6
  %2695 = vperm.xlu0 %2694, %v165
  %v2696 = vpop.permute.xlu0 %2695
  %v2699 = vunpack.c.l.s4 839922192
  %v2700 = vunpack.c.0.s8 %v2699
  %v2701 = vlaneseq
  %v2702 = vshrl.u32 %v2701, 7
  %v2703 = vsub.s32 %v2700, %v2702
  %v2704 = vrot.slane %v2696, %v2703
  %2705 = vset.pattern.permute.xlu0 6
  %2706 = vperm.xlu0 %2705, %v166
  %v2707 = vpop.permute.xlu0 %2706
  %v2710 = vunpack.c.l.s4 839922192
  %v2711 = vunpack.c.0.s8 %v2710
  %v2712 = vlaneseq
  %v2713 = vshrl.u32 %v2712, 7
  %v2714 = vsub.s32 %v2711, %v2713
  %v2715 = vrot.slane %v2707, %v2714
  %2716 = vset.pattern.permute.xlu0 6
  %2717 = vperm.xlu0 %2716, %v167
  %v2718 = vpop.permute.xlu0 %2717
  %v2721 = vunpack.c.l.s4 839922192
  %v2722 = vunpack.c.0.s8 %v2721
  %v2723 = vlaneseq
  %v2724 = vshrl.u32 %v2723, 7
  %v2725 = vsub.s32 %v2722, %v2724
  %v2726 = vrot.slane %v2718, %v2725
  %2727 = vset.pattern.permute.xlu0 6
  %2728 = vperm.xlu0 %2727, %v168
  %v2729 = vpop.permute.xlu0 %2728
  %v2732 = vunpack.c.l.s4 839922192
  %v2733 = vunpack.c.0.s8 %v2732
  %v2734 = vlaneseq
  %v2735 = vshrl.u32 %v2734, 7
  %v2736 = vsub.s32 %v2733, %v2735
  %v2737 = vrot.slane %v2729, %v2736
  %2738 = vset.pattern.permute.xlu0 6
  %2739 = vperm.xlu0 %2738, %v169
  %v2740 = vpop.permute.xlu0 %2739
  %v2743 = vunpack.c.l.s4 839922192
  %v2744 = vunpack.c.0.s8 %v2743
  %v2745 = vlaneseq
  %v2746 = vshrl.u32 %v2745, 7
  %v2747 = vsub.s32 %v2744, %v2746
  %v2748 = vrot.slane %v2740, %v2747
  %2749 = vset.pattern.permute.xlu0 6
  %2750 = vperm.xlu0 %2749, %v170
  %v2751 = vpop.permute.xlu0 %2750
  %v2754 = vunpack.c.l.s4 839922192
  %v2755 = vunpack.c.0.s8 %v2754
  %v2756 = vlaneseq
  %v2757 = vshrl.u32 %v2756, 7
  %v2758 = vsub.s32 %v2755, %v2757
  %v2759 = vrot.slane %v2751, %v2758
  %2760 = vset.pattern.permute.xlu0 6
  %2761 = vperm.xlu0 %2760, %v171
  %v2762 = vpop.permute.xlu0 %2761
  %v2765 = vunpack.c.l.s4 839922192
  %v2766 = vunpack.c.0.s8 %v2765
  %v2767 = vlaneseq
  %v2768 = vshrl.u32 %v2767, 7
  %v2769 = vsub.s32 %v2766, %v2768
  %v2770 = vrot.slane %v2762, %v2769
  %2771 = vset.pattern.permute.xlu0 6
  %2772 = vperm.xlu0 %2771, %v172
  %v2773 = vpop.permute.xlu0 %2772
  %v2776 = vunpack.c.l.s4 839922192
  %v2777 = vunpack.c.0.s8 %v2776
  %v2778 = vlaneseq
  %v2779 = vshrl.u32 %v2778, 7
  %v2780 = vsub.s32 %v2777, %v2779
  %v2781 = vrot.slane %v2773, %v2780
  %2782 = vset.pattern.permute.xlu0 6
  %2783 = vperm.xlu0 %2782, %v173
  %v2784 = vpop.permute.xlu0 %2783
  %v2787 = vunpack.c.l.s4 839922192
  %v2788 = vunpack.c.0.s8 %v2787
  %v2789 = vlaneseq
  %v2790 = vshrl.u32 %v2789, 7
  %v2791 = vsub.s32 %v2788, %v2790
  %v2792 = vrot.slane %v2784, %v2791
  %v2809 = vunpack.c.l.b16 %v2627
  %v2810 = vunpack.c.l.b16 %v2638
  %v2811 = vunpack.c.l.b16 %v2649
  %v2812 = vunpack.c.l.b16 %v2660
  %v2813 = vunpack.c.l.b16 %v2671
  %v2814 = vunpack.c.l.b16 %v2682
  %v2815 = vunpack.c.l.b16 %v2693
  %v2816 = vunpack.c.l.b16 %v2704
  %v2817 = vunpack.c.l.b16 %v2715
  %v2818 = vunpack.c.l.b16 %v2726
  %v2819 = vunpack.c.l.b16 %v2737
  %v2820 = vunpack.c.l.b16 %v2748
  %v2821 = vunpack.c.l.b16 %v2759
  %v2822 = vunpack.c.l.b16 %v2770
  %v2823 = vunpack.c.l.b16 %v2781
  %v2824 = vunpack.c.l.b16 %v2792
  %v2825 = vpack.c.b16 %v2810, %v2809
  %v2826 = vpack.c.b16 %v2812, %v2811
  %v2827 = vpack.c.b16 %v2814, %v2813
  %v2828 = vpack.c.b16 %v2816, %v2815
  %v2829 = vpack.c.b16 %v2818, %v2817
  %v2830 = vpack.c.b16 %v2820, %v2819
  %v2831 = vpack.c.b16 %v2822, %v2821
  %v2832 = vpack.c.b16 %v2824, %v2823
  %v2841 = vmul.bf16 %v92, %v2825
  %v2842 = vmul.bf16 %v101, %v2826
  %v2843 = vmul.bf16 %v110, %v2827
  %v2844 = vmul.bf16 %v119, %v2828
  %v2845 = vmul.bf16 %v128, %v2829
  %v2846 = vmul.bf16 %v137, %v2830
  %v2847 = vmul.bf16 %v2613, %v2831
  %v2848 = vmul.bf16 %v2616, %v2832
  %v2849 = vld [vmem:[%s2 + $0x60] sm:$0xf]
  %v2850 = vld [vmem:[%s2 + $0x64] sm:$0xf]
  %v2851 = vld [vmem:[%s2 + $0x68] sm:$0xf]
  %v2852 = vld [vmem:[%s2 + $0x6c] sm:$0xf]
  %v2857 = vunpack.c.l.b16 %v2849
  %v2858 = vunpack.c.l.b16 %v2850
  %v2859 = vunpack.c.l.b16 %v2851
  %v2860 = vunpack.c.l.b16 %v2852
  %v2861 = vpack.c.b16 %v2858, %v2857
  %v2862 = vpack.c.b16 %v2860, %v2859
  %v2866 = vsel %vm694, %v2841, 0
  %v2869 = vsel %vm694, %v2842, 0
  %v2872 = vsel %vm694, %v2843, 0
  %v2875 = vsel %vm694, %v2844, 0
  %v2878 = vsel %vm694, %v2845, 0
  %v2881 = vsel %vm694, %v2846, 0
  %v2884 = vsel %vm694, %v2847, 0
  %v2887 = vsel %vm694, %v2848, 0
  %2889 = vmatprep.subr.bf16.mxu0 0
  %2890 = vmatpush1.bf16.msra.mxu0 %v2861
  %2891 = vmatprep.subr.bf16.mxu0 0
  %2892 = vmatpush1.bf16.msra.mxu0 %v2862
  %2893 = vmatprep.subr.bf16.mxu0 0
  %2894 = vmatpush1.bf16.msra.mxu0 0
  %2895 = vmatprep.subr.bf16.mxu0 0
  %2896 = vmatpush1.bf16.msra.mxu0 0
  %2897 = vmatprep.subr.bf16.mxu0 0
  %2898 = vmatpush1.bf16.msra.mxu0 0
  %2899 = vmatprep.subr.bf16.mxu0 0
  %2900 = vmatpush1.bf16.msra.mxu0 0
  %2901 = vmatprep.subr.bf16.mxu0 0
  %2902 = vmatpush1.bf16.msra.mxu0 0
  %2903 = vmatprep.subr.bf16.mxu0 0
  %2904 = vmatpush1.bf16.msra.mxu0 0
  %2905 = vmatprep.subr.bf16.mxu0 0
  %2906 = vmatpush1.bf16.msra.mxu0 0
  %2907 = vmatprep.subr.bf16.mxu0 0
  %2908 = vmatpush1.bf16.msra.mxu0 0
  %2909 = vmatprep.subr.bf16.mxu0 0
  %2910 = vmatpush1.bf16.msra.mxu0 0
  %2911 = vmatprep.subr.bf16.mxu0 0
  %2912 = vmatpush1.bf16.msra.mxu0 0
  %2913 = vmatprep.subr.bf16.mxu0 0
  %2914 = vmatpush1.bf16.msra.mxu0 0
  %2915 = vmatprep.subr.bf16.mxu0 0
  %2916 = vmatpush1.bf16.msra.mxu0 0
  %2917 = vmatprep.subr.bf16.mxu0 0
  %2918 = vmatpush1.bf16.msra.mxu0 0
  %2919 = vmatprep.subr.bf16.mxu0 0
  %2920 = vmatpush1.bf16.msra.mxu0 0
  %2921 = vmatprep.mubr.bf16.mxu0 0
  %2922 = vmatmul.mubr.bf16.gmra.mrb[0].mxu0 %v2866
  %v2923 = vpop.f32.mrb[0].mxu0
  %v2924 = vadd.f32 0.0, %v2923
  %v2925 = vpop.f32.mrb[0].mxu0
  %v2926 = vpop.f32.mrb[0].mxu0
  %v2927 = vadd.f32 0.0, %v2926
  %v2928 = vpop.f32.mrb[0].mxu0
  %2929 = vmatprep.mubr.bf16.mxu0 0
  %2930 = vmatmul.mubr.bf16.gmra.mrb[0].mxu0 %v2869
  %v2931 = vpop.f32.mrb[0].mxu0
  %v2932 = vadd.f32 0.0, %v2931
  %v2933 = vpop.f32.mrb[0].mxu0
  %v2934 = vpop.f32.mrb[0].mxu0
  %v2935 = vadd.f32 0.0, %v2934
  %v2936 = vpop.f32.mrb[0].mxu0
  %2937 = vmatprep.mubr.bf16.mxu0 0
  %2938 = vmatmul.mubr.bf16.gmra.mrb[0].mxu0 %v2872
  %v2939 = vpop.f32.mrb[0].mxu0
  %v2940 = vadd.f32 0.0, %v2939
  %v2941 = vpop.f32.mrb[0].mxu0
  %v2942 = vpop.f32.mrb[0].mxu0
  %v2943 = vadd.f32 0.0, %v2942
  %v2944 = vpop.f32.mrb[0].mxu0
  %2945 = vmatprep.mubr.bf16.mxu0 0
  %2946 = vmatmul.mubr.bf16.gmra.mrb[0].mxu0 %v2875
  %v2947 = vpop.f32.mrb[0].mxu0
  %v2948 = vadd.f32 0.0, %v2947
  %v2949 = vpop.f32.mrb[0].mxu0
  %v2950 = vpop.f32.mrb[0].mxu0
  %v2951 = vadd.f32 0.0, %v2950
  %v2952 = vpop.f32.mrb[0].mxu0
  %2953 = vmatprep.mubr.bf16.mxu0 0
  %2954 = vmatmul.mubr.bf16.gmra.mrb[0].mxu0 %v2878
  %v2955 = vpop.f32.mrb[0].mxu0
  %v2956 = vadd.f32 0.0, %v2955
  %v2957 = vpop.f32.mrb[0].mxu0
  %v2958 = vpop.f32.mrb[0].mxu0
  %v2959 = vadd.f32 0.0, %v2958
  %v2960 = vpop.f32.mrb[0].mxu0
  %2961 = vmatprep.mubr.bf16.mxu0 0
  %2962 = vmatmul.mubr.bf16.gmra.mrb[0].mxu0 %v2881
  %v2963 = vpop.f32.mrb[0].mxu0
  %v2964 = vadd.f32 0.0, %v2963
  %v2965 = vpop.f32.mrb[0].mxu0
  %v2966 = vpop.f32.mrb[0].mxu0
  %v2967 = vadd.f32 0.0, %v2966
  %v2968 = vpop.f32.mrb[0].mxu0
  %2969 = vmatprep.mubr.bf16.mxu0 0
  %2970 = vmatmul.mubr.bf16.gmra.mrb[0].mxu0 %v2884
  %v2971 = vpop.f32.mrb[0].mxu0
  %v2972 = vadd.f32 0.0, %v2971
  %v2973 = vpop.f32.mrb[0].mxu0
  %v2974 = vpop.f32.mrb[0].mxu0
  %v2975 = vadd.f32 0.0, %v2974
  %v2976 = vpop.f32.mrb[0].mxu0
  %2977 = vmatprep.mubr.bf16.mxu0 0
  %2978 = vmatmul.mubr.bf16.gmra.mrb[0].mxu0 %v2887
  %v2979 = vpop.f32.mrb[0].mxu0
  %v2980 = vadd.f32 0.0, %v2979
  %v2981 = vpop.f32.mrb[0].mxu0
  %v2982 = vpop.f32.mrb[0].mxu0
  %v2983 = vadd.f32 0.0, %v2982
  %v2984 = vpop.f32.mrb[0].mxu0
  %2985 = vdwg.mxu0
  %v2986 = vadd.f32 %v2594, %v2924
  %v2987 = vadd.f32 %v2595, %v2927
  %v2988 = vadd.f32 %v2596, %v2932
  %v2989 = vadd.f32 %v2597, %v2935
  %v2990 = vadd.f32 %v2598, %v2940
  %v2991 = vadd.f32 %v2599, %v2943
  %v2992 = vadd.f32 %v2600, %v2948
  %v2993 = vadd.f32 %v2601, %v2951
  %v2994 = vadd.f32 %v2602, %v2956
  %v2995 = vadd.f32 %v2603, %v2959
  %v2996 = vadd.f32 %v2604, %v2964
  %v2997 = vadd.f32 %v2605, %v2967
  %v2998 = vadd.f32 %v2606, %v2972
  %v2999 = vadd.f32 %v2607, %v2975
  %v3000 = vadd.f32 %v2608, %v2980
  %v3001 = vadd.f32 %v2609, %v2983
  %v3002 = vpack.c.b16 %v950, %v950
  %v3004 = vsel %vm441, %v3002, 0
  %3006 = vset.pattern.permute.xlu0 7
  %3007 = vperm.xlu0 %3006, %v158
  %v3008 = vpop.permute.xlu0 %3007
  %v3011 = vunpack.c.l.s4 839922192
  %v3012 = vunpack.c.0.s8 %v3011
  %v3013 = vlaneseq
  %v3014 = vshrl.u32 %v3013, 7
  %v3015 = vsub.s32 %v3012, %v3014
  %v3016 = vrot.slane %v3008, %v3015
  %3017 = vset.pattern.permute.xlu0 7
  %3018 = vperm.xlu0 %3017, %v159
  %v3019 = vpop.permute.xlu0 %3018
  %v3022 = vunpack.c.l.s4 839922192
  %v3023 = vunpack.c.0.s8 %v3022
  %v3024 = vlaneseq
  %v3025 = vshrl.u32 %v3024, 7
  %v3026 = vsub.s32 %v3023, %v3025
  %v3027 = vrot.slane %v3019, %v3026
  %3028 = vset.pattern.permute.xlu0 7
  %3029 = vperm.xlu0 %3028, %v160
  %v3030 = vpop.permute.xlu0 %3029
  %v3033 = vunpack.c.l.s4 839922192
  %v3034 = vunpack.c.0.s8 %v3033
  %v3035 = vlaneseq
  %v3036 = vshrl.u32 %v3035, 7
  %v3037 = vsub.s32 %v3034, %v3036
  %v3038 = vrot.slane %v3030, %v3037
  %3039 = vset.pattern.permute.xlu0 7
  %3040 = vperm.xlu0 %3039, %v161
  %v3041 = vpop.permute.xlu0 %3040
  %v3044 = vunpack.c.l.s4 839922192
  %v3045 = vunpack.c.0.s8 %v3044
  %v3046 = vlaneseq
  %v3047 = vshrl.u32 %v3046, 7
  %v3048 = vsub.s32 %v3045, %v3047
  %v3049 = vrot.slane %v3041, %v3048
  %3050 = vset.pattern.permute.xlu0 7
  %3051 = vperm.xlu0 %3050, %v162
  %v3052 = vpop.permute.xlu0 %3051
  %v3055 = vunpack.c.l.s4 839922192
  %v3056 = vunpack.c.0.s8 %v3055
  %v3057 = vlaneseq
  %v3058 = vshrl.u32 %v3057, 7
  %v3059 = vsub.s32 %v3056, %v3058
  %v3060 = vrot.slane %v3052, %v3059
  %3061 = vset.pattern.permute.xlu0 7
  %3062 = vperm.xlu0 %3061, %v163
  %v3063 = vpop.permute.xlu0 %3062
  %v3066 = vunpack.c.l.s4 839922192
  %v3067 = vunpack.c.0.s8 %v3066
  %v3068 = vlaneseq
  %v3069 = vshrl.u32 %v3068, 7
  %v3070 = vsub.s32 %v3067, %v3069
  %v3071 = vrot.slane %v3063, %v3070
  %3072 = vset.pattern.permute.xlu0 7
  %3073 = vperm.xlu0 %3072, %v164
  %v3074 = vpop.permute.xlu0 %3073
  %v3077 = vunpack.c.l.s4 839922192
  %v3078 = vunpack.c.0.s8 %v3077
  %v3079 = vlaneseq
  %v3080 = vshrl.u32 %v3079, 7
  %v3081 = vsub.s32 %v3078, %v3080
  %v3082 = vrot.slane %v3074, %v3081
  %3083 = vset.pattern.permute.xlu0 7
  %3084 = vperm.xlu0 %3083, %v165
  %v3085 = vpop.permute.xlu0 %3084
  %v3088 = vunpack.c.l.s4 839922192
  %v3089 = vunpack.c.0.s8 %v3088
  %v3090 = vlaneseq
  %v3091 = vshrl.u32 %v3090, 7
  %v3092 = vsub.s32 %v3089, %v3091
  %v3093 = vrot.slane %v3085, %v3092
  %3094 = vset.pattern.permute.xlu0 7
  %3095 = vperm.xlu0 %3094, %v166
  %v3096 = vpop.permute.xlu0 %3095
  %v3099 = vunpack.c.l.s4 839922192
  %v3100 = vunpack.c.0.s8 %v3099
  %v3101 = vlaneseq
  %v3102 = vshrl.u32 %v3101, 7
  %v3103 = vsub.s32 %v3100, %v3102
  %v3104 = vrot.slane %v3096, %v3103
  %3105 = vset.pattern.permute.xlu0 7
  %3106 = vperm.xlu0 %3105, %v167
  %v3107 = vpop.permute.xlu0 %3106
  %v3110 = vunpack.c.l.s4 839922192
  %v3111 = vunpack.c.0.s8 %v3110
  %v3112 = vlaneseq
  %v3113 = vshrl.u32 %v3112, 7
  %v3114 = vsub.s32 %v3111, %v3113
  %v3115 = vrot.slane %v3107, %v3114
  %3116 = vset.pattern.permute.xlu0 7
  %3117 = vperm.xlu0 %3116, %v168
  %v3118 = vpop.permute.xlu0 %3117
  %v3121 = vunpack.c.l.s4 839922192
  %v3122 = vunpack.c.0.s8 %v3121
  %v3123 = vlaneseq
  %v3124 = vshrl.u32 %v3123, 7
  %v3125 = vsub.s32 %v3122, %v3124
  %v3126 = vrot.slane %v3118, %v3125
  %3127 = vset.pattern.permute.xlu0 7
  %3128 = vperm.xlu0 %3127, %v169
  %v3129 = vpop.permute.xlu0 %3128
  %v3132 = vunpack.c.l.s4 839922192
  %v3133 = vunpack.c.0.s8 %v3132
  %v3134 = vlaneseq
  %v3135 = vshrl.u32 %v3134, 7
  %v3136 = vsub.s32 %v3133, %v3135
  %v3137 = vrot.slane %v3129, %v3136
  %3138 = vset.pattern.permute.xlu0 7
  %3139 = vperm.xlu0 %3138, %v170
  %v3140 = vpop.permute.xlu0 %3139
  %v3143 = vunpack.c.l.s4 839922192
  %v3144 = vunpack.c.0.s8 %v3143
  %v3145 = vlaneseq
  %v3146 = vshrl.u32 %v3145, 7
  %v3147 = vsub.s32 %v3144, %v3146
  %v3148 = vrot.slane %v3140, %v3147
  %3149 = vset.pattern.permute.xlu0 7
  %3150 = vperm.xlu0 %3149, %v171
  %v3151 = vpop.permute.xlu0 %3150
  %v3154 = vunpack.c.l.s4 839922192
  %v3155 = vunpack.c.0.s8 %v3154
  %v3156 = vlaneseq
  %v3157 = vshrl.u32 %v3156, 7
  %v3158 = vsub.s32 %v3155, %v3157
  %v3159 = vrot.slane %v3151, %v3158
  %3160 = vset.pattern.permute.xlu0 7
  %3161 = vperm.xlu0 %3160, %v172
  %v3162 = vpop.permute.xlu0 %3161
  %v3165 = vunpack.c.l.s4 839922192
  %v3166 = vunpack.c.0.s8 %v3165
  %v3167 = vlaneseq
  %v3168 = vshrl.u32 %v3167, 7
  %v3169 = vsub.s32 %v3166, %v3168
  %v3170 = vrot.slane %v3162, %v3169
  %3171 = vset.pattern.permute.xlu0 7
  %3172 = vperm.xlu0 %3171, %v173
  %v3173 = vpop.permute.xlu0 %3172
  %v3176 = vunpack.c.l.s4 839922192
  %v3177 = vunpack.c.0.s8 %v3176
  %v3178 = vlaneseq
  %v3179 = vshrl.u32 %v3178, 7
  %v3180 = vsub.s32 %v3177, %v3179
  %v3181 = vrot.slane %v3173, %v3180
  %v3198 = vunpack.c.l.b16 %v3016
  %v3199 = vunpack.c.l.b16 %v3027
  %v3200 = vunpack.c.l.b16 %v3038
  %v3201 = vunpack.c.l.b16 %v3049
  %v3202 = vunpack.c.l.b16 %v3060
  %v3203 = vunpack.c.l.b16 %v3071
  %v3204 = vunpack.c.l.b16 %v3082
  %v3205 = vunpack.c.l.b16 %v3093
  %v3206 = vunpack.c.l.b16 %v3104
  %v3207 = vunpack.c.l.b16 %v3115
  %v3208 = vunpack.c.l.b16 %v3126
  %v3209 = vunpack.c.l.b16 %v3137
  %v3210 = vunpack.c.l.b16 %v3148
  %v3211 = vunpack.c.l.b16 %v3159
  %v3212 = vunpack.c.l.b16 %v3170
  %v3213 = vunpack.c.l.b16 %v3181
  %v3214 = vpack.c.b16 %v3199, %v3198
  %v3215 = vpack.c.b16 %v3201, %v3200
  %v3216 = vpack.c.b16 %v3203, %v3202
  %v3217 = vpack.c.b16 %v3205, %v3204
  %v3218 = vpack.c.b16 %v3207, %v3206
  %v3219 = vpack.c.b16 %v3209, %v3208
  %v3220 = vpack.c.b16 %v3211, %v3210
  %v3221 = vpack.c.b16 %v3213, %v3212
  %v3230 = vmul.bf16 %v427, %v3214
  %v3231 = vmul.bf16 %v428, %v3215
  %v3232 = vmul.bf16 %v429, %v3216
  %v3233 = vmul.bf16 %v430, %v3217
  %v3234 = vmul.bf16 %v431, %v3218
  %v3235 = vmul.bf16 %v432, %v3219
  %v3236 = vmul.bf16 %v433, %v3220
  %v3237 = vmul.bf16 %v3004, %v3221
  %v3238 = vld [vmem:[%s2 + $0x70] sm:$0xf]
  %v3239 = vld [vmem:[%s2 + $0x74] sm:$0xf]
  %v3240 = vld [vmem:[%s2 + $0x78] sm:$0xf]
  %v3241 = vld [vmem:[%s2 + $0x7c] sm:$0xf]
  %v3246 = vunpack.c.l.b16 %v3238
  %v3247 = vunpack.c.l.b16 %v3239
  %v3248 = vunpack.c.l.b16 %v3240
  %v3249 = vunpack.c.l.b16 %v3241
  %v3250 = vpack.c.b16 %v3247, %v3246
  %v3251 = vpack.c.b16 %v3249, %v3248
  %v3255 = vsel %vm694, %v3230, 0
  %v3258 = vsel %vm694, %v3231, 0
  %v3261 = vsel %vm694, %v3232, 0
  %v3264 = vsel %vm694, %v3233, 0
  %v3267 = vsel %vm694, %v3234, 0
  %v3270 = vsel %vm694, %v3235, 0
  %v3273 = vsel %vm694, %v3236, 0
  %v3276 = vsel %vm694, %v3237, 0
  %3278 = vmatprep.subr.bf16.mxu0 0
  %3279 = vmatpush1.bf16.msra.mxu0 %v3250
  %3280 = vmatprep.subr.bf16.mxu0 0
  %3281 = vmatpush1.bf16.msra.mxu0 %v3251
  %3282 = vmatprep.subr.bf16.mxu0 0
  %3283 = vmatpush1.bf16.msra.mxu0 0
  %3284 = vmatprep.subr.bf16.mxu0 0
  %3285 = vmatpush1.bf16.msra.mxu0 0
  %3286 = vmatprep.subr.bf16.mxu0 0
  %3287 = vmatpush1.bf16.msra.mxu0 0
  %3288 = vmatprep.subr.bf16.mxu0 0
  %3289 = vmatpush1.bf16.msra.mxu0 0
  %3290 = vmatprep.subr.bf16.mxu0 0
  %3291 = vmatpush1.bf16.msra.mxu0 0
  %3292 = vmatprep.subr.bf16.mxu0 0
  %3293 = vmatpush1.bf16.msra.mxu0 0
  %3294 = vmatprep.subr.bf16.mxu0 0
  %3295 = vmatpush1.bf16.msra.mxu0 0
  %3296 = vmatprep.subr.bf16.mxu0 0
  %3297 = vmatpush1.bf16.msra.mxu0 0
  %3298 = vmatprep.subr.bf16.mxu0 0
  %3299 = vmatpush1.bf16.msra.mxu0 0
  %3300 = vmatprep.subr.bf16.mxu0 0
  %3301 = vmatpush1.bf16.msra.mxu0 0
  %3302 = vmatprep.subr.bf16.mxu0 0
  %3303 = vmatpush1.bf16.msra.mxu0 0
  %3304 = vmatprep.subr.bf16.mxu0 0
  %3305 = vmatpush1.bf16.msra.mxu0 0
  %3306 = vmatprep.subr.bf16.mxu0 0
  %3307 = vmatpush1.bf16.msra.mxu0 0
  %3308 = vmatprep.subr.bf16.mxu0 0
  %3309 = vmatpush1.bf16.msra.mxu0 0
  %3310 = vmatprep.mubr.bf16.mxu0 0
  %3311 = vmatmul.mubr.bf16.gmra.mrb[0].mxu0 %v3255
  %v3312 = vpop.f32.mrb[0].mxu0
  %v3313 = vadd.f32 0.0, %v3312
  %v3314 = vpop.f32.mrb[0].mxu0
  %v3315 = vpop.f32.mrb[0].mxu0
  %v3316 = vadd.f32 0.0, %v3315
  %v3317 = vpop.f32.mrb[0].mxu0
  %3318 = vmatprep.mubr.bf16.mxu0 0
  %3319 = vmatmul.mubr.bf16.gmra.mrb[0].mxu0 %v3258
  %v3320 = vpop.f32.mrb[0].mxu0
  %v3321 = vadd.f32 0.0, %v3320
  %v3322 = vpop.f32.mrb[0].mxu0
  %v3323 = vpop.f32.mrb[0].mxu0
  %v3324 = vadd.f32 0.0, %v3323
  %v3325 = vpop.f32.mrb[0].mxu0
  %3326 = vmatprep.mubr.bf16.mxu0 0
  %3327 = vmatmul.mubr.bf16.gmra.mrb[0].mxu0 %v3261
  %v3328 = vpop.f32.mrb[0].mxu0
  %v3329 = vadd.f32 0.0, %v3328
  %v3330 = vpop.f32.mrb[0].mxu0
  %v3331 = vpop.f32.mrb[0].mxu0
  %v3332 = vadd.f32 0.0, %v3331
  %v3333 = vpop.f32.mrb[0].mxu0
  %3334 = vmatprep.mubr.bf16.mxu0 0
  %3335 = vmatmul.mubr.bf16.gmra.mrb[0].mxu0 %v3264
  %v3336 = vpop.f32.mrb[0].mxu0
  %v3337 = vadd.f32 0.0, %v3336
  %v3338 = vpop.f32.mrb[0].mxu0
  %v3339 = vpop.f32.mrb[0].mxu0
  %v3340 = vadd.f32 0.0, %v3339
  %v3341 = vpop.f32.mrb[0].mxu0
  %3342 = vmatprep.mubr.bf16.mxu0 0
  %3343 = vmatmul.mubr.bf16.gmra.mrb[0].mxu0 %v3267
  %v3344 = vpop.f32.mrb[0].mxu0
  %v3345 = vadd.f32 0.0, %v3344
  %v3346 = vpop.f32.mrb[0].mxu0
  %v3347 = vpop.f32.mrb[0].mxu0
  %v3348 = vadd.f32 0.0, %v3347
  %v3349 = vpop.f32.mrb[0].mxu0
  %3350 = vmatprep.mubr.bf16.mxu0 0
  %3351 = vmatmul.mubr.bf16.gmra.mrb[0].mxu0 %v3270
  %v3352 = vpop.f32.mrb[0].mxu0
  %v3353 = vadd.f32 0.0, %v3352
  %v3354 = vpop.f32.mrb[0].mxu0
  %v3355 = vpop.f32.mrb[0].mxu0
  %v3356 = vadd.f32 0.0, %v3355
  %v3357 = vpop.f32.mrb[0].mxu0
  %3358 = vmatprep.mubr.bf16.mxu0 0
  %3359 = vmatmul.mubr.bf16.gmra.mrb[0].mxu0 %v3273
  %v3360 = vpop.f32.mrb[0].mxu0
  %v3361 = vadd.f32 0.0, %v3360
  %v3362 = vpop.f32.mrb[0].mxu0
  %v3363 = vpop.f32.mrb[0].mxu0
  %v3364 = vadd.f32 0.0, %v3363
  %v3365 = vpop.f32.mrb[0].mxu0
  %3366 = vmatprep.mubr.bf16.mxu0 0
  %3367 = vmatmul.mubr.bf16.gmra.mrb[0].mxu0 %v3276
  %v3368 = vpop.f32.mrb[0].mxu0
  %v3369 = vadd.f32 0.0, %v3368
  %v3370 = vpop.f32.mrb[0].mxu0
  %v3371 = vpop.f32.mrb[0].mxu0
  %v3372 = vadd.f32 0.0, %v3371
  %v3373 = vpop.f32.mrb[0].mxu0
  %3374 = vdwg.mxu0
  %v3375 = vadd.f32 %v2986, %v3313
  %v3376 = vadd.f32 %v2987, %v3316
  %v3377 = vadd.f32 %v2988, %v3321
  %v3378 = vadd.f32 %v2989, %v3324
  %v3379 = vadd.f32 %v2990, %v3329
  %v3380 = vadd.f32 %v2991, %v3332
  %v3381 = vadd.f32 %v2992, %v3337
  %v3382 = vadd.f32 %v2993, %v3340
  %v3383 = vadd.f32 %v2994, %v3345
  %v3384 = vadd.f32 %v2995, %v3348
  %v3385 = vadd.f32 %v2996, %v3353
  %v3386 = vadd.f32 %v2997, %v3356
  %v3387 = vadd.f32 %v2998, %v3361
  %v3388 = vadd.f32 %v2999, %v3364
  %v3389 = vadd.f32 %v3000, %v3369
  %v3390 = vadd.f32 %v3001, %v3372
  %v3392 = vshrl.u32 %v427, 16
  %v3394 = vshll.u32 %v427, 16
  %v3396 = vrot.slane %v3394, 1
  %v3397 = vor.u32 %v3392, %v3396
  %v3399 = vshll.u32 %v428, 16
  %v3401 = vrot.slane %v3399, 1
  %v3402 = vsel %vm2190, %v3397, %v3401
  %v3403 = vshrl.u32 %v428, 16
  %v3405 = vor.u32 %v3403, %v3401
  %v3407 = vshll.u32 %v429, 16
  %v3409 = vrot.slane %v3407, 1
  %v3410 = vsel %vm2190, %v3405, %v3409
  %v3411 = vshrl.u32 %v429, 16
  %v3413 = vor.u32 %v3411, %v3409
  %v3415 = vshll.u32 %v430, 16
  %v3417 = vrot.slane %v3415, 1
  %v3418 = vsel %vm2190, %v3413, %v3417
  %v3419 = vshrl.u32 %v430, 16
  %v3421 = vor.u32 %v3419, %v3417
  %v3423 = vshll.u32 %v431, 16
  %v3425 = vrot.slane %v3423, 1
  %v3426 = vsel %vm2190, %v3421, %v3425
  %v3427 = vshrl.u32 %v431, 16
  %v3429 = vor.u32 %v3427, %v3425
  %v3431 = vshll.u32 %v432, 16
  %v3433 = vrot.slane %v3431, 1
  %v3434 = vsel %vm2190, %v3429, %v3433
  %v3435 = vshrl.u32 %v432, 16
  %v3437 = vor.u32 %v3435, %v3433
  %v3439 = vshll.u32 %v433, 16
  %v3441 = vrot.slane %v3439, 1
  %v3442 = vsel %vm2190, %v3437, %v3441
  %v3443 = vshrl.u32 %v433, 16
  %v3445 = vor.u32 %v3443, %v3441
  %v3446 = vshll.u32 %v3002, 16
  %v3448 = vrot.slane %v3446, 1
  %v3449 = vsel %vm2190, %v3445, %v3448
  %v3450 = vshrl.u32 %v3002, 16
  %v3452 = vor.u32 %v3450, %v3448
  %v3461 = vsel %vm998, %v3452, 0
  %3462 = vset.pattern.permute.xlu0 8
  %3463 = vperm.xlu0 %3462, %v158
  %v3464 = vpop.permute.xlu0 %3463
  %v3467 = vunpack.c.l.s4 839922192
  %v3468 = vunpack.c.0.s8 %v3467
  %v3469 = vlaneseq
  %v3470 = vshrl.u32 %v3469, 7
  %v3471 = vsub.s32 %v3468, %v3470
  %v3472 = vrot.slane %v3464, %v3471
  %3473 = vset.pattern.permute.xlu0 8
  %3474 = vperm.xlu0 %3473, %v159
  %v3475 = vpop.permute.xlu0 %3474
  %v3478 = vunpack.c.l.s4 839922192
  %v3479 = vunpack.c.0.s8 %v3478
  %v3480 = vlaneseq
  %v3481 = vshrl.u32 %v3480, 7
  %v3482 = vsub.s32 %v3479, %v3481
  %v3483 = vrot.slane %v3475, %v3482
  %3484 = vset.pattern.permute.xlu0 8
  %3485 = vperm.xlu0 %3484, %v160
  %v3486 = vpop.permute.xlu0 %3485
  %v3489 = vunpack.c.l.s4 839922192
  %v3490 = vunpack.c.0.s8 %v3489
  %v3491 = vlaneseq
  %v3492 = vshrl.u32 %v3491, 7
  %v3493 = vsub.s32 %v3490, %v3492
  %v3494 = vrot.slane %v3486, %v3493
  %3495 = vset.pattern.permute.xlu0 8
  %3496 = vperm.xlu0 %3495, %v161
  %v3497 = vpop.permute.xlu0 %3496
  %v3500 = vunpack.c.l.s4 839922192
  %v3501 = vunpack.c.0.s8 %v3500
  %v3502 = vlaneseq
  %v3503 = vshrl.u32 %v3502, 7
  %v3504 = vsub.s32 %v3501, %v3503
  %v3505 = vrot.slane %v3497, %v3504
  %3506 = vset.pattern.permute.xlu0 8
  %3507 = vperm.xlu0 %3506, %v162
  %v3508 = vpop.permute.xlu0 %3507
  %v3511 = vunpack.c.l.s4 839922192
  %v3512 = vunpack.c.0.s8 %v3511
  %v3513 = vlaneseq
  %v3514 = vshrl.u32 %v3513, 7
  %v3515 = vsub.s32 %v3512, %v3514
  %v3516 = vrot.slane %v3508, %v3515
  %3517 = vset.pattern.permute.xlu0 8
  %3518 = vperm.xlu0 %3517, %v163
  %v3519 = vpop.permute.xlu0 %3518
  %v3522 = vunpack.c.l.s4 839922192
  %v3523 = vunpack.c.0.s8 %v3522
  %v3524 = vlaneseq
  %v3525 = vshrl.u32 %v3524, 7
  %v3526 = vsub.s32 %v3523, %v3525
  %v3527 = vrot.slane %v3519, %v3526
  %3528 = vset.pattern.permute.xlu0 8
  %3529 = vperm.xlu0 %3528, %v164
  %v3530 = vpop.permute.xlu0 %3529
  %v3533 = vunpack.c.l.s4 839922192
  %v3534 = vunpack.c.0.s8 %v3533
  %v3535 = vlaneseq
  %v3536 = vshrl.u32 %v3535, 7
  %v3537 = vsub.s32 %v3534, %v3536
  %v3538 = vrot.slane %v3530, %v3537
  %3539 = vset.pattern.permute.xlu0 8
  %3540 = vperm.xlu0 %3539, %v165
  %v3541 = vpop.permute.xlu0 %3540
  %v3544 = vunpack.c.l.s4 839922192
  %v3545 = vunpack.c.0.s8 %v3544
  %v3546 = vlaneseq
  %v3547 = vshrl.u32 %v3546, 7
  %v3548 = vsub.s32 %v3545, %v3547
  %v3549 = vrot.slane %v3541, %v3548
  %3550 = vset.pattern.permute.xlu0 8
  %3551 = vperm.xlu0 %3550, %v166
  %v3552 = vpop.permute.xlu0 %3551
  %v3555 = vunpack.c.l.s4 839922192
  %v3556 = vunpack.c.0.s8 %v3555
  %v3557 = vlaneseq
  %v3558 = vshrl.u32 %v3557, 7
  %v3559 = vsub.s32 %v3556, %v3558
  %v3560 = vrot.slane %v3552, %v3559
  %3561 = vset.pattern.permute.xlu0 8
  %3562 = vperm.xlu0 %3561, %v167
  %v3563 = vpop.permute.xlu0 %3562
  %v3566 = vunpack.c.l.s4 839922192
  %v3567 = vunpack.c.0.s8 %v3566
  %v3568 = vlaneseq
  %v3569 = vshrl.u32 %v3568, 7
  %v3570 = vsub.s32 %v3567, %v3569
  %v3571 = vrot.slane %v3563, %v3570
  %3572 = vset.pattern.permute.xlu0 8
  %3573 = vperm.xlu0 %3572, %v168
  %v3574 = vpop.permute.xlu0 %3573
  %v3577 = vunpack.c.l.s4 839922192
  %v3578 = vunpack.c.0.s8 %v3577
  %v3579 = vlaneseq
  %v3580 = vshrl.u32 %v3579, 7
  %v3581 = vsub.s32 %v3578, %v3580
  %v3582 = vrot.slane %v3574, %v3581
  %3583 = vset.pattern.permute.xlu0 8
  %3584 = vperm.xlu0 %3583, %v169
  %v3585 = vpop.permute.xlu0 %3584
  %v3588 = vunpack.c.l.s4 839922192
  %v3589 = vunpack.c.0.s8 %v3588
  %v3590 = vlaneseq
  %v3591 = vshrl.u32 %v3590, 7
  %v3592 = vsub.s32 %v3589, %v3591
  %v3593 = vrot.slane %v3585, %v3592
  %3594 = vset.pattern.permute.xlu0 8
  %3595 = vperm.xlu0 %3594, %v170
  %v3596 = vpop.permute.xlu0 %3595
  %v3599 = vunpack.c.l.s4 839922192
  %v3600 = vunpack.c.0.s8 %v3599
  %v3601 = vlaneseq
  %v3602 = vshrl.u32 %v3601, 7
  %v3603 = vsub.s32 %v3600, %v3602
  %v3604 = vrot.slane %v3596, %v3603
  %3605 = vset.pattern.permute.xlu0 8
  %3606 = vperm.xlu0 %3605, %v171
  %v3607 = vpop.permute.xlu0 %3606
  %v3610 = vunpack.c.l.s4 839922192
  %v3611 = vunpack.c.0.s8 %v3610
  %v3612 = vlaneseq
  %v3613 = vshrl.u32 %v3612, 7
  %v3614 = vsub.s32 %v3611, %v3613
  %v3615 = vrot.slane %v3607, %v3614
  %3616 = vset.pattern.permute.xlu0 8
  %3617 = vperm.xlu0 %3616, %v172
  %v3618 = vpop.permute.xlu0 %3617
  %v3621 = vunpack.c.l.s4 839922192
  %v3622 = vunpack.c.0.s8 %v3621
  %v3623 = vlaneseq
  %v3624 = vshrl.u32 %v3623, 7
  %v3625 = vsub.s32 %v3622, %v3624
  %v3626 = vrot.slane %v3618, %v3625
  %3627 = vset.pattern.permute.xlu0 8
  %3628 = vperm.xlu0 %3627, %v173
  %v3629 = vpop.permute.xlu0 %3628
  %v3632 = vunpack.c.l.s4 839922192
  %v3633 = vunpack.c.0.s8 %v3632
  %v3634 = vlaneseq
  %v3635 = vshrl.u32 %v3634, 7
  %v3636 = vsub.s32 %v3633, %v3635
  %v3637 = vrot.slane %v3629, %v3636
  %v3654 = vunpack.c.l.b16 %v3472
  %v3655 = vunpack.c.l.b16 %v3483
  %v3656 = vunpack.c.l.b16 %v3494
  %v3657 = vunpack.c.l.b16 %v3505
  %v3658 = vunpack.c.l.b16 %v3516
  %v3659 = vunpack.c.l.b16 %v3527
  %v3660 = vunpack.c.l.b16 %v3538
  %v3661 = vunpack.c.l.b16 %v3549
  %v3662 = vunpack.c.l.b16 %v3560
  %v3663 = vunpack.c.l.b16 %v3571
  %v3664 = vunpack.c.l.b16 %v3582
  %v3665 = vunpack.c.l.b16 %v3593
  %v3666 = vunpack.c.l.b16 %v3604
  %v3667 = vunpack.c.l.b16 %v3615
  %v3668 = vunpack.c.l.b16 %v3626
  %v3669 = vunpack.c.l.b16 %v3637
  %v3670 = vpack.c.b16 %v3655, %v3654
  %v3671 = vpack.c.b16 %v3657, %v3656
  %v3672 = vpack.c.b16 %v3659, %v3658
  %v3673 = vpack.c.b16 %v3661, %v3660
  %v3674 = vpack.c.b16 %v3663, %v3662
  %v3675 = vpack.c.b16 %v3665, %v3664
  %v3676 = vpack.c.b16 %v3667, %v3666
  %v3677 = vpack.c.b16 %v3669, %v3668
  %v3686 = vmul.bf16 %v3402, %v3670
  %v3687 = vmul.bf16 %v3410, %v3671
  %v3688 = vmul.bf16 %v3418, %v3672
  %v3689 = vmul.bf16 %v3426, %v3673
  %v3690 = vmul.bf16 %v3434, %v3674
  %v3691 = vmul.bf16 %v3442, %v3675
  %v3692 = vmul.bf16 %v3449, %v3676
  %v3693 = vmul.bf16 %v3461, %v3677
  %v3694 = vld [vmem:[%s2 + $0x80] sm:$0xf]
  %v3695 = vld [vmem:[%s2 + $0x84] sm:$0xf]
  %v3696 = vld [vmem:[%s2 + $0x88] sm:$0xf]
  %v3697 = vld [vmem:[%s2 + $0x8c] sm:$0xf]
  %v3702 = vunpack.c.l.b16 %v3694
  %v3703 = vunpack.c.l.b16 %v3695
  %v3704 = vunpack.c.l.b16 %v3696
  %v3705 = vunpack.c.l.b16 %v3697
  %v3706 = vpack.c.b16 %v3703, %v3702
  %v3707 = vpack.c.b16 %v3705, %v3704
  %v3711 = vsel %vm694, %v3686, 0
  %v3714 = vsel %vm694, %v3687, 0
  %v3717 = vsel %vm694, %v3688, 0
  %v3720 = vsel %vm694, %v3689, 0
  %v3723 = vsel %vm694, %v3690, 0
  %v3726 = vsel %vm694, %v3691, 0
  %v3729 = vsel %vm694, %v3692, 0
  %v3732 = vsel %vm694, %v3693, 0
  %3734 = vmatprep.subr.bf16.mxu0 0
  %3735 = vmatpush1.bf16.msra.mxu0 %v3706
  %3736 = vmatprep.subr.bf16.mxu0 0
  %3737 = vmatpush1.bf16.msra.mxu0 %v3707
  %3738 = vmatprep.subr.bf16.mxu0 0
  %3739 = vmatpush1.bf16.msra.mxu0 0
  %3740 = vmatprep.subr.bf16.mxu0 0
  %3741 = vmatpush1.bf16.msra.mxu0 0
  %3742 = vmatprep.subr.bf16.mxu0 0
  %3743 = vmatpush1.bf16.msra.mxu0 0
  %3744 = vmatprep.subr.bf16.mxu0 0
  %3745 = vmatpush1.bf16.msra.mxu0 0
  %3746 = vmatprep.subr.bf16.mxu0 0
  %3747 = vmatpush1.bf16.msra.mxu0 0
  %3748 = vmatprep.subr.bf16.mxu0 0
  %3749 = vmatpush1.bf16.msra.mxu0 0
  %3750 = vmatprep.subr.bf16.mxu0 0
  %3751 = vmatpush1.bf16.msra.mxu0 0
  %3752 = vmatprep.subr.bf16.mxu0 0
  %3753 = vmatpush1.bf16.msra.mxu0 0
  %3754 = vmatprep.subr.bf16.mxu0 0
  %3755 = vmatpush1.bf16.msra.mxu0 0
  %3756 = vmatprep.subr.bf16.mxu0 0
  %3757 = vmatpush1.bf16.msra.mxu0 0
  %3758 = vmatprep.subr.bf16.mxu0 0
  %3759 = vmatpush1.bf16.msra.mxu0 0
  %3760 = vmatprep.subr.bf16.mxu0 0
  %3761 = vmatpush1.bf16.msra.mxu0 0
  %3762 = vmatprep.subr.bf16.mxu0 0
  %3763 = vmatpush1.bf16.msra.mxu0 0
  %3764 = vmatprep.subr.bf16.mxu0 0
  %3765 = vmatpush1.bf16.msra.mxu0 0
  %3766 = vmatprep.mubr.bf16.mxu0 0
  %3767 = vmatmul.mubr.bf16.gmra.mrb[0].mxu0 %v3711
  %v3768 = vpop.f32.mrb[0].mxu0
  %v3769 = vadd.f32 0.0, %v3768
  %v3770 = vpop.f32.mrb[0].mxu0
  %v3771 = vpop.f32.mrb[0].mxu0
  %v3772 = vadd.f32 0.0, %v3771
  %v3773 = vpop.f32.mrb[0].mxu0
  %3774 = vmatprep.mubr.bf16.mxu0 0
  %3775 = vmatmul.mubr.bf16.gmra.mrb[0].mxu0 %v3714
  %v3776 = vpop.f32.mrb[0].mxu0
  %v3777 = vadd.f32 0.0, %v3776
  %v3778 = vpop.f32.mrb[0].mxu0
  %v3779 = vpop.f32.mrb[0].mxu0
  %v3780 = vadd.f32 0.0, %v3779
  %v3781 = vpop.f32.mrb[0].mxu0
  %3782 = vmatprep.mubr.bf16.mxu0 0
  %3783 = vmatmul.mubr.bf16.gmra.mrb[0].mxu0 %v3717
  %v3784 = vpop.f32.mrb[0].mxu0
  %v3785 = vadd.f32 0.0, %v3784
  %v3786 = vpop.f32.mrb[0].mxu0
  %v3787 = vpop.f32.mrb[0].mxu0
  %v3788 = vadd.f32 0.0, %v3787
  %v3789 = vpop.f32.mrb[0].mxu0
  %3790 = vmatprep.mubr.bf16.mxu0 0
  %3791 = vmatmul.mubr.bf16.gmra.mrb[0].mxu0 %v3720
  %v3792 = vpop.f32.mrb[0].mxu0
  %v3793 = vadd.f32 0.0, %v3792
  %v3794 = vpop.f32.mrb[0].mxu0
  %v3795 = vpop.f32.mrb[0].mxu0
  %v3796 = vadd.f32 0.0, %v3795
  %v3797 = vpop.f32.mrb[0].mxu0
  %3798 = vmatprep.mubr.bf16.mxu0 0
  %3799 = vmatmul.mubr.bf16.gmra.mrb[0].mxu0 %v3723
  %v3800 = vpop.f32.mrb[0].mxu0
  %v3801 = vadd.f32 0.0, %v3800
  %v3802 = vpop.f32.mrb[0].mxu0
  %v3803 = vpop.f32.mrb[0].mxu0
  %v3804 = vadd.f32 0.0, %v3803
  %v3805 = vpop.f32.mrb[0].mxu0
  %3806 = vmatprep.mubr.bf16.mxu0 0
  %3807 = vmatmul.mubr.bf16.gmra.mrb[0].mxu0 %v3726
  %v3808 = vpop.f32.mrb[0].mxu0
  %v3809 = vadd.f32 0.0, %v3808
  %v3810 = vpop.f32.mrb[0].mxu0
  %v3811 = vpop.f32.mrb[0].mxu0
  %v3812 = vadd.f32 0.0, %v3811
  %v3813 = vpop.f32.mrb[0].mxu0
  %3814 = vmatprep.mubr.bf16.mxu0 0
  %3815 = vmatmul.mubr.bf16.gmra.mrb[0].mxu0 %v3729
  %v3816 = vpop.f32.mrb[0].mxu0
  %v3817 = vadd.f32 0.0, %v3816
  %v3818 = vpop.f32.mrb[0].mxu0
  %v3819 = vpop.f32.mrb[0].mxu0
  %v3820 = vadd.f32 0.0, %v3819
  %v3821 = vpop.f32.mrb[0].mxu0
  %3822 = vmatprep.mubr.bf16.mxu0 0
  %3823 = vmatmul.mubr.bf16.gmra.mrb[0].mxu0 %v3732
  %v3824 = vpop.f32.mrb[0].mxu0
  %v3825 = vadd.f32 0.0, %v3824
  %v3826 = vpop.f32.mrb[0].mxu0
  %v3827 = vpop.f32.mrb[0].mxu0
  %v3828 = vadd.f32 0.0, %v3827
  %v3829 = vpop.f32.mrb[0].mxu0
  %3830 = vdwg.mxu0
  %v3831 = vadd.f32 %v3375, %v3769
  %v3832 = vadd.f32 %v3376, %v3772
  %v3833 = vadd.f32 %v3377, %v3777
  %v3834 = vadd.f32 %v3378, %v3780
  %v3835 = vadd.f32 %v3379, %v3785
  %v3836 = vadd.f32 %v3380, %v3788
  %v3837 = vadd.f32 %v3381, %v3793
  %v3838 = vadd.f32 %v3382, %v3796
  %v3839 = vadd.f32 %v3383, %v3801
  %v3840 = vadd.f32 %v3384, %v3804
  %v3841 = vadd.f32 %v3385, %v3809
  %v3842 = vadd.f32 %v3386, %v3812
  %v3843 = vadd.f32 %v3387, %v3817
  %v3844 = vadd.f32 %v3388, %v3820
  %v3845 = vadd.f32 %v3389, %v3825
  %v3846 = vadd.f32 %v3390, %v3828
  %v3847 = vld [vmem:[%s4] sm:$0x1]
  %v3848 = vld [vmem:[%s4 + $0x1] sm:$0x1]
  %vm3849 = vcmask 523264
  %v3850 = vsel %vm3849, %v3831, 0.0
  %v3851 = vsel %vm3849, %v3832, 0.0
  %v3852 = vadd.f32 %v3850, %v3851
  %v3853 = vsel %vm3849, %v3833, 0.0
  %v3854 = vadd.f32 %v3852, %v3853
  %v3855 = vsel %vm3849, %v3834, 0.0
  %v3856 = vadd.f32 %v3854, %v3855
  %v3857 = vsel %vm3849, %v3835, 0.0
  %v3858 = vadd.f32 %v3856, %v3857
  %v3859 = vsel %vm3849, %v3836, 0.0
  %v3860 = vadd.f32 %v3858, %v3859
  %v3861 = vsel %vm3849, %v3837, 0.0
  %v3862 = vadd.f32 %v3860, %v3861
  %v3863 = vsel %vm3849, %v3838, 0.0
  %v3864 = vadd.f32 %v3862, %v3863
  %v3865 = vsel %vm3849, %v3839, 0.0
  %v3866 = vadd.f32 %v3864, %v3865
  %v3867 = vsel %vm3849, %v3840, 0.0
  %v3868 = vadd.f32 %v3866, %v3867
  %v3869 = vsel %vm3849, %v3841, 0.0
  %v3870 = vadd.f32 %v3868, %v3869
  %v3871 = vsel %vm3849, %v3842, 0.0
  %v3872 = vadd.f32 %v3870, %v3871
  %v3873 = vsel %vm3849, %v3843, 0.0
  %v3874 = vadd.f32 %v3872, %v3873
  %v3875 = vsel %vm3849, %v3844, 0.0
  %v3876 = vadd.f32 %v3874, %v3875
  %v3877 = vsel %vm3849, %v3845, 0.0
  %v3878 = vadd.f32 %v3876, %v3877
  %v3879 = vsel %vm3849, %v3846, 0.0
  %v3880 = vadd.f32 %v3878, %v3879
  %v3881 = vrot.slane %v3880, 4
  %v3882 = vadd.f32 %v3880, %v3881
  %v3883 = vrot.slane %v3882, 2
  %v3884 = vadd.f32 %v3882, %v3883
  %v3885 = vrot.slane %v3884, 1
  %v3886 = vadd.f32 %v3884, %v3885
  %3888 = vrot.lane.b32.xlu0 %v3886, 96
  %v3889 = vpop.permute.xlu0 %3888
  %v3891 = vadd.f32 %v3886, %v3889
  %3893 = vrot.lane.b32.xlu0 %v3891, 112
  %v3894 = vpop.permute.xlu0 %3893
  %v3896 = vadd.f32 %v3891, %v3894
  %3898 = vrot.lane.b32.xlu0 %v3896, 120
  %v3899 = vpop.permute.xlu0 %3898
  %v3901 = vadd.f32 %v3896, %v3899
  %v3902 = vmul.f32 %v3901, 0.0009765625
  %v3903 = vmul.f32 %v3831, %v3831
  %v3904 = vmul.f32 %v3832, %v3832
  %v3905 = vmul.f32 %v3833, %v3833
  %v3906 = vmul.f32 %v3834, %v3834
  %v3907 = vmul.f32 %v3835, %v3835
  %v3908 = vmul.f32 %v3836, %v3836
  %v3909 = vmul.f32 %v3837, %v3837
  %v3910 = vmul.f32 %v3838, %v3838
  %v3911 = vmul.f32 %v3839, %v3839
  %v3912 = vmul.f32 %v3840, %v3840
  %v3913 = vmul.f32 %v3841, %v3841
  %v3914 = vmul.f32 %v3842, %v3842
  %v3915 = vmul.f32 %v3843, %v3843
  %v3916 = vmul.f32 %v3844, %v3844
  %v3917 = vmul.f32 %v3845, %v3845
  %v3918 = vmul.f32 %v3846, %v3846
  %v3919 = vsel %vm3849, %v3903, 0.0
  %v3920 = vsel %vm3849, %v3904, 0.0
  %v3921 = vadd.f32 %v3919, %v3920
  %v3922 = vsel %vm3849, %v3905, 0.0
  %v3923 = vadd.f32 %v3921, %v3922
  %v3924 = vsel %vm3849, %v3906, 0.0
  %v3925 = vadd.f32 %v3923, %v3924
  %v3926 = vsel %vm3849, %v3907, 0.0
  %v3927 = vadd.f32 %v3925, %v3926
  %v3928 = vsel %vm3849, %v3908, 0.0
  %v3929 = vadd.f32 %v3927, %v3928
  %v3930 = vsel %vm3849, %v3909, 0.0
  %v3931 = vadd.f32 %v3929, %v3930
  %v3932 = vsel %vm3849, %v3910, 0.0
  %v3933 = vadd.f32 %v3931, %v3932
  %v3934 = vsel %vm3849, %v3911, 0.0
  %v3935 = vadd.f32 %v3933, %v3934
  %v3936 = vsel %vm3849, %v3912, 0.0
  %v3937 = vadd.f32 %v3935, %v3936
  %v3938 = vsel %vm3849, %v3913, 0.0
  %v3939 = vadd.f32 %v3937, %v3938
  %v3940 = vsel %vm3849, %v3914, 0.0
  %v3941 = vadd.f32 %v3939, %v3940
  %v3942 = vsel %vm3849, %v3915, 0.0
  %v3943 = vadd.f32 %v3941, %v3942
  %v3944 = vsel %vm3849, %v3916, 0.0
  %v3945 = vadd.f32 %v3943, %v3944
  %v3946 = vsel %vm3849, %v3917, 0.0
  %v3947 = vadd.f32 %v3945, %v3946
  %v3948 = vsel %vm3849, %v3918, 0.0
  %v3949 = vadd.f32 %v3947, %v3948
  %v3950 = vrot.slane %v3949, 4
  %v3951 = vadd.f32 %v3949, %v3950
  %v3952 = vrot.slane %v3951, 2
  %v3953 = vadd.f32 %v3951, %v3952
  %v3954 = vrot.slane %v3953, 1
  %v3955 = vadd.f32 %v3953, %v3954
  %3957 = vrot.lane.b32.xlu0 %v3955, 96
  %v3958 = vpop.permute.xlu0 %3957
  %v3960 = vadd.f32 %v3955, %v3958
  %3962 = vrot.lane.b32.xlu0 %v3960, 112
  %v3963 = vpop.permute.xlu0 %3962
  %v3965 = vadd.f32 %v3960, %v3963
  %3967 = vrot.lane.b32.xlu0 %v3965, 120
  %v3968 = vpop.permute.xlu0 %3967
  %v3970 = vadd.f32 %v3965, %v3968
  %v3971 = vmul.f32 %v3970, 0.0009765625
  %v3972 = vmul.f32 %v3902, %v3902
  %v3973 = vsub.f32 %v3971, %v3972
  %v3974 = vmax.f32 %v3973, 0.0
  %v3975 = vadd.f32 %v3974, 1e-05
  %v3976 = vrsqrt.pop %v3975
  %v3977 = vmul.f32 %v3847, %v3976
  %v3978 = vmul.f32 %v3902, %v3977
  %v3979 = vsub.f32 %v3848, %v3978
  %3981 = vrot.lane.b32.xlu0 %v3977, 8
  %v3982 = vpop.permute.xlu0 %3981
  %vm3984 = vcmask 64512
  %v3985 = vsel %vm3984, %v3977, %v3982
  %3987 = vrot.lane.b32.xlu0 %v3985, 16
  %v3988 = vpop.permute.xlu0 %3987
  %vm3990 = vcmask 130048
  %v3991 = vsel %vm3990, %v3985, %v3988
  %3993 = vrot.lane.b32.xlu0 %v3991, 32
  %v3994 = vpop.permute.xlu0 %3993
  %v3996 = vsel %vm694, %v3991, %v3994
  %v3997 = vlaneseq
  %v3998 = vshrl.u32 %v3997, 7
  %v3999 = vsub.s32 0, %v3998
  %v4000 = vrot.slane %v3996, %v3999
  %v4001 = vmul.f32 %v3831, %v4000
  %v4002 = vmul.f32 %v3832, %v4000
  %v4003 = vmul.f32 %v3833, %v4000
  %v4004 = vmul.f32 %v3834, %v4000
  %v4005 = vmul.f32 %v3835, %v4000
  %v4006 = vmul.f32 %v3836, %v4000
  %v4007 = vmul.f32 %v3837, %v4000
  %v4008 = vmul.f32 %v3838, %v4000
  %v4009 = vmul.f32 %v3839, %v4000
  %v4010 = vmul.f32 %v3840, %v4000
  %v4011 = vmul.f32 %v3841, %v4000
  %v4012 = vmul.f32 %v3842, %v4000
  %v4013 = vmul.f32 %v3843, %v4000
  %v4014 = vmul.f32 %v3844, %v4000
  %v4015 = vmul.f32 %v3845, %v4000
  %v4016 = vmul.f32 %v3846, %v4000
  %4018 = vrot.lane.b32.xlu0 %v3979, 8
  %v4019 = vpop.permute.xlu0 %4018
  %v4021 = vsel %vm3984, %v3979, %v4019
  %4023 = vrot.lane.b32.xlu0 %v4021, 16
  %v4024 = vpop.permute.xlu0 %4023
  %v4026 = vsel %vm3990, %v4021, %v4024
  %4028 = vrot.lane.b32.xlu0 %v4026, 32
  %v4029 = vpop.permute.xlu0 %4028
  %v4031 = vsel %vm694, %v4026, %v4029
  %v4032 = vlaneseq
  %v4033 = vshrl.u32 %v4032, 7
  %v4034 = vsub.s32 0, %v4033
  %v4035 = vrot.slane %v4031, %v4034
  %v4036 = vadd.f32 %v4001, %v4035
  %v4037 = vadd.f32 %v4002, %v4035
  %v4038 = vadd.f32 %v4003, %v4035
  %v4039 = vadd.f32 %v4004, %v4035
  %v4040 = vadd.f32 %v4005, %v4035
  %v4041 = vadd.f32 %v4006, %v4035
  %v4042 = vadd.f32 %v4007, %v4035
  %v4043 = vadd.f32 %v4008, %v4035
  %v4044 = vadd.f32 %v4009, %v4035
  %v4045 = vadd.f32 %v4010, %v4035
  %v4046 = vadd.f32 %v4011, %v4035
  %v4047 = vadd.f32 %v4012, %v4035
  %v4048 = vadd.f32 %v4013, %v4035
  %v4049 = vadd.f32 %v4014, %v4035
  %v4050 = vadd.f32 %v4015, %v4035
  %v4051 = vadd.f32 %v4016, %v4035
  %v4052 = vmax.f32 %v4036, 0.0
  %v4053 = vmax.f32 %v4037, 0.0
  %v4054 = vmax.f32 %v4038, 0.0
  %v4055 = vmax.f32 %v4039, 0.0
  %v4056 = vmax.f32 %v4040, 0.0
  %v4057 = vmax.f32 %v4041, 0.0
  %v4058 = vmax.f32 %v4042, 0.0
  %v4059 = vmax.f32 %v4043, 0.0
  %v4060 = vmax.f32 %v4044, 0.0
  %v4061 = vmax.f32 %v4045, 0.0
  %v4062 = vmax.f32 %v4046, 0.0
  %v4063 = vmax.f32 %v4047, 0.0
  %v4064 = vmax.f32 %v4048, 0.0
  %v4065 = vmax.f32 %v4049, 0.0
  %v4066 = vmax.f32 %v4050, 0.0
  %v4067 = vmax.f32 %v4051, 0.0
  %v4068 = vld [vmem:[%s4 + $0x2] sm:$0x1]
  %v4069 = vld [vmem:[%s4 + $0x3] sm:$0x1]
  %vm4070 = vcmask 1048064
  %v4071 = vsel %vm4070, %v3831, 0.0
  %v4072 = vsel %vm4070, %v3832, 0.0
  %v4073 = vadd.f32 %v4071, %v4072
  %v4074 = vsel %vm4070, %v3833, 0.0
  %v4075 = vadd.f32 %v4073, %v4074
  %v4076 = vsel %vm4070, %v3834, 0.0
  %v4077 = vadd.f32 %v4075, %v4076
  %v4078 = vsel %vm4070, %v3835, 0.0
  %v4079 = vadd.f32 %v4077, %v4078
  %v4080 = vsel %vm4070, %v3836, 0.0
  %v4081 = vadd.f32 %v4079, %v4080
  %v4082 = vsel %vm4070, %v3837, 0.0
  %v4083 = vadd.f32 %v4081, %v4082
  %v4084 = vsel %vm4070, %v3838, 0.0
  %v4085 = vadd.f32 %v4083, %v4084
  %v4086 = vsel %vm4070, %v3839, 0.0
  %v4087 = vadd.f32 %v4085, %v4086
  %v4088 = vsel %vm4070, %v3840, 0.0
  %v4089 = vadd.f32 %v4087, %v4088
  %v4090 = vsel %vm4070, %v3841, 0.0
  %v4091 = vadd.f32 %v4089, %v4090
  %v4092 = vsel %vm4070, %v3842, 0.0
  %v4093 = vadd.f32 %v4091, %v4092
  %v4094 = vsel %vm4070, %v3843, 0.0
  %v4095 = vadd.f32 %v4093, %v4094
  %v4096 = vsel %vm4070, %v3844, 0.0
  %v4097 = vadd.f32 %v4095, %v4096
  %v4098 = vsel %vm4070, %v3845, 0.0
  %v4099 = vadd.f32 %v4097, %v4098
  %v4100 = vsel %vm4070, %v3846, 0.0
  %v4101 = vadd.f32 %v4099, %v4100
  %v4102 = vrot.slane %v4101, 4
  %v4103 = vadd.f32 %v4101, %v4102
  %v4104 = vrot.slane %v4103, 2
  %v4105 = vadd.f32 %v4103, %v4104
  %v4106 = vrot.slane %v4105, 1
  %v4107 = vadd.f32 %v4105, %v4106
  %4109 = vrot.lane.b32.xlu0 %v4107, 96
  %v4110 = vpop.permute.xlu0 %4109
  %v4112 = vadd.f32 %v4107, %v4110
  %4114 = vrot.lane.b32.xlu0 %v4112, 112
  %v4115 = vpop.permute.xlu0 %4114
  %v4117 = vadd.f32 %v4112, %v4115
  %4119 = vrot.lane.b32.xlu0 %v4117, 120
  %v4120 = vpop.permute.xlu0 %4119
  %v4122 = vadd.f32 %v4117, %v4120
  %v4123 = vmul.f32 %v4122, 0.0009765625
  %v4124 = vsel %vm4070, %v3903, 0.0
  %v4125 = vsel %vm4070, %v3904, 0.0
  %v4126 = vadd.f32 %v4124, %v4125
  %v4127 = vsel %vm4070, %v3905, 0.0
  %v4128 = vadd.f32 %v4126, %v4127
  %v4129 = vsel %vm4070, %v3906, 0.0
  %v4130 = vadd.f32 %v4128, %v4129
  %v4131 = vsel %vm4070, %v3907, 0.0
  %v4132 = vadd.f32 %v4130, %v4131
  %v4133 = vsel %vm4070, %v3908, 0.0
  %v4134 = vadd.f32 %v4132, %v4133
  %v4135 = vsel %vm4070, %v3909, 0.0
  %v4136 = vadd.f32 %v4134, %v4135
  %v4137 = vsel %vm4070, %v3910, 0.0
  %v4138 = vadd.f32 %v4136, %v4137
  %v4139 = vsel %vm4070, %v3911, 0.0
  %v4140 = vadd.f32 %v4138, %v4139
  %v4141 = vsel %vm4070, %v3912, 0.0
  %v4142 = vadd.f32 %v4140, %v4141
  %v4143 = vsel %vm4070, %v3913, 0.0
  %v4144 = vadd.f32 %v4142, %v4143
  %v4145 = vsel %vm4070, %v3914, 0.0
  %v4146 = vadd.f32 %v4144, %v4145
  %v4147 = vsel %vm4070, %v3915, 0.0
  %v4148 = vadd.f32 %v4146, %v4147
  %v4149 = vsel %vm4070, %v3916, 0.0
  %v4150 = vadd.f32 %v4148, %v4149
  %v4151 = vsel %vm4070, %v3917, 0.0
  %v4152 = vadd.f32 %v4150, %v4151
  %v4153 = vsel %vm4070, %v3918, 0.0
  %v4154 = vadd.f32 %v4152, %v4153
  %v4155 = vrot.slane %v4154, 4
  %v4156 = vadd.f32 %v4154, %v4155
  %v4157 = vrot.slane %v4156, 2
  %v4158 = vadd.f32 %v4156, %v4157
  %v4159 = vrot.slane %v4158, 1
  %v4160 = vadd.f32 %v4158, %v4159
  %4162 = vrot.lane.b32.xlu0 %v4160, 96
  %v4163 = vpop.permute.xlu0 %4162
  %v4165 = vadd.f32 %v4160, %v4163
  %4167 = vrot.lane.b32.xlu0 %v4165, 112
  %v4168 = vpop.permute.xlu0 %4167
  %v4170 = vadd.f32 %v4165, %v4168
  %4172 = vrot.lane.b32.xlu0 %v4170, 120
  %v4173 = vpop.permute.xlu0 %4172
  %v4175 = vadd.f32 %v4170, %v4173
  %v4176 = vmul.f32 %v4175, 0.0009765625
  %v4177 = vmul.f32 %v4123, %v4123
  %v4178 = vsub.f32 %v4176, %v4177
  %v4179 = vmax.f32 %v4178, 0.0
  %v4180 = vadd.f32 %v4179, 1e-05
  %v4181 = vrsqrt.pop %v4180
  %4183 = vrot.lane.b32.xlu0 %v4181, 64
  %v4184 = vpop.permute.xlu0 %4183
  %v4186 = vmul.f32 %v4068, %v4184
  %4188 = vrot.lane.b32.xlu0 %v4186, 64
  %v4189 = vpop.permute.xlu0 %4188
  %v4191 = vmul.f32 %v4123, %v4189
  %4193 = vrot.lane.b32.xlu0 %v4191, 64
  %v4194 = vpop.permute.xlu0 %4193
  %v4196 = vsub.f32 %v4069, %v4194
  %4197 = vrot.lane.b32.xlu0 %v4186, 8
  %v4198 = vpop.permute.xlu0 %4197
  %v4200 = vsel %vm3984, %v4186, %v4198
  %4202 = vrot.lane.b32.xlu0 %v4200, 16
  %v4203 = vpop.permute.xlu0 %4202
  %v4205 = vsel %vm3990, %v4200, %v4203
  %4207 = vrot.lane.b32.xlu0 %v4205, 32
  %v4208 = vpop.permute.xlu0 %4207
  %v4210 = vsel %vm694, %v4205, %v4208
  %v4211 = vlaneseq
  %v4212 = vshrl.u32 %v4211, 7
  %v4213 = vsub.s32 0, %v4212
  %v4214 = vrot.slane %v4210, %v4213
  %4216 = vrot.lane.b32.xlu0 %v4214, 64
  %v4217 = vpop.permute.xlu0 %4216
  %v4219 = vmul.f32 %v3831, %v4217
  %v4220 = vmul.f32 %v3832, %v4217
  %v4221 = vmul.f32 %v3833, %v4217
  %v4222 = vmul.f32 %v3834, %v4217
  %v4223 = vmul.f32 %v3835, %v4217
  %v4224 = vmul.f32 %v3836, %v4217
  %v4225 = vmul.f32 %v3837, %v4217
  %v4226 = vmul.f32 %v3838, %v4217
  %v4227 = vmul.f32 %v3839, %v4217
  %v4228 = vmul.f32 %v3840, %v4217
  %v4229 = vmul.f32 %v3841, %v4217
  %v4230 = vmul.f32 %v3842, %v4217
  %v4231 = vmul.f32 %v3843, %v4217
  %v4232 = vmul.f32 %v3844, %v4217
  %v4233 = vmul.f32 %v3845, %v4217
  %v4234 = vmul.f32 %v3846, %v4217
  %4236 = vrot.lane.b32.xlu0 %v4196, 8
  %v4237 = vpop.permute.xlu0 %4236
  %v4239 = vsel %vm3984, %v4196, %v4237
  %4241 = vrot.lane.b32.xlu0 %v4239, 16
  %v4242 = vpop.permute.xlu0 %4241
  %v4244 = vsel %vm3990, %v4239, %v4242
  %4246 = vrot.lane.b32.xlu0 %v4244, 32
  %v4247 = vpop.permute.xlu0 %4246
  %v4249 = vsel %vm694, %v4244, %v4247
  %v4250 = vlaneseq
  %v4251 = vshrl.u32 %v4250, 7
  %v4252 = vsub.s32 0, %v4251
  %v4253 = vrot.slane %v4249, %v4252
  %4255 = vrot.lane.b32.xlu0 %v4253, 64
  %v4256 = vpop.permute.xlu0 %4255
  %v4258 = vadd.f32 %v4219, %v4256
  %v4259 = vadd.f32 %v4220, %v4256
  %v4260 = vadd.f32 %v4221, %v4256
  %v4261 = vadd.f32 %v4222, %v4256
  %v4262 = vadd.f32 %v4223, %v4256
  %v4263 = vadd.f32 %v4224, %v4256
  %v4264 = vadd.f32 %v4225, %v4256
  %v4265 = vadd.f32 %v4226, %v4256
  %v4266 = vadd.f32 %v4227, %v4256
  %v4267 = vadd.f32 %v4228, %v4256
  %v4268 = vadd.f32 %v4229, %v4256
  %v4269 = vadd.f32 %v4230, %v4256
  %v4270 = vadd.f32 %v4231, %v4256
  %v4271 = vadd.f32 %v4232, %v4256
  %v4272 = vadd.f32 %v4233, %v4256
  %v4273 = vadd.f32 %v4234, %v4256
  %v4274 = vpack.c.bf16 %v4053, %v4052
  %v4275 = vpack.c.bf16 %v4055, %v4054
  %v4276 = vpack.c.bf16 %v4057, %v4056
  %v4277 = vpack.c.bf16 %v4059, %v4058
  %v4278 = vpack.c.bf16 %v4061, %v4060
  %v4279 = vpack.c.bf16 %v4063, %v4062
  %v4280 = vpack.c.bf16 %v4065, %v4064
  %v4281 = vpack.c.bf16 %v4067, %v4066
  %v4283 = vshrl.u32 %v4274, 16
  %v4285 = vrot.slane %v4283, 3
  %v4286 = vshll.u32 %v4274, 16
  %v4288 = vrot.slane %v4286, 4
  %v4289 = vor.u32 %v4285, %v4288
  %v4291 = vshrl.u32 %v4275, 16
  %v4293 = vrot.slane %v4291, 3
  %v4294 = vshll.u32 %v4275, 16
  %v4296 = vrot.slane %v4294, 4
  %v4297 = vor.u32 %v4293, %v4296
  %v4298 = vsel %vm75, %v4289, %v4297
  %v4300 = vshrl.u32 %v4276, 16
  %v4302 = vrot.slane %v4300, 3
  %v4303 = vshll.u32 %v4276, 16
  %v4305 = vrot.slane %v4303, 4
  %v4306 = vor.u32 %v4302, %v4305
  %v4307 = vsel %vm75, %v4297, %v4306
  %v4309 = vshrl.u32 %v4277, 16
  %v4311 = vrot.slane %v4309, 3
  %v4312 = vshll.u32 %v4277, 16
  %v4314 = vrot.slane %v4312, 4
  %v4315 = vor.u32 %v4311, %v4314
  %v4316 = vsel %vm75, %v4306, %v4315
  %v4318 = vshrl.u32 %v4278, 16
  %v4320 = vrot.slane %v4318, 3
  %v4321 = vshll.u32 %v4278, 16
  %v4323 = vrot.slane %v4321, 4
  %v4324 = vor.u32 %v4320, %v4323
  %v4325 = vsel %vm75, %v4315, %v4324
  %v4327 = vshrl.u32 %v4279, 16
  %v4329 = vrot.slane %v4327, 3
  %v4330 = vshll.u32 %v4279, 16
  %v4332 = vrot.slane %v4330, 4
  %v4333 = vor.u32 %v4329, %v4332
  %v4334 = vsel %vm75, %v4324, %v4333
  %v4336 = vshrl.u32 %v4280, 16
  %v4338 = vrot.slane %v4336, 3
  %v4339 = vshll.u32 %v4280, 16
  %v4341 = vrot.slane %v4339, 4
  %v4342 = vor.u32 %v4338, %v4341
  %v4343 = vsel %vm75, %v4333, %v4342
  %v4345 = vshrl.u32 %v4281, 16
  %v4347 = vrot.slane %v4345, 3
  %v4348 = vshll.u32 %v4281, 16
  %v4350 = vrot.slane %v4348, 4
  %v4351 = vor.u32 %v4347, %v4350
  %v4352 = vsel %vm75, %v4342, %v4351
  %v4361 = vsel %vm156, 0, %v4289
  %v4362 = vmul.bf16 %v4361, %v398
  %v4363 = vmul.bf16 %v4298, %v399
  %v4364 = vmul.bf16 %v4307, %v400
  %v4365 = vmul.bf16 %v4316, %v401
  %v4366 = vmul.bf16 %v4325, %v402
  %v4367 = vmul.bf16 %v4334, %v403
  %v4368 = vmul.bf16 %v4343, %v404
  %v4369 = vmul.bf16 %v4352, %v405
  %v4370 = vld [vmem:[%s3] sm:$0xf]
  %v4371 = vld [vmem:[%s3 + $0x4] sm:$0xf]
  %v4372 = vld [vmem:[%s3 + $0x8] sm:$0xf]
  %v4373 = vld [vmem:[%s3 + $0xc] sm:$0xf]
  %v4374 = vld [vmem:[%s3 + $0x10] sm:$0xf]
  %v4375 = vld [vmem:[%s3 + $0x14] sm:$0xf]
  %v4376 = vld [vmem:[%s3 + $0x18] sm:$0xf]
  %v4377 = vld [vmem:[%s3 + $0x1c] sm:$0xf]
  %v4386 = vrot.slane %v4274, 4
  %v4387 = vrot.slane %v4275, 4
  %v4388 = vsel %vm997, %v4386, %v4387
  %v4389 = vrot.slane %v4276, 4
  %v4390 = vsel %vm997, %v4387, %v4389
  %v4391 = vrot.slane %v4277, 4
  %v4392 = vsel %vm997, %v4389, %v4391
  %v4393 = vrot.slane %v4278, 4
  %v4394 = vsel %vm997, %v4391, %v4393
  %v4395 = vrot.slane %v4279, 4
  %v4396 = vsel %vm997, %v4393, %v4395
  %v4397 = vrot.slane %v4280, 4
  %v4398 = vsel %vm997, %v4395, %v4397
  %v4399 = vrot.slane %v4281, 4
  %v4400 = vsel %vm997, %v4397, %v4399
  %v4409 = vsel %vm441, 0, %v4386
  %v4411 = vmul.bf16 %v4409, %v654
  %v4412 = vmul.bf16 %v4388, %v655
  %v4413 = vmul.bf16 %v4390, %v656
  %v4414 = vmul.bf16 %v4392, %v657
  %v4415 = vmul.bf16 %v4394, %v658
  %v4416 = vmul.bf16 %v4396, %v659
  %v4417 = vmul.bf16 %v4398, %v660
  %v4418 = vmul.bf16 %v4400, %v661
  %v4419 = vld [vmem:[%s3 + $0x20] sm:$0xf]
  %v4420 = vld [vmem:[%s3 + $0x24] sm:$0xf]
  %v4421 = vld [vmem:[%s3 + $0x28] sm:$0xf]
  %v4422 = vld [vmem:[%s3 + $0x2c] sm:$0xf]
  %v4423 = vld [vmem:[%s3 + $0x30] sm:$0xf]
  %v4424 = vld [vmem:[%s3 + $0x34] sm:$0xf]
  %v4425 = vld [vmem:[%s3 + $0x38] sm:$0xf]
  %v4426 = vld [vmem:[%s3 + $0x3c] sm:$0xf]
  %v4435 = vunpack.c.l.b16 %v4419
  %v4436 = vunpack.c.l.b16 %v4420
  %v4437 = vunpack.c.l.b16 %v4421
  %v4438 = vunpack.c.l.b16 %v4422
  %v4439 = vunpack.c.l.b16 %v4423
  %v4440 = vunpack.c.l.b16 %v4424
  %v4441 = vunpack.c.l.b16 %v4425
  %v4442 = vunpack.c.l.b16 %v4426
  %v4443 = vpack.c.b16 %v4436, %v4435
  %v4444 = vpack.c.b16 %v4438, %v4437
  %v4445 = vpack.c.b16 %v4440, %v4439
  %v4446 = vpack.c.b16 %v4442, %v4441
  %v4452 = vsel %vm3849, %v4411, 0
  %v4455 = vsel %vm3849, %v4412, 0
  %v4458 = vsel %vm3849, %v4413, 0
  %v4461 = vsel %vm3849, %v4414, 0
  %v4464 = vsel %vm3849, %v4415, 0
  %v4467 = vsel %vm3849, %v4416, 0
  %v4470 = vsel %vm3849, %v4417, 0
  %v4473 = vsel %vm3849, %v4418, 0
  %4475 = vmatprep.subr.bf16.mxu0 0
  %4476 = vmatpush1.bf16.msra.mxu0 %v4443
  %4477 = vmatprep.subr.bf16.mxu0 0
  %4478 = vmatpush1.bf16.msra.mxu0 %v4444
  %4479 = vmatprep.subr.bf16.mxu0 0
  %4480 = vmatpush1.bf16.msra.mxu0 %v4445
  %4481 = vmatprep.subr.bf16.mxu0 0
  %4482 = vmatpush1.bf16.msra.mxu0 %v4446
  %4483 = vmatprep.subr.bf16.mxu0 0
  %4484 = vmatpush1.bf16.msra.mxu0 0
  %4485 = vmatprep.subr.bf16.mxu0 0
  %4486 = vmatpush1.bf16.msra.mxu0 0
  %4487 = vmatprep.subr.bf16.mxu0 0
  %4488 = vmatpush1.bf16.msra.mxu0 0
  %4489 = vmatprep.subr.bf16.mxu0 0
  %4490 = vmatpush1.bf16.msra.mxu0 0
  %4491 = vmatprep.subr.bf16.mxu0 0
  %4492 = vmatpush1.bf16.msra.mxu0 0
  %4493 = vmatprep.subr.bf16.mxu0 0
  %4494 = vmatpush1.bf16.msra.mxu0 0
  %4495 = vmatprep.subr.bf16.mxu0 0
  %4496 = vmatpush1.bf16.msra.mxu0 0
  %4497 = vmatprep.subr.bf16.mxu0 0
  %4498 = vmatpush1.bf16.msra.mxu0 0
  %4499 = vmatprep.subr.bf16.mxu0 0
  %4500 = vmatpush1.bf16.msra.mxu0 0
  %4501 = vmatprep.subr.bf16.mxu0 0
  %4502 = vmatpush1.bf16.msra.mxu0 0
  %4503 = vmatprep.subr.bf16.mxu0 0
  %4504 = vmatpush1.bf16.msra.mxu0 0
  %4505 = vmatprep.subr.bf16.mxu0 0
  %4506 = vmatpush1.bf16.msra.mxu0 0
  %4507 = vmatprep.mubr.bf16.mxu0 0
  %4508 = vmatmul.mubr.bf16.gmra.mrb[0].mxu0 %v4452
  %v4509 = vpop.f32.mrb[0].mxu0
  %v4510 = vadd.f32 0.0, %v4509
  %v4511 = vpop.f32.mrb[0].mxu0
  %v4512 = vpop.f32.mrb[0].mxu0
  %v4513 = vadd.f32 0.0, %v4512
  %v4514 = vpop.f32.mrb[0].mxu0
  %4515 = vmatprep.mubr.bf16.mxu0 0
  %4516 = vmatmul.mubr.bf16.gmra.mrb[0].mxu0 %v4455
  %v4517 = vpop.f32.mrb[0].mxu0
  %v4518 = vadd.f32 0.0, %v4517
  %v4519 = vpop.f32.mrb[0].mxu0
  %v4520 = vpop.f32.mrb[0].mxu0
  %v4521 = vadd.f32 0.0, %v4520
  %v4522 = vpop.f32.mrb[0].mxu0
  %4523 = vmatprep.mubr.bf16.mxu0 0
  %4524 = vmatmul.mubr.bf16.gmra.mrb[0].mxu0 %v4458
  %v4525 = vpop.f32.mrb[0].mxu0
  %v4526 = vadd.f32 0.0, %v4525
  %v4527 = vpop.f32.mrb[0].mxu0
  %v4528 = vpop.f32.mrb[0].mxu0
  %v4529 = vadd.f32 0.0, %v4528
  %v4530 = vpop.f32.mrb[0].mxu0
  %4531 = vmatprep.mubr.bf16.mxu0 0
  %4532 = vmatmul.mubr.bf16.gmra.mrb[0].mxu0 %v4461
  %v4533 = vpop.f32.mrb[0].mxu0
  %v4534 = vadd.f32 0.0, %v4533
  %v4535 = vpop.f32.mrb[0].mxu0
  %v4536 = vpop.f32.mrb[0].mxu0
  %v4537 = vadd.f32 0.0, %v4536
  %v4538 = vpop.f32.mrb[0].mxu0
  %4539 = vmatprep.mubr.bf16.mxu0 0
  %4540 = vmatmul.mubr.bf16.gmra.mrb[0].mxu0 %v4464
  %v4541 = vpop.f32.mrb[0].mxu0
  %v4542 = vadd.f32 0.0, %v4541
  %v4543 = vpop.f32.mrb[0].mxu0
  %v4544 = vpop.f32.mrb[0].mxu0
  %v4545 = vadd.f32 0.0, %v4544
  %v4546 = vpop.f32.mrb[0].mxu0
  %4547 = vmatprep.mubr.bf16.mxu0 0
  %4548 = vmatmul.mubr.bf16.gmra.mrb[0].mxu0 %v4467
  %v4549 = vpop.f32.mrb[0].mxu0
  %v4550 = vadd.f32 0.0, %v4549
  %v4551 = vpop.f32.mrb[0].mxu0
  %v4552 = vpop.f32.mrb[0].mxu0
  %v4553 = vadd.f32 0.0, %v4552
  %v4554 = vpop.f32.mrb[0].mxu0
  %4555 = vmatprep.mubr.bf16.mxu0 0
  %4556 = vmatmul.mubr.bf16.gmra.mrb[0].mxu0 %v4470
  %v4557 = vpop.f32.mrb[0].mxu0
  %v4558 = vadd.f32 0.0, %v4557
  %v4559 = vpop.f32.mrb[0].mxu0
  %v4560 = vpop.f32.mrb[0].mxu0
  %v4561 = vadd.f32 0.0, %v4560
  %v4562 = vpop.f32.mrb[0].mxu0
  %4563 = vmatprep.mubr.bf16.mxu0 0
  %4564 = vmatmul.mubr.bf16.gmra.mrb[0].mxu0 %v4473
  %v4565 = vpop.f32.mrb[0].mxu0
  %v4566 = vadd.f32 0.0, %v4565
  %v4567 = vpop.f32.mrb[0].mxu0
  %v4568 = vpop.f32.mrb[0].mxu0
  %v4569 = vadd.f32 0.0, %v4568
  %v4570 = vpop.f32.mrb[0].mxu0
  %4571 = vdwg.mxu0
  %v4580 = vunpack.c.l.b16 %v4370
  %v4581 = vunpack.c.l.b16 %v4371
  %v4582 = vunpack.c.l.b16 %v4372
  %v4583 = vunpack.c.l.b16 %v4373
  %v4584 = vunpack.c.l.b16 %v4374
  %v4585 = vunpack.c.l.b16 %v4375
  %v4586 = vunpack.c.l.b16 %v4376
  %v4587 = vunpack.c.l.b16 %v4377
  %v4588 = vpack.c.b16 %v4581, %v4580
  %v4589 = vpack.c.b16 %v4583, %v4582
  %v4590 = vpack.c.b16 %v4585, %v4584
  %v4591 = vpack.c.b16 %v4587, %v4586
  %v4597 = vsel %vm3849, %v4362, 0
  %v4600 = vsel %vm3849, %v4363, 0
  %v4603 = vsel %vm3849, %v4364, 0
  %v4606 = vsel %vm3849, %v4365, 0
  %v4609 = vsel %vm3849, %v4366, 0
  %v4612 = vsel %vm3849, %v4367, 0
  %v4615 = vsel %vm3849, %v4368, 0
  %v4618 = vsel %vm3849, %v4369, 0
  %4620 = vmatprep.subr.bf16.mxu0 0
  %4621 = vmatpush1.bf16.msra.mxu0 %v4588
  %4622 = vmatprep.subr.bf16.mxu0 0
  %4623 = vmatpush1.bf16.msra.mxu0 %v4589
  %4624 = vmatprep.subr.bf16.mxu0 0
  %4625 = vmatpush1.bf16.msra.mxu0 %v4590
  %4626 = vmatprep.subr.bf16.mxu0 0
  %4627 = vmatpush1.bf16.msra.mxu0 %v4591
  %4628 = vmatprep.subr.bf16.mxu0 0
  %4629 = vmatpush1.bf16.msra.mxu0 0
  %4630 = vmatprep.subr.bf16.mxu0 0
  %4631 = vmatpush1.bf16.msra.mxu0 0
  %4632 = vmatprep.subr.bf16.mxu0 0
  %4633 = vmatpush1.bf16.msra.mxu0 0
  %4634 = vmatprep.subr.bf16.mxu0 0
  %4635 = vmatpush1.bf16.msra.mxu0 0
  %4636 = vmatprep.subr.bf16.mxu0 0
  %4637 = vmatpush1.bf16.msra.mxu0 0
  %4638 = vmatprep.subr.bf16.mxu0 0
  %4639 = vmatpush1.bf16.msra.mxu0 0
  %4640 = vmatprep.subr.bf16.mxu0 0
  %4641 = vmatpush1.bf16.msra.mxu0 0
  %4642 = vmatprep.subr.bf16.mxu0 0
  %4643 = vmatpush1.bf16.msra.mxu0 0
  %4644 = vmatprep.subr.bf16.mxu0 0
  %4645 = vmatpush1.bf16.msra.mxu0 0
  %4646 = vmatprep.subr.bf16.mxu0 0
  %4647 = vmatpush1.bf16.msra.mxu0 0
  %4648 = vmatprep.subr.bf16.mxu0 0
  %4649 = vmatpush1.bf16.msra.mxu0 0
  %4650 = vmatprep.subr.bf16.mxu0 0
  %4651 = vmatpush1.bf16.msra.mxu0 0
  %4652 = vmatprep.mubr.bf16.mxu0 0
  %4653 = vmatmul.mubr.bf16.gmra.mrb[0].mxu0 %v4597
  %v4654 = vpop.f32.mrb[0].mxu0
  %v4655 = vadd.f32 %v4510, %v4654
  %v4656 = vpop.f32.mrb[0].mxu0
  %v4657 = vpop.f32.mrb[0].mxu0
  %v4658 = vadd.f32 %v4513, %v4657
  %v4659 = vpop.f32.mrb[0].mxu0
  %4660 = vmatprep.mubr.bf16.mxu0 0
  %4661 = vmatmul.mubr.bf16.gmra.mrb[0].mxu0 %v4600
  %v4662 = vpop.f32.mrb[0].mxu0
  %v4663 = vadd.f32 %v4518, %v4662
  %v4664 = vpop.f32.mrb[0].mxu0
  %v4665 = vpop.f32.mrb[0].mxu0
  %v4666 = vadd.f32 %v4521, %v4665
  %v4667 = vpop.f32.mrb[0].mxu0
  %4668 = vmatprep.mubr.bf16.mxu0 0
  %4669 = vmatmul.mubr.bf16.gmra.mrb[0].mxu0 %v4603
  %v4670 = vpop.f32.mrb[0].mxu0
  %v4671 = vadd.f32 %v4526, %v4670
  %v4672 = vpop.f32.mrb[0].mxu0
  %v4673 = vpop.f32.mrb[0].mxu0
  %v4674 = vadd.f32 %v4529, %v4673
  %v4675 = vpop.f32.mrb[0].mxu0
  %4676 = vmatprep.mubr.bf16.mxu0 0
  %4677 = vmatmul.mubr.bf16.gmra.mrb[0].mxu0 %v4606
  %v4678 = vpop.f32.mrb[0].mxu0
  %v4679 = vadd.f32 %v4534, %v4678
  %v4680 = vpop.f32.mrb[0].mxu0
  %v4681 = vpop.f32.mrb[0].mxu0
  %v4682 = vadd.f32 %v4537, %v4681
  %v4683 = vpop.f32.mrb[0].mxu0
  %4684 = vmatprep.mubr.bf16.mxu0 0
  %4685 = vmatmul.mubr.bf16.gmra.mrb[0].mxu0 %v4609
  %v4686 = vpop.f32.mrb[0].mxu0
  %v4687 = vadd.f32 %v4542, %v4686
  %v4688 = vpop.f32.mrb[0].mxu0
  %v4689 = vpop.f32.mrb[0].mxu0
  %v4690 = vadd.f32 %v4545, %v4689
  %v4691 = vpop.f32.mrb[0].mxu0
  %4692 = vmatprep.mubr.bf16.mxu0 0
  %4693 = vmatmul.mubr.bf16.gmra.mrb[0].mxu0 %v4612
  %v4694 = vpop.f32.mrb[0].mxu0
  %v4695 = vadd.f32 %v4550, %v4694
  %v4696 = vpop.f32.mrb[0].mxu0
  %v4697 = vpop.f32.mrb[0].mxu0
  %v4698 = vadd.f32 %v4553, %v4697
  %v4699 = vpop.f32.mrb[0].mxu0
  %4700 = vmatprep.mubr.bf16.mxu0 0
  %4701 = vmatmul.mubr.bf16.gmra.mrb[0].mxu0 %v4615
  %v4702 = vpop.f32.mrb[0].mxu0
  %v4703 = vadd.f32 %v4558, %v4702
  %v4704 = vpop.f32.mrb[0].mxu0
  %v4705 = vpop.f32.mrb[0].mxu0
  %v4706 = vadd.f32 %v4561, %v4705
  %v4707 = vpop.f32.mrb[0].mxu0
  %4708 = vmatprep.mubr.bf16.mxu0 0
  %4709 = vmatmul.mubr.bf16.gmra.mrb[0].mxu0 %v4618
  %v4710 = vpop.f32.mrb[0].mxu0
  %v4711 = vadd.f32 %v4566, %v4710
  %v4712 = vpop.f32.mrb[0].mxu0
  %v4713 = vpop.f32.mrb[0].mxu0
  %v4714 = vadd.f32 %v4569, %v4713
  %v4715 = vpop.f32.mrb[0].mxu0
  %4716 = vdwg.mxu0
  %v4717 = vrot.slane %v4283, 4
  %v4718 = vrot.slane %v4286, 5
  %v4719 = vor.u32 %v4717, %v4718
  %v4720 = vrot.slane %v4291, 4
  %v4721 = vrot.slane %v4294, 5
  %v4722 = vor.u32 %v4720, %v4721
  %v4723 = vsel %vm952, %v4719, %v4722
  %v4724 = vrot.slane %v4300, 4
  %v4725 = vrot.slane %v4303, 5
  %v4726 = vor.u32 %v4724, %v4725
  %v4727 = vsel %vm952, %v4722, %v4726
  %v4728 = vrot.slane %v4309, 4
  %v4729 = vrot.slane %v4312, 5
  %v4730 = vor.u32 %v4728, %v4729
  %v4731 = vsel %vm952, %v4726, %v4730
  %v4732 = vrot.slane %v4318, 4
  %v4733 = vrot.slane %v4321, 5
  %v4734 = vor.u32 %v4732, %v4733
  %v4735 = vsel %vm952, %v4730, %v4734
  %v4736 = vrot.slane %v4327, 4
  %v4737 = vrot.slane %v4330, 5
  %v4738 = vor.u32 %v4736, %v4737
  %v4739 = vsel %vm952, %v4734, %v4738
  %v4740 = vrot.slane %v4336, 4
  %v4741 = vrot.slane %v4339, 5
  %v4742 = vor.u32 %v4740, %v4741
  %v4743 = vsel %vm952, %v4738, %v4742
  %v4744 = vrot.slane %v4345, 4
  %v4745 = vrot.slane %v4348, 5
  %v4746 = vor.u32 %v4744, %v4745
  %v4747 = vsel %vm952, %v4742, %v4746
  %v4756 = vsel %vm998, 0, %v4719
  %v4757 = vmul.bf16 %v4756, %v1208
  %v4758 = vmul.bf16 %v4723, %v1209
  %v4759 = vmul.bf16 %v4727, %v1210
  %v4760 = vmul.bf16 %v4731, %v1211
  %v4761 = vmul.bf16 %v4735, %v1212
  %v4762 = vmul.bf16 %v4739, %v1213
  %v4763 = vmul.bf16 %v4743, %v1214
  %v4764 = vmul.bf16 %v4747, %v1215
  %v4765 = vld [vmem:[%s3 + $0x40] sm:$0xf]
  %v4766 = vld [vmem:[%s3 + $0x44] sm:$0xf]
  %v4767 = vld [vmem:[%s3 + $0x48] sm:$0xf]
  %v4768 = vld [vmem:[%s3 + $0x4c] sm:$0xf]
  %v4769 = vld [vmem:[%s3 + $0x50] sm:$0xf]
  %v4770 = vld [vmem:[%s3 + $0x54] sm:$0xf]
  %v4771 = vld [vmem:[%s3 + $0x58] sm:$0xf]
  %v4772 = vld [vmem:[%s3 + $0x5c] sm:$0xf]
  %v4781 = vunpack.c.l.b16 %v4765
  %v4782 = vunpack.c.l.b16 %v4766
  %v4783 = vunpack.c.l.b16 %v4767
  %v4784 = vunpack.c.l.b16 %v4768
  %v4785 = vunpack.c.l.b16 %v4769
  %v4786 = vunpack.c.l.b16 %v4770
  %v4787 = vunpack.c.l.b16 %v4771
  %v4788 = vunpack.c.l.b16 %v4772
  %v4789 = vpack.c.b16 %v4782, %v4781
  %v4790 = vpack.c.b16 %v4784, %v4783
  %v4791 = vpack.c.b16 %v4786, %v4785
  %v4792 = vpack.c.b16 %v4788, %v4787
  %v4798 = vsel %vm3849, %v4757, 0
  %v4801 = vsel %vm3849, %v4758, 0
  %v4804 = vsel %vm3849, %v4759, 0
  %v4807 = vsel %vm3849, %v4760, 0
  %v4810 = vsel %vm3849, %v4761, 0
  %v4813 = vsel %vm3849, %v4762, 0
  %v4816 = vsel %vm3849, %v4763, 0
  %v4819 = vsel %vm3849, %v4764, 0
  %4821 = vmatprep.subr.bf16.mxu0 0
  %4822 = vmatpush1.bf16.msra.mxu0 %v4789
  %4823 = vmatprep.subr.bf16.mxu0 0
  %4824 = vmatpush1.bf16.msra.mxu0 %v4790
  %4825 = vmatprep.subr.bf16.mxu0 0
  %4826 = vmatpush1.bf16.msra.mxu0 %v4791
  %4827 = vmatprep.subr.bf16.mxu0 0
  %4828 = vmatpush1.bf16.msra.mxu0 %v4792
  %4829 = vmatprep.subr.bf16.mxu0 0
  %4830 = vmatpush1.bf16.msra.mxu0 0
  %4831 = vmatprep.subr.bf16.mxu0 0
  %4832 = vmatpush1.bf16.msra.mxu0 0
  %4833 = vmatprep.subr.bf16.mxu0 0
  %4834 = vmatpush1.bf16.msra.mxu0 0
  %4835 = vmatprep.subr.bf16.mxu0 0
  %4836 = vmatpush1.bf16.msra.mxu0 0
  %4837 = vmatprep.subr.bf16.mxu0 0
  %4838 = vmatpush1.bf16.msra.mxu0 0
  %4839 = vmatprep.subr.bf16.mxu0 0
  %4840 = vmatpush1.bf16.msra.mxu0 0
  %4841 = vmatprep.subr.bf16.mxu0 0
  %4842 = vmatpush1.bf16.msra.mxu0 0
  %4843 = vmatprep.subr.bf16.mxu0 0
  %4844 = vmatpush1.bf16.msra.mxu0 0
  %4845 = vmatprep.subr.bf16.mxu0 0
  %4846 = vmatpush1.bf16.msra.mxu0 0
  %4847 = vmatprep.subr.bf16.mxu0 0
  %4848 = vmatpush1.bf16.msra.mxu0 0
  %4849 = vmatprep.subr.bf16.mxu0 0
  %4850 = vmatpush1.bf16.msra.mxu0 0
  %4851 = vmatprep.subr.bf16.mxu0 0
  %4852 = vmatpush1.bf16.msra.mxu0 0
  %4853 = vmatprep.mubr.bf16.mxu0 0
  %4854 = vmatmul.mubr.bf16.gmra.mrb[0].mxu0 %v4798
  %v4855 = vpop.f32.mrb[0].mxu0
  %v4856 = vadd.f32 0.0, %v4855
  %v4857 = vpop.f32.mrb[0].mxu0
  %v4858 = vpop.f32.mrb[0].mxu0
  %v4859 = vadd.f32 0.0, %v4858
  %v4860 = vpop.f32.mrb[0].mxu0
  %4861 = vmatprep.mubr.bf16.mxu0 0
  %4862 = vmatmul.mubr.bf16.gmra.mrb[0].mxu0 %v4801
  %v4863 = vpop.f32.mrb[0].mxu0
  %v4864 = vadd.f32 0.0, %v4863
  %v4865 = vpop.f32.mrb[0].mxu0
  %v4866 = vpop.f32.mrb[0].mxu0
  %v4867 = vadd.f32 0.0, %v4866
  %v4868 = vpop.f32.mrb[0].mxu0
  %4869 = vmatprep.mubr.bf16.mxu0 0
  %4870 = vmatmul.mubr.bf16.gmra.mrb[0].mxu0 %v4804
  %v4871 = vpop.f32.mrb[0].mxu0
  %v4872 = vadd.f32 0.0, %v4871
  %v4873 = vpop.f32.mrb[0].mxu0
  %v4874 = vpop.f32.mrb[0].mxu0
  %v4875 = vadd.f32 0.0, %v4874
  %v4876 = vpop.f32.mrb[0].mxu0
  %4877 = vmatprep.mubr.bf16.mxu0 0
  %4878 = vmatmul.mubr.bf16.gmra.mrb[0].mxu0 %v4807
  %v4879 = vpop.f32.mrb[0].mxu0
  %v4880 = vadd.f32 0.0, %v4879
  %v4881 = vpop.f32.mrb[0].mxu0
  %v4882 = vpop.f32.mrb[0].mxu0
  %v4883 = vadd.f32 0.0, %v4882
  %v4884 = vpop.f32.mrb[0].mxu0
  %4885 = vmatprep.mubr.bf16.mxu0 0
  %4886 = vmatmul.mubr.bf16.gmra.mrb[0].mxu0 %v4810
  %v4887 = vpop.f32.mrb[0].mxu0
  %v4888 = vadd.f32 0.0, %v4887
  %v4889 = vpop.f32.mrb[0].mxu0
  %v4890 = vpop.f32.mrb[0].mxu0
  %v4891 = vadd.f32 0.0, %v4890
  %v4892 = vpop.f32.mrb[0].mxu0
  %4893 = vmatprep.mubr.bf16.mxu0 0
  %4894 = vmatmul.mubr.bf16.gmra.mrb[0].mxu0 %v4813
  %v4895 = vpop.f32.mrb[0].mxu0
  %v4896 = vadd.f32 0.0, %v4895
  %v4897 = vpop.f32.mrb[0].mxu0
  %v4898 = vpop.f32.mrb[0].mxu0
  %v4899 = vadd.f32 0.0, %v4898
  %v4900 = vpop.f32.mrb[0].mxu0
  %4901 = vmatprep.mubr.bf16.mxu0 0
  %4902 = vmatmul.mubr.bf16.gmra.mrb[0].mxu0 %v4816
  %v4903 = vpop.f32.mrb[0].mxu0
  %v4904 = vadd.f32 0.0, %v4903
  %v4905 = vpop.f32.mrb[0].mxu0
  %v4906 = vpop.f32.mrb[0].mxu0
  %v4907 = vadd.f32 0.0, %v4906
  %v4908 = vpop.f32.mrb[0].mxu0
  %4909 = vmatprep.mubr.bf16.mxu0 0
  %4910 = vmatmul.mubr.bf16.gmra.mrb[0].mxu0 %v4819
  %v4911 = vpop.f32.mrb[0].mxu0
  %v4912 = vadd.f32 0.0, %v4911
  %v4913 = vpop.f32.mrb[0].mxu0
  %v4914 = vpop.f32.mrb[0].mxu0
  %v4915 = vadd.f32 0.0, %v4914
  %v4916 = vpop.f32.mrb[0].mxu0
  %4917 = vdwg.mxu0
  %v4918 = vadd.f32 %v4655, %v4856
  %v4919 = vadd.f32 %v4658, %v4859
  %v4920 = vadd.f32 %v4663, %v4864
  %v4921 = vadd.f32 %v4666, %v4867
  %v4922 = vadd.f32 %v4671, %v4872
  %v4923 = vadd.f32 %v4674, %v4875
  %v4924 = vadd.f32 %v4679, %v4880
  %v4925 = vadd.f32 %v4682, %v4883
  %v4926 = vadd.f32 %v4687, %v4888
  %v4927 = vadd.f32 %v4690, %v4891
  %v4928 = vadd.f32 %v4695, %v4896
  %v4929 = vadd.f32 %v4698, %v4899
  %v4930 = vadd.f32 %v4703, %v4904
  %v4931 = vadd.f32 %v4706, %v4907
  %v4932 = vadd.f32 %v4711, %v4912
  %v4933 = vadd.f32 %v4714, %v4915
  %v4934 = vrot.slane %v4283, 7
  %v4935 = vor.u32 %v4934, %v4286
  %v4936 = vrot.slane %v4291, 7
  %v4937 = vor.u32 %v4936, %v4294
  %v4938 = vsel %vm1385, %v4934, %v4937
  %v4939 = vrot.slane %v4300, 7
  %v4940 = vor.u32 %v4939, %v4303
  %v4941 = vsel %vm1385, %v4936, %v4940
  %v4942 = vrot.slane %v4309, 7
  %v4943 = vor.u32 %v4942, %v4312
  %v4944 = vsel %vm1385, %v4939, %v4943
  %v4945 = vrot.slane %v4318, 7
  %v4946 = vor.u32 %v4945, %v4321
  %v4947 = vsel %vm1385, %v4942, %v4946
  %v4948 = vrot.slane %v4327, 7
  %v4949 = vor.u32 %v4948, %v4330
  %v4950 = vsel %vm1385, %v4945, %v4949
  %v4951 = vrot.slane %v4336, 7
  %v4952 = vor.u32 %v4951, %v4339
  %v4953 = vsel %vm1385, %v4948, %v4952
  %v4954 = vrot.slane %v4345, 7
  %v4955 = vor.u32 %v4954, %v4348
  %v4956 = vsel %vm1385, %v4951, %v4955
  %v4965 = vsel %vm1418, 0, %v4935
  %v4966 = vmul.bf16 %v4965, %v1628
  %v4967 = vmul.bf16 %v4938, %v1629
  %v4968 = vmul.bf16 %v4941, %v1630
  %v4969 = vmul.bf16 %v4944, %v1631
  %v4970 = vmul.bf16 %v4947, %v1632
  %v4971 = vmul.bf16 %v4950, %v1633
  %v4972 = vmul.bf16 %v4953, %v1634
  %v4973 = vmul.bf16 %v4956, %v1635
  %v4974 = vld [vmem:[%s3 + $0x60] sm:$0xf]
  %v4975 = vld [vmem:[%s3 + $0x64] sm:$0xf]
  %v4976 = vld [vmem:[%s3 + $0x68] sm:$0xf]
  %v4977 = vld [vmem:[%s3 + $0x6c] sm:$0xf]
  %v4978 = vld [vmem:[%s3 + $0x70] sm:$0xf]
  %v4979 = vld [vmem:[%s3 + $0x74] sm:$0xf]
  %v4980 = vld [vmem:[%s3 + $0x78] sm:$0xf]
  %v4981 = vld [vmem:[%s3 + $0x7c] sm:$0xf]
  %v4990 = vunpack.c.l.b16 %v4974
  %v4991 = vunpack.c.l.b16 %v4975
  %v4992 = vunpack.c.l.b16 %v4976
  %v4993 = vunpack.c.l.b16 %v4977
  %v4994 = vunpack.c.l.b16 %v4978
  %v4995 = vunpack.c.l.b16 %v4979
  %v4996 = vunpack.c.l.b16 %v4980
  %v4997 = vunpack.c.l.b16 %v4981
  %v4998 = vpack.c.b16 %v4991, %v4990
  %v4999 = vpack.c.b16 %v4993, %v4992
  %v5000 = vpack.c.b16 %v4995, %v4994
  %v5001 = vpack.c.b16 %v4997, %v4996
  %v5007 = vsel %vm3849, %v4966, 0
  %v5010 = vsel %vm3849, %v4967, 0
  %v5013 = vsel %vm3849, %v4968, 0
  %v5016 = vsel %vm3849, %v4969, 0
  %v5019 = vsel %vm3849, %v4970, 0
  %v5022 = vsel %vm3849, %v4971, 0
  %v5025 = vsel %vm3849, %v4972, 0
  %v5028 = vsel %vm3849, %v4973, 0
  %5030 = vmatprep.subr.bf16.mxu0 0
  %5031 = vmatpush1.bf16.msra.mxu0 %v4998
  %5032 = vmatprep.subr.bf16.mxu0 0
  %5033 = vmatpush1.bf16.msra.mxu0 %v4999
  %5034 = vmatprep.subr.bf16.mxu0 0
  %5035 = vmatpush1.bf16.msra.mxu0 %v5000
  %5036 = vmatprep.subr.bf16.mxu0 0
  %5037 = vmatpush1.bf16.msra.mxu0 %v5001
  %5038 = vmatprep.subr.bf16.mxu0 0
  %5039 = vmatpush1.bf16.msra.mxu0 0
  %5040 = vmatprep.subr.bf16.mxu0 0
  %5041 = vmatpush1.bf16.msra.mxu0 0
  %5042 = vmatprep.subr.bf16.mxu0 0
  %5043 = vmatpush1.bf16.msra.mxu0 0
  %5044 = vmatprep.subr.bf16.mxu0 0
  %5045 = vmatpush1.bf16.msra.mxu0 0
  %5046 = vmatprep.subr.bf16.mxu0 0
  %5047 = vmatpush1.bf16.msra.mxu0 0
  %5048 = vmatprep.subr.bf16.mxu0 0
  %5049 = vmatpush1.bf16.msra.mxu0 0
  %5050 = vmatprep.subr.bf16.mxu0 0
  %5051 = vmatpush1.bf16.msra.mxu0 0
  %5052 = vmatprep.subr.bf16.mxu0 0
  %5053 = vmatpush1.bf16.msra.mxu0 0
  %5054 = vmatprep.subr.bf16.mxu0 0
  %5055 = vmatpush1.bf16.msra.mxu0 0
  %5056 = vmatprep.subr.bf16.mxu0 0
  %5057 = vmatpush1.bf16.msra.mxu0 0
  %5058 = vmatprep.subr.bf16.mxu0 0
  %5059 = vmatpush1.bf16.msra.mxu0 0
  %5060 = vmatprep.subr.bf16.mxu0 0
  %5061 = vmatpush1.bf16.msra.mxu0 0
  %5062 = vmatprep.mubr.bf16.mxu0 0
  %5063 = vmatmul.mubr.bf16.gmra.mrb[0].mxu0 %v5007
  %v5064 = vpop.f32.mrb[0].mxu0
  %v5065 = vadd.f32 0.0, %v5064
  %v5066 = vpop.f32.mrb[0].mxu0
  %v5067 = vpop.f32.mrb[0].mxu0
  %v5068 = vadd.f32 0.0, %v5067
  %v5069 = vpop.f32.mrb[0].mxu0
  %5070 = vmatprep.mubr.bf16.mxu0 0
  %5071 = vmatmul.mubr.bf16.gmra.mrb[0].mxu0 %v5010
  %v5072 = vpop.f32.mrb[0].mxu0
  %v5073 = vadd.f32 0.0, %v5072
  %v5074 = vpop.f32.mrb[0].mxu0
  %v5075 = vpop.f32.mrb[0].mxu0
  %v5076 = vadd.f32 0.0, %v5075
  %v5077 = vpop.f32.mrb[0].mxu0
  %5078 = vmatprep.mubr.bf16.mxu0 0
  %5079 = vmatmul.mubr.bf16.gmra.mrb[0].mxu0 %v5013
  %v5080 = vpop.f32.mrb[0].mxu0
  %v5081 = vadd.f32 0.0, %v5080
  %v5082 = vpop.f32.mrb[0].mxu0
  %v5083 = vpop.f32.mrb[0].mxu0
  %v5084 = vadd.f32 0.0, %v5083
  %v5085 = vpop.f32.mrb[0].mxu0
  %5086 = vmatprep.mubr.bf16.mxu0 0
  %5087 = vmatmul.mubr.bf16.gmra.mrb[0].mxu0 %v5016
  %v5088 = vpop.f32.mrb[0].mxu0
  %v5089 = vadd.f32 0.0, %v5088
  %v5090 = vpop.f32.mrb[0].mxu0
  %v5091 = vpop.f32.mrb[0].mxu0
  %v5092 = vadd.f32 0.0, %v5091
  %v5093 = vpop.f32.mrb[0].mxu0
  %5094 = vmatprep.mubr.bf16.mxu0 0
  %5095 = vmatmul.mubr.bf16.gmra.mrb[0].mxu0 %v5019
  %v5096 = vpop.f32.mrb[0].mxu0
  %v5097 = vadd.f32 0.0, %v5096
  %v5098 = vpop.f32.mrb[0].mxu0
  %v5099 = vpop.f32.mrb[0].mxu0
  %v5100 = vadd.f32 0.0, %v5099
  %v5101 = vpop.f32.mrb[0].mxu0
  %5102 = vmatprep.mubr.bf16.mxu0 0
  %5103 = vmatmul.mubr.bf16.gmra.mrb[0].mxu0 %v5022
  %v5104 = vpop.f32.mrb[0].mxu0
  %v5105 = vadd.f32 0.0, %v5104
  %v5106 = vpop.f32.mrb[0].mxu0
  %v5107 = vpop.f32.mrb[0].mxu0
  %v5108 = vadd.f32 0.0, %v5107
  %v5109 = vpop.f32.mrb[0].mxu0
  %5110 = vmatprep.mubr.bf16.mxu0 0
  %5111 = vmatmul.mubr.bf16.gmra.mrb[0].mxu0 %v5025
  %v5112 = vpop.f32.mrb[0].mxu0
  %v5113 = vadd.f32 0.0, %v5112
  %v5114 = vpop.f32.mrb[0].mxu0
  %v5115 = vpop.f32.mrb[0].mxu0
  %v5116 = vadd.f32 0.0, %v5115
  %v5117 = vpop.f32.mrb[0].mxu0
  %5118 = vmatprep.mubr.bf16.mxu0 0
  %5119 = vmatmul.mubr.bf16.gmra.mrb[0].mxu0 %v5028
  %v5120 = vpop.f32.mrb[0].mxu0
  %v5121 = vadd.f32 0.0, %v5120
  %v5122 = vpop.f32.mrb[0].mxu0
  %v5123 = vpop.f32.mrb[0].mxu0
  %v5124 = vadd.f32 0.0, %v5123
  %v5125 = vpop.f32.mrb[0].mxu0
  %5126 = vdwg.mxu0
  %v5127 = vadd.f32 %v4918, %v5065
  %v5128 = vadd.f32 %v4919, %v5068
  %v5129 = vadd.f32 %v4920, %v5073
  %v5130 = vadd.f32 %v4921, %v5076
  %v5131 = vadd.f32 %v4922, %v5081
  %v5132 = vadd.f32 %v4923, %v5084
  %v5133 = vadd.f32 %v4924, %v5089
  %v5134 = vadd.f32 %v4925, %v5092
  %v5135 = vadd.f32 %v4926, %v5097
  %v5136 = vadd.f32 %v4927, %v5100
  %v5137 = vadd.f32 %v4928, %v5105
  %v5138 = vadd.f32 %v4929, %v5108
  %v5139 = vadd.f32 %v4930, %v5113
  %v5140 = vadd.f32 %v4931, %v5116
  %v5141 = vadd.f32 %v4932, %v5121
  %v5142 = vadd.f32 %v4933, %v5124
  %v5159 = vunpack.c.l.b16 %v1815
  %v5160 = vunpack.c.l.b16 %v1826
  %v5161 = vunpack.c.l.b16 %v1837
  %v5162 = vunpack.c.l.b16 %v1848
  %v5163 = vunpack.c.l.b16 %v1859
  %v5164 = vunpack.c.l.b16 %v1870
  %v5165 = vunpack.c.l.b16 %v1881
  %v5166 = vunpack.c.l.b16 %v1892
  %v5167 = vunpack.c.l.b16 %v1903
  %v5168 = vunpack.c.l.b16 %v1914
  %v5169 = vunpack.c.l.b16 %v1925
  %v5170 = vunpack.c.l.b16 %v1936
  %v5171 = vunpack.c.l.b16 %v1947
  %v5172 = vunpack.c.l.b16 %v1958
  %v5173 = vunpack.c.l.b16 %v1969
  %v5174 = vunpack.c.l.b16 %v1980
  %v5175 = vpack.c.b16 %v5160, %v5159
  %v5176 = vpack.c.b16 %v5162, %v5161
  %v5177 = vpack.c.b16 %v5164, %v5163
  %v5178 = vpack.c.b16 %v5166, %v5165
  %v5179 = vpack.c.b16 %v5168, %v5167
  %v5180 = vpack.c.b16 %v5170, %v5169
  %v5181 = vpack.c.b16 %v5172, %v5171
  %v5182 = vpack.c.b16 %v5174, %v5173
  %v5191 = vmul.bf16 %v4274, %v5175
  %v5192 = vmul.bf16 %v4275, %v5176
  %v5193 = vmul.bf16 %v4276, %v5177
  %v5194 = vmul.bf16 %v4277, %v5178
  %v5195 = vmul.bf16 %v4278, %v5179
  %v5196 = vmul.bf16 %v4279, %v5180
  %v5197 = vmul.bf16 %v4280, %v5181
  %v5198 = vmul.bf16 %v4281, %v5182
  %v5199 = vld [vmem:[%s3 + $0x80] sm:$0xf]
  %v5200 = vld [vmem:[%s3 + $0x84] sm:$0xf]
  %v5201 = vld [vmem:[%s3 + $0x88] sm:$0xf]
  %v5202 = vld [vmem:[%s3 + $0x8c] sm:$0xf]
  %v5203 = vld [vmem:[%s3 + $0x90] sm:$0xf]
  %v5204 = vld [vmem:[%s3 + $0x94] sm:$0xf]
  %v5205 = vld [vmem:[%s3 + $0x98] sm:$0xf]
  %v5206 = vld [vmem:[%s3 + $0x9c] sm:$0xf]
  %v5215 = vunpack.c.l.b16 %v5199
  %v5216 = vunpack.c.l.b16 %v5200
  %v5217 = vunpack.c.l.b16 %v5201
  %v5218 = vunpack.c.l.b16 %v5202
  %v5219 = vunpack.c.l.b16 %v5203
  %v5220 = vunpack.c.l.b16 %v5204
  %v5221 = vunpack.c.l.b16 %v5205
  %v5222 = vunpack.c.l.b16 %v5206
  %v5223 = vpack.c.b16 %v5216, %v5215
  %v5224 = vpack.c.b16 %v5218, %v5217
  %v5225 = vpack.c.b16 %v5220, %v5219
  %v5226 = vpack.c.b16 %v5222, %v5221
  %v5232 = vsel %vm3849, %v5191, 0
  %v5235 = vsel %vm3849, %v5192, 0
  %v5238 = vsel %vm3849, %v5193, 0
  %v5241 = vsel %vm3849, %v5194, 0
  %v5244 = vsel %vm3849, %v5195, 0
  %v5247 = vsel %vm3849, %v5196, 0
  %v5250 = vsel %vm3849, %v5197, 0
  %v5253 = vsel %vm3849, %v5198, 0
  %5255 = vmatprep.subr.bf16.mxu0 0
  %5256 = vmatpush1.bf16.msra.mxu0 %v5223
  %5257 = vmatprep.subr.bf16.mxu0 0
  %5258 = vmatpush1.bf16.msra.mxu0 %v5224
  %5259 = vmatprep.subr.bf16.mxu0 0
  %5260 = vmatpush1.bf16.msra.mxu0 %v5225
  %5261 = vmatprep.subr.bf16.mxu0 0
  %5262 = vmatpush1.bf16.msra.mxu0 %v5226
  %5263 = vmatprep.subr.bf16.mxu0 0
  %5264 = vmatpush1.bf16.msra.mxu0 0
  %5265 = vmatprep.subr.bf16.mxu0 0
  %5266 = vmatpush1.bf16.msra.mxu0 0
  %5267 = vmatprep.subr.bf16.mxu0 0
  %5268 = vmatpush1.bf16.msra.mxu0 0
  %5269 = vmatprep.subr.bf16.mxu0 0
  %5270 = vmatpush1.bf16.msra.mxu0 0
  %5271 = vmatprep.subr.bf16.mxu0 0
  %5272 = vmatpush1.bf16.msra.mxu0 0
  %5273 = vmatprep.subr.bf16.mxu0 0
  %5274 = vmatpush1.bf16.msra.mxu0 0
  %5275 = vmatprep.subr.bf16.mxu0 0
  %5276 = vmatpush1.bf16.msra.mxu0 0
  %5277 = vmatprep.subr.bf16.mxu0 0
  %5278 = vmatpush1.bf16.msra.mxu0 0
  %5279 = vmatprep.subr.bf16.mxu0 0
  %5280 = vmatpush1.bf16.msra.mxu0 0
  %5281 = vmatprep.subr.bf16.mxu0 0
  %5282 = vmatpush1.bf16.msra.mxu0 0
  %5283 = vmatprep.subr.bf16.mxu0 0
  %5284 = vmatpush1.bf16.msra.mxu0 0
  %5285 = vmatprep.subr.bf16.mxu0 0
  %5286 = vmatpush1.bf16.msra.mxu0 0
  %5287 = vmatprep.mubr.bf16.mxu0 0
  %5288 = vmatmul.mubr.bf16.gmra.mrb[0].mxu0 %v5232
  %v5289 = vpop.f32.mrb[0].mxu0
  %v5290 = vadd.f32 0.0, %v5289
  %v5291 = vpop.f32.mrb[0].mxu0
  %v5292 = vpop.f32.mrb[0].mxu0
  %v5293 = vadd.f32 0.0, %v5292
  %v5294 = vpop.f32.mrb[0].mxu0
  %5295 = vmatprep.mubr.bf16.mxu0 0
  %5296 = vmatmul.mubr.bf16.gmra.mrb[0].mxu0 %v5235
  %v5297 = vpop.f32.mrb[0].mxu0
  %v5298 = vadd.f32 0.0, %v5297
  %v5299 = vpop.f32.mrb[0].mxu0
  %v5300 = vpop.f32.mrb[0].mxu0
  %v5301 = vadd.f32 0.0, %v5300
  %v5302 = vpop.f32.mrb[0].mxu0
  %5303 = vmatprep.mubr.bf16.mxu0 0
  %5304 = vmatmul.mubr.bf16.gmra.mrb[0].mxu0 %v5238
  %v5305 = vpop.f32.mrb[0].mxu0
  %v5306 = vadd.f32 0.0, %v5305
  %v5307 = vpop.f32.mrb[0].mxu0
  %v5308 = vpop.f32.mrb[0].mxu0
  %v5309 = vadd.f32 0.0, %v5308
  %v5310 = vpop.f32.mrb[0].mxu0
  %5311 = vmatprep.mubr.bf16.mxu0 0
  %5312 = vmatmul.mubr.bf16.gmra.mrb[0].mxu0 %v5241
  %v5313 = vpop.f32.mrb[0].mxu0
  %v5314 = vadd.f32 0.0, %v5313
  %v5315 = vpop.f32.mrb[0].mxu0
  %v5316 = vpop.f32.mrb[0].mxu0
  %v5317 = vadd.f32 0.0, %v5316
  %v5318 = vpop.f32.mrb[0].mxu0
  %5319 = vmatprep.mubr.bf16.mxu0 0
  %5320 = vmatmul.mubr.bf16.gmra.mrb[0].mxu0 %v5244
  %v5321 = vpop.f32.mrb[0].mxu0
  %v5322 = vadd.f32 0.0, %v5321
  %v5323 = vpop.f32.mrb[0].mxu0
  %v5324 = vpop.f32.mrb[0].mxu0
  %v5325 = vadd.f32 0.0, %v5324
  %v5326 = vpop.f32.mrb[0].mxu0
  %5327 = vmatprep.mubr.bf16.mxu0 0
  %5328 = vmatmul.mubr.bf16.gmra.mrb[0].mxu0 %v5247
  %v5329 = vpop.f32.mrb[0].mxu0
  %v5330 = vadd.f32 0.0, %v5329
  %v5331 = vpop.f32.mrb[0].mxu0
  %v5332 = vpop.f32.mrb[0].mxu0
  %v5333 = vadd.f32 0.0, %v5332
  %v5334 = vpop.f32.mrb[0].mxu0
  %5335 = vmatprep.mubr.bf16.mxu0 0
  %5336 = vmatmul.mubr.bf16.gmra.mrb[0].mxu0 %v5250
  %v5337 = vpop.f32.mrb[0].mxu0
  %v5338 = vadd.f32 0.0, %v5337
  %v5339 = vpop.f32.mrb[0].mxu0
  %v5340 = vpop.f32.mrb[0].mxu0
  %v5341 = vadd.f32 0.0, %v5340
  %v5342 = vpop.f32.mrb[0].mxu0
  %5343 = vmatprep.mubr.bf16.mxu0 0
  %5344 = vmatmul.mubr.bf16.gmra.mrb[0].mxu0 %v5253
  %v5345 = vpop.f32.mrb[0].mxu0
  %v5346 = vadd.f32 0.0, %v5345
  %v5347 = vpop.f32.mrb[0].mxu0
  %v5348 = vpop.f32.mrb[0].mxu0
  %v5349 = vadd.f32 0.0, %v5348
  %v5350 = vpop.f32.mrb[0].mxu0
  %5351 = vdwg.mxu0
  %v5352 = vadd.f32 %v5127, %v5290
  %v5353 = vadd.f32 %v5128, %v5293
  %v5354 = vadd.f32 %v5129, %v5298
  %v5355 = vadd.f32 %v5130, %v5301
  %v5356 = vadd.f32 %v5131, %v5306
  %v5357 = vadd.f32 %v5132, %v5309
  %v5358 = vadd.f32 %v5133, %v5314
  %v5359 = vadd.f32 %v5134, %v5317
  %v5360 = vadd.f32 %v5135, %v5322
  %v5361 = vadd.f32 %v5136, %v5325
  %v5362 = vadd.f32 %v5137, %v5330
  %v5363 = vadd.f32 %v5138, %v5333
  %v5364 = vadd.f32 %v5139, %v5338
  %v5365 = vadd.f32 %v5140, %v5341
  %v5366 = vadd.f32 %v5141, %v5346
  %v5367 = vadd.f32 %v5142, %v5349
  %v5368 = vrot.slane %v4286, 1
  %v5369 = vor.u32 %v4283, %v5368
  %v5370 = vrot.slane %v4294, 1
  %v5371 = vsel %vm2190, %v5369, %v5370
  %v5372 = vor.u32 %v4291, %v5370
  %v5373 = vrot.slane %v4303, 1
  %v5374 = vsel %vm2190, %v5372, %v5373
  %v5375 = vor.u32 %v4300, %v5373
  %v5376 = vrot.slane %v4312, 1
  %v5377 = vsel %vm2190, %v5375, %v5376
  %v5378 = vor.u32 %v4309, %v5376
  %v5379 = vrot.slane %v4321, 1
  %v5380 = vsel %vm2190, %v5378, %v5379
  %v5381 = vor.u32 %v4318, %v5379
  %v5382 = vrot.slane %v4330, 1
  %v5383 = vsel %vm2190, %v5381, %v5382
  %v5384 = vor.u32 %v4327, %v5382
  %v5385 = vrot.slane %v4339, 1
  %v5386 = vsel %vm2190, %v5384, %v5385
  %v5387 = vor.u32 %v4336, %v5385
  %v5388 = vrot.slane %v4348, 1
  %v5389 = vsel %vm2190, %v5387, %v5388
  %v5390 = vor.u32 %v4345, %v5388
  %v5399 = vsel %vm2223, %v5390, 0
  %v5400 = vmul.bf16 %v5371, %v2433
  %v5401 = vmul.bf16 %v5374, %v2434
  %v5402 = vmul.bf16 %v5377, %v2435
  %v5403 = vmul.bf16 %v5380, %v2436
  %v5404 = vmul.bf16 %v5383, %v2437
  %v5405 = vmul.bf16 %v5386, %v2438
  %v5406 = vmul.bf16 %v5389, %v2439
  %v5407 = vmul.bf16 %v5399, %v2440
  %v5408 = vld [vmem:[%s3 + $0xa0] sm:$0xf]
  %v5409 = vld [vmem:[%s3 + $0xa4] sm:$0xf]
  %v5410 = vld [vmem:[%s3 + $0xa8] sm:$0xf]
  %v5411 = vld [vmem:[%s3 + $0xac] sm:$0xf]
  %v5412 = vld [vmem:[%s3 + $0xb0] sm:$0xf]
  %v5413 = vld [vmem:[%s3 + $0xb4] sm:$0xf]
  %v5414 = vld [vmem:[%s3 + $0xb8] sm:$0xf]
  %v5415 = vld [vmem:[%s3 + $0xbc] sm:$0xf]
  %v5424 = vunpack.c.l.b16 %v5408
  %v5425 = vunpack.c.l.b16 %v5409
  %v5426 = vunpack.c.l.b16 %v5410
  %v5427 = vunpack.c.l.b16 %v5411
  %v5428 = vunpack.c.l.b16 %v5412
  %v5429 = vunpack.c.l.b16 %v5413
  %v5430 = vunpack.c.l.b16 %v5414
  %v5431 = vunpack.c.l.b16 %v5415
  %v5432 = vpack.c.b16 %v5425, %v5424
  %v5433 = vpack.c.b16 %v5427, %v5426
  %v5434 = vpack.c.b16 %v5429, %v5428
  %v5435 = vpack.c.b16 %v5431, %v5430
  %v5441 = vsel %vm3849, %v5400, 0
  %v5444 = vsel %vm3849, %v5401, 0
  %v5447 = vsel %vm3849, %v5402, 0
  %v5450 = vsel %vm3849, %v5403, 0
  %v5453 = vsel %vm3849, %v5404, 0
  %v5456 = vsel %vm3849, %v5405, 0
  %v5459 = vsel %vm3849, %v5406, 0
  %v5462 = vsel %vm3849, %v5407, 0
  %5464 = vmatprep.subr.bf16.mxu0 0
  %5465 = vmatpush1.bf16.msra.mxu0 %v5432
  %5466 = vmatprep.subr.bf16.mxu0 0
  %5467 = vmatpush1.bf16.msra.mxu0 %v5433
  %5468 = vmatprep.subr.bf16.mxu0 0
  %5469 = vmatpush1.bf16.msra.mxu0 %v5434
  %5470 = vmatprep.subr.bf16.mxu0 0
  %5471 = vmatpush1.bf16.msra.mxu0 %v5435
  %5472 = vmatprep.subr.bf16.mxu0 0
  %5473 = vmatpush1.bf16.msra.mxu0 0
  %5474 = vmatprep.subr.bf16.mxu0 0
  %5475 = vmatpush1.bf16.msra.mxu0 0
  %5476 = vmatprep.subr.bf16.mxu0 0
  %5477 = vmatpush1.bf16.msra.mxu0 0
  %5478 = vmatprep.subr.bf16.mxu0 0
  %5479 = vmatpush1.bf16.msra.mxu0 0
  %5480 = vmatprep.subr.bf16.mxu0 0
  %5481 = vmatpush1.bf16.msra.mxu0 0
  %5482 = vmatprep.subr.bf16.mxu0 0
  %5483 = vmatpush1.bf16.msra.mxu0 0
  %5484 = vmatprep.subr.bf16.mxu0 0
  %5485 = vmatpush1.bf16.msra.mxu0 0
  %5486 = vmatprep.subr.bf16.mxu0 0
  %5487 = vmatpush1.bf16.msra.mxu0 0
  %5488 = vmatprep.subr.bf16.mxu0 0
  %5489 = vmatpush1.bf16.msra.mxu0 0
  %5490 = vmatprep.subr.bf16.mxu0 0
  %5491 = vmatpush1.bf16.msra.mxu0 0
  %5492 = vmatprep.subr.bf16.mxu0 0
  %5493 = vmatpush1.bf16.msra.mxu0 0
  %5494 = vmatprep.subr.bf16.mxu0 0
  %5495 = vmatpush1.bf16.msra.mxu0 0
  %5496 = vmatprep.mubr.bf16.mxu0 0
  %5497 = vmatmul.mubr.bf16.gmra.mrb[0].mxu0 %v5441
  %v5498 = vpop.f32.mrb[0].mxu0
  %v5499 = vadd.f32 0.0, %v5498
  %v5500 = vpop.f32.mrb[0].mxu0
  %v5501 = vpop.f32.mrb[0].mxu0
  %v5502 = vadd.f32 0.0, %v5501
  %v5503 = vpop.f32.mrb[0].mxu0
  %5504 = vmatprep.mubr.bf16.mxu0 0
  %5505 = vmatmul.mubr.bf16.gmra.mrb[0].mxu0 %v5444
  %v5506 = vpop.f32.mrb[0].mxu0
  %v5507 = vadd.f32 0.0, %v5506
  %v5508 = vpop.f32.mrb[0].mxu0
  %v5509 = vpop.f32.mrb[0].mxu0
  %v5510 = vadd.f32 0.0, %v5509
  %v5511 = vpop.f32.mrb[0].mxu0
  %5512 = vmatprep.mubr.bf16.mxu0 0
  %5513 = vmatmul.mubr.bf16.gmra.mrb[0].mxu0 %v5447
  %v5514 = vpop.f32.mrb[0].mxu0
  %v5515 = vadd.f32 0.0, %v5514
  %v5516 = vpop.f32.mrb[0].mxu0
  %v5517 = vpop.f32.mrb[0].mxu0
  %v5518 = vadd.f32 0.0, %v5517
  %v5519 = vpop.f32.mrb[0].mxu0
  %5520 = vmatprep.mubr.bf16.mxu0 0
  %5521 = vmatmul.mubr.bf16.gmra.mrb[0].mxu0 %v5450
  %v5522 = vpop.f32.mrb[0].mxu0
  %v5523 = vadd.f32 0.0, %v5522
  %v5524 = vpop.f32.mrb[0].mxu0
  %v5525 = vpop.f32.mrb[0].mxu0
  %v5526 = vadd.f32 0.0, %v5525
  %v5527 = vpop.f32.mrb[0].mxu0
  %5528 = vmatprep.mubr.bf16.mxu0 0
  %5529 = vmatmul.mubr.bf16.gmra.mrb[0].mxu0 %v5453
  %v5530 = vpop.f32.mrb[0].mxu0
  %v5531 = vadd.f32 0.0, %v5530
  %v5532 = vpop.f32.mrb[0].mxu0
  %v5533 = vpop.f32.mrb[0].mxu0
  %v5534 = vadd.f32 0.0, %v5533
  %v5535 = vpop.f32.mrb[0].mxu0
  %5536 = vmatprep.mubr.bf16.mxu0 0
  %5537 = vmatmul.mubr.bf16.gmra.mrb[0].mxu0 %v5456
  %v5538 = vpop.f32.mrb[0].mxu0
  %v5539 = vadd.f32 0.0, %v5538
  %v5540 = vpop.f32.mrb[0].mxu0
  %v5541 = vpop.f32.mrb[0].mxu0
  %v5542 = vadd.f32 0.0, %v5541
  %v5543 = vpop.f32.mrb[0].mxu0
  %5544 = vmatprep.mubr.bf16.mxu0 0
  %5545 = vmatmul.mubr.bf16.gmra.mrb[0].mxu0 %v5459
  %v5546 = vpop.f32.mrb[0].mxu0
  %v5547 = vadd.f32 0.0, %v5546
  %v5548 = vpop.f32.mrb[0].mxu0
  %v5549 = vpop.f32.mrb[0].mxu0
  %v5550 = vadd.f32 0.0, %v5549
  %v5551 = vpop.f32.mrb[0].mxu0
  %5552 = vmatprep.mubr.bf16.mxu0 0
  %5553 = vmatmul.mubr.bf16.gmra.mrb[0].mxu0 %v5462
  %v5554 = vpop.f32.mrb[0].mxu0
  %v5555 = vadd.f32 0.0, %v5554
  %v5556 = vpop.f32.mrb[0].mxu0
  %v5557 = vpop.f32.mrb[0].mxu0
  %v5558 = vadd.f32 0.0, %v5557
  %v5559 = vpop.f32.mrb[0].mxu0
  %5560 = vdwg.mxu0
  %v5561 = vadd.f32 %v5352, %v5499
  %v5562 = vadd.f32 %v5353, %v5502
  %v5563 = vadd.f32 %v5354, %v5507
  %v5564 = vadd.f32 %v5355, %v5510
  %v5565 = vadd.f32 %v5356, %v5515
  %v5566 = vadd.f32 %v5357, %v5518
  %v5567 = vadd.f32 %v5358, %v5523
  %v5568 = vadd.f32 %v5359, %v5526
  %v5569 = vadd.f32 %v5360, %v5531
  %v5570 = vadd.f32 %v5361, %v5534
  %v5571 = vadd.f32 %v5362, %v5539
  %v5572 = vadd.f32 %v5363, %v5542
  %v5573 = vadd.f32 %v5364, %v5547
  %v5574 = vadd.f32 %v5365, %v5550
  %v5575 = vadd.f32 %v5366, %v5555
  %v5576 = vadd.f32 %v5367, %v5558
  %v5578 = vsel %vm156, %v4351, 0
  %v5579 = vmul.bf16 %v4298, %v2825
  %v5580 = vmul.bf16 %v4307, %v2826
  %v5581 = vmul.bf16 %v4316, %v2827
  %v5582 = vmul.bf16 %v4325, %v2828
  %v5583 = vmul.bf16 %v4334, %v2829
  %v5584 = vmul.bf16 %v4343, %v2830
  %v5585 = vmul.bf16 %v4352, %v2831
  %v5586 = vmul.bf16 %v5578, %v2832
  %v5587 = vld [vmem:[%s3 + $0xc0] sm:$0xf]
  %v5588 = vld [vmem:[%s3 + $0xc4] sm:$0xf]
  %v5589 = vld [vmem:[%s3 + $0xc8] sm:$0xf]
  %v5590 = vld [vmem:[%s3 + $0xcc] sm:$0xf]
  %v5591 = vld [vmem:[%s3 + $0xd0] sm:$0xf]
  %v5592 = vld [vmem:[%s3 + $0xd4] sm:$0xf]
  %v5593 = vld [vmem:[%s3 + $0xd8] sm:$0xf]
  %v5594 = vld [vmem:[%s3 + $0xdc] sm:$0xf]
  %v5603 = vunpack.c.l.b16 %v5587
  %v5604 = vunpack.c.l.b16 %v5588
  %v5605 = vunpack.c.l.b16 %v5589
  %v5606 = vunpack.c.l.b16 %v5590
  %v5607 = vunpack.c.l.b16 %v5591
  %v5608 = vunpack.c.l.b16 %v5592
  %v5609 = vunpack.c.l.b16 %v5593
  %v5610 = vunpack.c.l.b16 %v5594
  %v5611 = vpack.c.b16 %v5604, %v5603
  %v5612 = vpack.c.b16 %v5606, %v5605
  %v5613 = vpack.c.b16 %v5608, %v5607
  %v5614 = vpack.c.b16 %v5610, %v5609
  %v5620 = vsel %vm3849, %v5579, 0
  %v5623 = vsel %vm3849, %v5580, 0
  %v5626 = vsel %vm3849, %v5581, 0
  %v5629 = vsel %vm3849, %v5582, 0
  %v5632 = vsel %vm3849, %v5583, 0
  %v5635 = vsel %vm3849, %v5584, 0
  %v5638 = vsel %vm3849, %v5585, 0
  %v5641 = vsel %vm3849, %v5586, 0
  %5643 = vmatprep.subr.bf16.mxu0 0
  %5644 = vmatpush1.bf16.msra.mxu0 %v5611
  %5645 = vmatprep.subr.bf16.mxu0 0
  %5646 = vmatpush1.bf16.msra.mxu0 %v5612
  %5647 = vmatprep.subr.bf16.mxu0 0
  %5648 = vmatpush1.bf16.msra.mxu0 %v5613
  %5649 = vmatprep.subr.bf16.mxu0 0
  %5650 = vmatpush1.bf16.msra.mxu0 %v5614
  %5651 = vmatprep.subr.bf16.mxu0 0
  %5652 = vmatpush1.bf16.msra.mxu0 0
  %5653 = vmatprep.subr.bf16.mxu0 0
  %5654 = vmatpush1.bf16.msra.mxu0 0
  %5655 = vmatprep.subr.bf16.mxu0 0
  %5656 = vmatpush1.bf16.msra.mxu0 0
  %5657 = vmatprep.subr.bf16.mxu0 0
  %5658 = vmatpush1.bf16.msra.mxu0 0
  %5659 = vmatprep.subr.bf16.mxu0 0
  %5660 = vmatpush1.bf16.msra.mxu0 0
  %5661 = vmatprep.subr.bf16.mxu0 0
  %5662 = vmatpush1.bf16.msra.mxu0 0
  %5663 = vmatprep.subr.bf16.mxu0 0
  %5664 = vmatpush1.bf16.msra.mxu0 0
  %5665 = vmatprep.subr.bf16.mxu0 0
  %5666 = vmatpush1.bf16.msra.mxu0 0
  %5667 = vmatprep.subr.bf16.mxu0 0
  %5668 = vmatpush1.bf16.msra.mxu0 0
  %5669 = vmatprep.subr.bf16.mxu0 0
  %5670 = vmatpush1.bf16.msra.mxu0 0
  %5671 = vmatprep.subr.bf16.mxu0 0
  %5672 = vmatpush1.bf16.msra.mxu0 0
  %5673 = vmatprep.subr.bf16.mxu0 0
  %5674 = vmatpush1.bf16.msra.mxu0 0
  %5675 = vmatprep.mubr.bf16.mxu0 0
  %5676 = vmatmul.mubr.bf16.gmra.mrb[0].mxu0 %v5620
  %v5677 = vpop.f32.mrb[0].mxu0
  %v5678 = vadd.f32 0.0, %v5677
  %v5679 = vpop.f32.mrb[0].mxu0
  %v5680 = vpop.f32.mrb[0].mxu0
  %v5681 = vadd.f32 0.0, %v5680
  %v5682 = vpop.f32.mrb[0].mxu0
  %5683 = vmatprep.mubr.bf16.mxu0 0
  %5684 = vmatmul.mubr.bf16.gmra.mrb[0].mxu0 %v5623
  %v5685 = vpop.f32.mrb[0].mxu0
  %v5686 = vadd.f32 0.0, %v5685
  %v5687 = vpop.f32.mrb[0].mxu0
  %v5688 = vpop.f32.mrb[0].mxu0
  %v5689 = vadd.f32 0.0, %v5688
  %v5690 = vpop.f32.mrb[0].mxu0
  %5691 = vmatprep.mubr.bf16.mxu0 0
  %5692 = vmatmul.mubr.bf16.gmra.mrb[0].mxu0 %v5626
  %v5693 = vpop.f32.mrb[0].mxu0
  %v5694 = vadd.f32 0.0, %v5693
  %v5695 = vpop.f32.mrb[0].mxu0
  %v5696 = vpop.f32.mrb[0].mxu0
  %v5697 = vadd.f32 0.0, %v5696
  %v5698 = vpop.f32.mrb[0].mxu0
  %5699 = vmatprep.mubr.bf16.mxu0 0
  %5700 = vmatmul.mubr.bf16.gmra.mrb[0].mxu0 %v5629
  %v5701 = vpop.f32.mrb[0].mxu0
  %v5702 = vadd.f32 0.0, %v5701
  %v5703 = vpop.f32.mrb[0].mxu0
  %v5704 = vpop.f32.mrb[0].mxu0
  %v5705 = vadd.f32 0.0, %v5704
  %v5706 = vpop.f32.mrb[0].mxu0
  %5707 = vmatprep.mubr.bf16.mxu0 0
  %5708 = vmatmul.mubr.bf16.gmra.mrb[0].mxu0 %v5632
  %v5709 = vpop.f32.mrb[0].mxu0
  %v5710 = vadd.f32 0.0, %v5709
  %v5711 = vpop.f32.mrb[0].mxu0
  %v5712 = vpop.f32.mrb[0].mxu0
  %v5713 = vadd.f32 0.0, %v5712
  %v5714 = vpop.f32.mrb[0].mxu0
  %5715 = vmatprep.mubr.bf16.mxu0 0
  %5716 = vmatmul.mubr.bf16.gmra.mrb[0].mxu0 %v5635
  %v5717 = vpop.f32.mrb[0].mxu0
  %v5718 = vadd.f32 0.0, %v5717
  %v5719 = vpop.f32.mrb[0].mxu0
  %v5720 = vpop.f32.mrb[0].mxu0
  %v5721 = vadd.f32 0.0, %v5720
  %v5722 = vpop.f32.mrb[0].mxu0
  %5723 = vmatprep.mubr.bf16.mxu0 0
  %5724 = vmatmul.mubr.bf16.gmra.mrb[0].mxu0 %v5638
  %v5725 = vpop.f32.mrb[0].mxu0
  %v5726 = vadd.f32 0.0, %v5725
  %v5727 = vpop.f32.mrb[0].mxu0
  %v5728 = vpop.f32.mrb[0].mxu0
  %v5729 = vadd.f32 0.0, %v5728
  %v5730 = vpop.f32.mrb[0].mxu0
  %5731 = vmatprep.mubr.bf16.mxu0 0
  %5732 = vmatmul.mubr.bf16.gmra.mrb[0].mxu0 %v5641
  %v5733 = vpop.f32.mrb[0].mxu0
  %v5734 = vadd.f32 0.0, %v5733
  %v5735 = vpop.f32.mrb[0].mxu0
  %v5736 = vpop.f32.mrb[0].mxu0
  %v5737 = vadd.f32 0.0, %v5736
  %v5738 = vpop.f32.mrb[0].mxu0
  %5739 = vdwg.mxu0
  %v5740 = vadd.f32 %v5561, %v5678
  %v5741 = vadd.f32 %v5562, %v5681
  %v5742 = vadd.f32 %v5563, %v5686
  %v5743 = vadd.f32 %v5564, %v5689
  %v5744 = vadd.f32 %v5565, %v5694
  %v5745 = vadd.f32 %v5566, %v5697
  %v5746 = vadd.f32 %v5567, %v5702
  %v5747 = vadd.f32 %v5568, %v5705
  %v5748 = vadd.f32 %v5569, %v5710
  %v5749 = vadd.f32 %v5570, %v5713
  %v5750 = vadd.f32 %v5571, %v5718
  %v5751 = vadd.f32 %v5572, %v5721
  %v5752 = vadd.f32 %v5573, %v5726
  %v5753 = vadd.f32 %v5574, %v5729
  %v5754 = vadd.f32 %v5575, %v5734
  %v5755 = vadd.f32 %v5576, %v5737
  %v5757 = vsel %vm441, %v4399, 0
  %v5759 = vmul.bf16 %v4388, %v3214
  %v5760 = vmul.bf16 %v4390, %v3215
  %v5761 = vmul.bf16 %v4392, %v3216
  %v5762 = vmul.bf16 %v4394, %v3217
  %v5763 = vmul.bf16 %v4396, %v3218
  %v5764 = vmul.bf16 %v4398, %v3219
  %v5765 = vmul.bf16 %v4400, %v3220
  %v5766 = vmul.bf16 %v5757, %v3221
  %v5767 = vld [vmem:[%s3 + $0xe0] sm:$0xf]
  %v5768 = vld [vmem:[%s3 + $0xe4] sm:$0xf]
  %v5769 = vld [vmem:[%s3 + $0xe8] sm:$0xf]
  %v5770 = vld [vmem:[%s3 + $0xec] sm:$0xf]
  %v5771 = vld [vmem:[%s3 + $0xf0] sm:$0xf]
  %v5772 = vld [vmem:[%s3 + $0xf4] sm:$0xf]
  %v5773 = vld [vmem:[%s3 + $0xf8] sm:$0xf]
  %v5774 = vld [vmem:[%s3 + $0xfc] sm:$0xf]
  %v5783 = vunpack.c.l.b16 %v5767
  %v5784 = vunpack.c.l.b16 %v5768
  %v5785 = vunpack.c.l.b16 %v5769
  %v5786 = vunpack.c.l.b16 %v5770
  %v5787 = vunpack.c.l.b16 %v5771
  %v5788 = vunpack.c.l.b16 %v5772
  %v5789 = vunpack.c.l.b16 %v5773
  %v5790 = vunpack.c.l.b16 %v5774
  %v5791 = vpack.c.b16 %v5784, %v5783
  %v5792 = vpack.c.b16 %v5786, %v5785
  %v5793 = vpack.c.b16 %v5788, %v5787
  %v5794 = vpack.c.b16 %v5790, %v5789
  %v5800 = vsel %vm3849, %v5759, 0
  %v5803 = vsel %vm3849, %v5760, 0
  %v5806 = vsel %vm3849, %v5761, 0
  %v5809 = vsel %vm3849, %v5762, 0
  %v5812 = vsel %vm3849, %v5763, 0
  %v5815 = vsel %vm3849, %v5764, 0
  %v5818 = vsel %vm3849, %v5765, 0
  %v5821 = vsel %vm3849, %v5766, 0
  %5823 = vmatprep.subr.bf16.mxu0 0
  %5824 = vmatpush1.bf16.msra.mxu0 %v5791
  %5825 = vmatprep.subr.bf16.mxu0 0
  %5826 = vmatpush1.bf16.msra.mxu0 %v5792
  %5827 = vmatprep.subr.bf16.mxu0 0
  %5828 = vmatpush1.bf16.msra.mxu0 %v5793
  %5829 = vmatprep.subr.bf16.mxu0 0
  %5830 = vmatpush1.bf16.msra.mxu0 %v5794
  %5831 = vmatprep.subr.bf16.mxu0 0
  %5832 = vmatpush1.bf16.msra.mxu0 0
  %5833 = vmatprep.subr.bf16.mxu0 0
  %5834 = vmatpush1.bf16.msra.mxu0 0
  %5835 = vmatprep.subr.bf16.mxu0 0
  %5836 = vmatpush1.bf16.msra.mxu0 0
  %5837 = vmatprep.subr.bf16.mxu0 0
  %5838 = vmatpush1.bf16.msra.mxu0 0
  %5839 = vmatprep.subr.bf16.mxu0 0
  %5840 = vmatpush1.bf16.msra.mxu0 0
  %5841 = vmatprep.subr.bf16.mxu0 0
  %5842 = vmatpush1.bf16.msra.mxu0 0
  %5843 = vmatprep.subr.bf16.mxu0 0
  %5844 = vmatpush1.bf16.msra.mxu0 0
  %5845 = vmatprep.subr.bf16.mxu0 0
  %5846 = vmatpush1.bf16.msra.mxu0 0
  %5847 = vmatprep.subr.bf16.mxu0 0
  %5848 = vmatpush1.bf16.msra.mxu0 0
  %5849 = vmatprep.subr.bf16.mxu0 0
  %5850 = vmatpush1.bf16.msra.mxu0 0
  %5851 = vmatprep.subr.bf16.mxu0 0
  %5852 = vmatpush1.bf16.msra.mxu0 0
  %5853 = vmatprep.subr.bf16.mxu0 0
  %5854 = vmatpush1.bf16.msra.mxu0 0
  %5855 = vmatprep.mubr.bf16.mxu0 0
  %5856 = vmatmul.mubr.bf16.gmra.mrb[0].mxu0 %v5800
  %v5857 = vpop.f32.mrb[0].mxu0
  %v5858 = vadd.f32 0.0, %v5857
  %v5859 = vpop.f32.mrb[0].mxu0
  %v5860 = vpop.f32.mrb[0].mxu0
  %v5861 = vadd.f32 0.0, %v5860
  %v5862 = vpop.f32.mrb[0].mxu0
  %5863 = vmatprep.mubr.bf16.mxu0 0
  %5864 = vmatmul.mubr.bf16.gmra.mrb[0].mxu0 %v5803
  %v5865 = vpop.f32.mrb[0].mxu0
  %v5866 = vadd.f32 0.0, %v5865
  %v5867 = vpop.f32.mrb[0].mxu0
  %v5868 = vpop.f32.mrb[0].mxu0
  %v5869 = vadd.f32 0.0, %v5868
  %v5870 = vpop.f32.mrb[0].mxu0
  %5871 = vmatprep.mubr.bf16.mxu0 0
  %5872 = vmatmul.mubr.bf16.gmra.mrb[0].mxu0 %v5806
  %v5873 = vpop.f32.mrb[0].mxu0
  %v5874 = vadd.f32 0.0, %v5873
  %v5875 = vpop.f32.mrb[0].mxu0
  %v5876 = vpop.f32.mrb[0].mxu0
  %v5877 = vadd.f32 0.0, %v5876
  %v5878 = vpop.f32.mrb[0].mxu0
  %5879 = vmatprep.mubr.bf16.mxu0 0
  %5880 = vmatmul.mubr.bf16.gmra.mrb[0].mxu0 %v5809
  %v5881 = vpop.f32.mrb[0].mxu0
  %v5882 = vadd.f32 0.0, %v5881
  %v5883 = vpop.f32.mrb[0].mxu0
  %v5884 = vpop.f32.mrb[0].mxu0
  %v5885 = vadd.f32 0.0, %v5884
  %v5886 = vpop.f32.mrb[0].mxu0
  %5887 = vmatprep.mubr.bf16.mxu0 0
  %5888 = vmatmul.mubr.bf16.gmra.mrb[0].mxu0 %v5812
  %v5889 = vpop.f32.mrb[0].mxu0
  %v5890 = vadd.f32 0.0, %v5889
  %v5891 = vpop.f32.mrb[0].mxu0
  %v5892 = vpop.f32.mrb[0].mxu0
  %v5893 = vadd.f32 0.0, %v5892
  %v5894 = vpop.f32.mrb[0].mxu0
  %5895 = vmatprep.mubr.bf16.mxu0 0
  %5896 = vmatmul.mubr.bf16.gmra.mrb[0].mxu0 %v5815
  %v5897 = vpop.f32.mrb[0].mxu0
  %v5898 = vadd.f32 0.0, %v5897
  %v5899 = vpop.f32.mrb[0].mxu0
  %v5900 = vpop.f32.mrb[0].mxu0
  %v5901 = vadd.f32 0.0, %v5900
  %v5902 = vpop.f32.mrb[0].mxu0
  %5903 = vmatprep.mubr.bf16.mxu0 0
  %5904 = vmatmul.mubr.bf16.gmra.mrb[0].mxu0 %v5818
  %v5905 = vpop.f32.mrb[0].mxu0
  %v5906 = vadd.f32 0.0, %v5905
  %v5907 = vpop.f32.mrb[0].mxu0
  %v5908 = vpop.f32.mrb[0].mxu0
  %v5909 = vadd.f32 0.0, %v5908
  %v5910 = vpop.f32.mrb[0].mxu0
  %5911 = vmatprep.mubr.bf16.mxu0 0
  %5912 = vmatmul.mubr.bf16.gmra.mrb[0].mxu0 %v5821
  %v5913 = vpop.f32.mrb[0].mxu0
  %v5914 = vadd.f32 0.0, %v5913
  %v5915 = vpop.f32.mrb[0].mxu0
  %v5916 = vpop.f32.mrb[0].mxu0
  %v5917 = vadd.f32 0.0, %v5916
  %v5918 = vpop.f32.mrb[0].mxu0
  %5919 = vdwg.mxu0
  %v5920 = vadd.f32 %v5740, %v5858
  %v5921 = vadd.f32 %v5741, %v5861
  %v5922 = vadd.f32 %v5742, %v5866
  %v5923 = vadd.f32 %v5743, %v5869
  %v5924 = vadd.f32 %v5744, %v5874
  %v5925 = vadd.f32 %v5745, %v5877
  %v5926 = vadd.f32 %v5746, %v5882
  %v5927 = vadd.f32 %v5747, %v5885
  %v5928 = vadd.f32 %v5748, %v5890
  %v5929 = vadd.f32 %v5749, %v5893
  %v5930 = vadd.f32 %v5750, %v5898
  %v5931 = vadd.f32 %v5751, %v5901
  %v5932 = vadd.f32 %v5752, %v5906
  %v5933 = vadd.f32 %v5753, %v5909
  %v5934 = vadd.f32 %v5754, %v5914
  %v5935 = vadd.f32 %v5755, %v5917
  %v5937 = vsel %vm998, %v4746, 0
  %v5938 = vmul.bf16 %v4723, %v3670
  %v5939 = vmul.bf16 %v4727, %v3671
  %v5940 = vmul.bf16 %v4731, %v3672
  %v5941 = vmul.bf16 %v4735, %v3673
  %v5942 = vmul.bf16 %v4739, %v3674
  %v5943 = vmul.bf16 %v4743, %v3675
  %v5944 = vmul.bf16 %v4747, %v3676
  %v5945 = vmul.bf16 %v5937, %v3677
  %v5946 = vld [vmem:[%s3 + $0x100] sm:$0xf]
  %v5947 = vld [vmem:[%s3 + $0x104] sm:$0xf]
  %v5948 = vld [vmem:[%s3 + $0x108] sm:$0xf]
  %v5949 = vld [vmem:[%s3 + $0x10c] sm:$0xf]
  %v5950 = vld [vmem:[%s3 + $0x110] sm:$0xf]
  %v5951 = vld [vmem:[%s3 + $0x114] sm:$0xf]
  %v5952 = vld [vmem:[%s3 + $0x118] sm:$0xf]
  %v5953 = vld [vmem:[%s3 + $0x11c] sm:$0xf]
  %v5962 = vunpack.c.l.b16 %v5946
  %v5963 = vunpack.c.l.b16 %v5947
  %v5964 = vunpack.c.l.b16 %v5948
  %v5965 = vunpack.c.l.b16 %v5949
  %v5966 = vunpack.c.l.b16 %v5950
  %v5967 = vunpack.c.l.b16 %v5951
  %v5968 = vunpack.c.l.b16 %v5952
  %v5969 = vunpack.c.l.b16 %v5953
  %v5970 = vpack.c.b16 %v5963, %v5962
  %v5971 = vpack.c.b16 %v5965, %v5964
  %v5972 = vpack.c.b16 %v5967, %v5966
  %v5973 = vpack.c.b16 %v5969, %v5968
  %v5979 = vsel %vm3849, %v5938, 0
  %v5982 = vsel %vm3849, %v5939, 0
  %v5985 = vsel %vm3849, %v5940, 0
  %v5988 = vsel %vm3849, %v5941, 0
  %v5991 = vsel %vm3849, %v5942, 0
  %v5994 = vsel %vm3849, %v5943, 0
  %v5997 = vsel %vm3849, %v5944, 0
  %v6000 = vsel %vm3849, %v5945, 0
  %6002 = vmatprep.subr.bf16.mxu0 0
  %6003 = vmatpush1.bf16.msra.mxu0 %v5970
  %6004 = vmatprep.subr.bf16.mxu0 0
  %6005 = vmatpush1.bf16.msra.mxu0 %v5971
  %6006 = vmatprep.subr.bf16.mxu0 0
  %6007 = vmatpush1.bf16.msra.mxu0 %v5972
  %6008 = vmatprep.subr.bf16.mxu0 0
  %6009 = vmatpush1.bf16.msra.mxu0 %v5973
  %6010 = vmatprep.subr.bf16.mxu0 0
  %6011 = vmatpush1.bf16.msra.mxu0 0
  %6012 = vmatprep.subr.bf16.mxu0 0
  %6013 = vmatpush1.bf16.msra.mxu0 0
  %6014 = vmatprep.subr.bf16.mxu0 0
  %6015 = vmatpush1.bf16.msra.mxu0 0
  %6016 = vmatprep.subr.bf16.mxu0 0
  %6017 = vmatpush1.bf16.msra.mxu0 0
  %6018 = vmatprep.subr.bf16.mxu0 0
  %6019 = vmatpush1.bf16.msra.mxu0 0
  %6020 = vmatprep.subr.bf16.mxu0 0
  %6021 = vmatpush1.bf16.msra.mxu0 0
  %6022 = vmatprep.subr.bf16.mxu0 0
  %6023 = vmatpush1.bf16.msra.mxu0 0
  %6024 = vmatprep.subr.bf16.mxu0 0
  %6025 = vmatpush1.bf16.msra.mxu0 0
  %6026 = vmatprep.subr.bf16.mxu0 0
  %6027 = vmatpush1.bf16.msra.mxu0 0
  %6028 = vmatprep.subr.bf16.mxu0 0
  %6029 = vmatpush1.bf16.msra.mxu0 0
  %6030 = vmatprep.subr.bf16.mxu0 0
  %6031 = vmatpush1.bf16.msra.mxu0 0
  %6032 = vmatprep.subr.bf16.mxu0 0
  %6033 = vmatpush1.bf16.msra.mxu0 0
  %6034 = vmatprep.mubr.bf16.mxu0 0
  %6035 = vmatmul.mubr.bf16.gmra.mrb[0].mxu0 %v5979
  %v6036 = vpop.f32.mrb[0].mxu0
  %v6037 = vadd.f32 0.0, %v6036
  %v6038 = vpop.f32.mrb[0].mxu0
  %v6039 = vpop.f32.mrb[0].mxu0
  %v6040 = vadd.f32 0.0, %v6039
  %v6041 = vpop.f32.mrb[0].mxu0
  %6042 = vmatprep.mubr.bf16.mxu0 0
  %6043 = vmatmul.mubr.bf16.gmra.mrb[0].mxu0 %v5982
  %v6044 = vpop.f32.mrb[0].mxu0
  %v6045 = vadd.f32 0.0, %v6044
  %v6046 = vpop.f32.mrb[0].mxu0
  %v6047 = vpop.f32.mrb[0].mxu0
  %v6048 = vadd.f32 0.0, %v6047
  %v6049 = vpop.f32.mrb[0].mxu0
  %6050 = vmatprep.mubr.bf16.mxu0 0
  %6051 = vmatmul.mubr.bf16.gmra.mrb[0].mxu0 %v5985
  %v6052 = vpop.f32.mrb[0].mxu0
  %v6053 = vadd.f32 0.0, %v6052
  %v6054 = vpop.f32.mrb[0].mxu0
  %v6055 = vpop.f32.mrb[0].mxu0
  %v6056 = vadd.f32 0.0, %v6055
  %v6057 = vpop.f32.mrb[0].mxu0
  %6058 = vmatprep.mubr.bf16.mxu0 0
  %6059 = vmatmul.mubr.bf16.gmra.mrb[0].mxu0 %v5988
  %v6060 = vpop.f32.mrb[0].mxu0
  %v6061 = vadd.f32 0.0, %v6060
  %v6062 = vpop.f32.mrb[0].mxu0
  %v6063 = vpop.f32.mrb[0].mxu0
  %v6064 = vadd.f32 0.0, %v6063
  %v6065 = vpop.f32.mrb[0].mxu0
  %6066 = vmatprep.mubr.bf16.mxu0 0
  %6067 = vmatmul.mubr.bf16.gmra.mrb[0].mxu0 %v5991
  %v6068 = vpop.f32.mrb[0].mxu0
  %v6069 = vadd.f32 0.0, %v6068
  %v6070 = vpop.f32.mrb[0].mxu0
  %v6071 = vpop.f32.mrb[0].mxu0
  %v6072 = vadd.f32 0.0, %v6071
  %v6073 = vpop.f32.mrb[0].mxu0
  %6074 = vmatprep.mubr.bf16.mxu0 0
  %6075 = vmatmul.mubr.bf16.gmra.mrb[0].mxu0 %v5994
  %v6076 = vpop.f32.mrb[0].mxu0
  %v6077 = vadd.f32 0.0, %v6076
  %v6078 = vpop.f32.mrb[0].mxu0
  %v6079 = vpop.f32.mrb[0].mxu0
  %v6080 = vadd.f32 0.0, %v6079
  %v6081 = vpop.f32.mrb[0].mxu0
  %6082 = vmatprep.mubr.bf16.mxu0 0
  %6083 = vmatmul.mubr.bf16.gmra.mrb[0].mxu0 %v5997
  %v6084 = vpop.f32.mrb[0].mxu0
  %v6085 = vadd.f32 0.0, %v6084
  %v6086 = vpop.f32.mrb[0].mxu0
  %v6087 = vpop.f32.mrb[0].mxu0
  %v6088 = vadd.f32 0.0, %v6087
  %v6089 = vpop.f32.mrb[0].mxu0
  %6090 = vmatprep.mubr.bf16.mxu0 0
  %6091 = vmatmul.mubr.bf16.gmra.mrb[0].mxu0 %v6000
  %v6092 = vpop.f32.mrb[0].mxu0
  %v6093 = vadd.f32 0.0, %v6092
  %v6094 = vpop.f32.mrb[0].mxu0
  %v6095 = vpop.f32.mrb[0].mxu0
  %v6096 = vadd.f32 0.0, %v6095
  %v6097 = vpop.f32.mrb[0].mxu0
  %6098 = vdwg.mxu0
  %v6099 = vadd.f32 %v5920, %v6037
  %v6100 = vadd.f32 %v5921, %v6040
  %v6101 = vadd.f32 %v5922, %v6045
  %v6102 = vadd.f32 %v5923, %v6048
  %v6103 = vadd.f32 %v5924, %v6053
  %v6104 = vadd.f32 %v5925, %v6056
  %v6105 = vadd.f32 %v5926, %v6061
  %v6106 = vadd.f32 %v5927, %v6064
  %v6107 = vadd.f32 %v5928, %v6069
  %v6108 = vadd.f32 %v5929, %v6072
  %v6109 = vadd.f32 %v5930, %v6077
  %v6110 = vadd.f32 %v5931, %v6080
  %v6111 = vadd.f32 %v5932, %v6085
  %v6112 = vadd.f32 %v5933, %v6088
  %v6113 = vadd.f32 %v5934, %v6093
  %v6114 = vadd.f32 %v5935, %v6096
  %v6115 = vld [vmem:[%s4 + $0x4] sm:$0x1]
  %v6116 = vld [vmem:[%s4 + $0x5] sm:$0x1]
  %v6117 = vsel %vm3849, %v6099, 0.0
  %v6118 = vsel %vm3849, %v6100, 0.0
  %v6119 = vadd.f32 %v6117, %v6118
  %v6120 = vsel %vm3849, %v6101, 0.0
  %v6121 = vadd.f32 %v6119, %v6120
  %v6122 = vsel %vm3849, %v6102, 0.0
  %v6123 = vadd.f32 %v6121, %v6122
  %v6124 = vsel %vm3849, %v6103, 0.0
  %v6125 = vadd.f32 %v6123, %v6124
  %v6126 = vsel %vm3849, %v6104, 0.0
  %v6127 = vadd.f32 %v6125, %v6126
  %v6128 = vsel %vm3849, %v6105, 0.0
  %v6129 = vadd.f32 %v6127, %v6128
  %v6130 = vsel %vm3849, %v6106, 0.0
  %v6131 = vadd.f32 %v6129, %v6130
  %v6132 = vsel %vm3849, %v6107, 0.0
  %v6133 = vadd.f32 %v6131, %v6132
  %v6134 = vsel %vm3849, %v6108, 0.0
  %v6135 = vadd.f32 %v6133, %v6134
  %v6136 = vsel %vm3849, %v6109, 0.0
  %v6137 = vadd.f32 %v6135, %v6136
  %v6138 = vsel %vm3849, %v6110, 0.0
  %v6139 = vadd.f32 %v6137, %v6138
  %v6140 = vsel %vm3849, %v6111, 0.0
  %v6141 = vadd.f32 %v6139, %v6140
  %v6142 = vsel %vm3849, %v6112, 0.0
  %v6143 = vadd.f32 %v6141, %v6142
  %v6144 = vsel %vm3849, %v6113, 0.0
  %v6145 = vadd.f32 %v6143, %v6144
  %v6146 = vsel %vm3849, %v6114, 0.0
  %v6147 = vadd.f32 %v6145, %v6146
  %v6148 = vrot.slane %v6147, 4
  %v6149 = vadd.f32 %v6147, %v6148
  %v6150 = vrot.slane %v6149, 2
  %v6151 = vadd.f32 %v6149, %v6150
  %v6152 = vrot.slane %v6151, 1
  %v6153 = vadd.f32 %v6151, %v6152
  %6155 = vrot.lane.b32.xlu0 %v6153, 96
  %v6156 = vpop.permute.xlu0 %6155
  %v6158 = vadd.f32 %v6153, %v6156
  %6160 = vrot.lane.b32.xlu0 %v6158, 112
  %v6161 = vpop.permute.xlu0 %6160
  %v6163 = vadd.f32 %v6158, %v6161
  %6165 = vrot.lane.b32.xlu0 %v6163, 120
  %v6166 = vpop.permute.xlu0 %6165
  %v6168 = vadd.f32 %v6163, %v6166
  %v6169 = vmul.f32 %v6168, 0.0009765625
  %v6170 = vmul.f32 %v6099, %v6099
  %v6171 = vmul.f32 %v6100, %v6100
  %v6172 = vmul.f32 %v6101, %v6101
  %v6173 = vmul.f32 %v6102, %v6102
  %v6174 = vmul.f32 %v6103, %v6103
  %v6175 = vmul.f32 %v6104, %v6104
  %v6176 = vmul.f32 %v6105, %v6105
  %v6177 = vmul.f32 %v6106, %v6106
  %v6178 = vmul.f32 %v6107, %v6107
  %v6179 = vmul.f32 %v6108, %v6108
  %v6180 = vmul.f32 %v6109, %v6109
  %v6181 = vmul.f32 %v6110, %v6110
  %v6182 = vmul.f32 %v6111, %v6111
  %v6183 = vmul.f32 %v6112, %v6112
  %v6184 = vmul.f32 %v6113, %v6113
  %v6185 = vmul.f32 %v6114, %v6114
  %v6186 = vsel %vm3849, %v6170, 0.0
  %v6187 = vsel %vm3849, %v6171, 0.0
  %v6188 = vadd.f32 %v6186, %v6187
  %v6189 = vsel %vm3849, %v6172, 0.0
  %v6190 = vadd.f32 %v6188, %v6189
  %v6191 = vsel %vm3849, %v6173, 0.0
  %v6192 = vadd.f32 %v6190, %v6191
  %v6193 = vsel %vm3849, %v6174, 0.0
  %v6194 = vadd.f32 %v6192, %v6193
  %v6195 = vsel %vm3849, %v6175, 0.0
  %v6196 = vadd.f32 %v6194, %v6195
  %v6197 = vsel %vm3849, %v6176, 0.0
  %v6198 = vadd.f32 %v6196, %v6197
  %v6199 = vsel %vm3849, %v6177, 0.0
  %v6200 = vadd.f32 %v6198, %v6199
  %v6201 = vsel %vm3849, %v6178, 0.0
  %v6202 = vadd.f32 %v6200, %v6201
  %v6203 = vsel %vm3849, %v6179, 0.0
  %v6204 = vadd.f32 %v6202, %v6203
  %v6205 = vsel %vm3849, %v6180, 0.0
  %v6206 = vadd.f32 %v6204, %v6205
  %v6207 = vsel %vm3849, %v6181, 0.0
  %v6208 = vadd.f32 %v6206, %v6207
  %v6209 = vsel %vm3849, %v6182, 0.0
  %v6210 = vadd.f32 %v6208, %v6209
  %v6211 = vsel %vm3849, %v6183, 0.0
  %v6212 = vadd.f32 %v6210, %v6211
  %v6213 = vsel %vm3849, %v6184, 0.0
  %v6214 = vadd.f32 %v6212, %v6213
  %v6215 = vsel %vm3849, %v6185, 0.0
  %v6216 = vadd.f32 %v6214, %v6215
  %v6217 = vrot.slane %v6216, 4
  %v6218 = vadd.f32 %v6216, %v6217
  %v6219 = vrot.slane %v6218, 2
  %v6220 = vadd.f32 %v6218, %v6219
  %v6221 = vrot.slane %v6220, 1
  %v6222 = vadd.f32 %v6220, %v6221
  %6224 = vrot.lane.b32.xlu0 %v6222, 96
  %v6225 = vpop.permute.xlu0 %6224
  %v6227 = vadd.f32 %v6222, %v6225
  %6229 = vrot.lane.b32.xlu0 %v6227, 112
  %v6230 = vpop.permute.xlu0 %6229
  %v6232 = vadd.f32 %v6227, %v6230
  %6234 = vrot.lane.b32.xlu0 %v6232, 120
  %v6235 = vpop.permute.xlu0 %6234
  %v6237 = vadd.f32 %v6232, %v6235
  %v6238 = vmul.f32 %v6237, 0.0009765625
  %v6239 = vmul.f32 %v6169, %v6169
  %v6240 = vsub.f32 %v6238, %v6239
  %v6241 = vmax.f32 %v6240, 0.0
  %v6242 = vadd.f32 %v6241, 1e-05
  %v6243 = vrsqrt.pop %v6242
  %v6244 = vmul.f32 %v6115, %v6243
  %v6245 = vmul.f32 %v6169, %v6244
  %v6246 = vsub.f32 %v6116, %v6245
  %6248 = vrot.lane.b32.xlu0 %v6244, 8
  %v6249 = vpop.permute.xlu0 %6248
  %v6251 = vsel %vm3984, %v6244, %v6249
  %6253 = vrot.lane.b32.xlu0 %v6251, 16
  %v6254 = vpop.permute.xlu0 %6253
  %v6256 = vsel %vm3990, %v6251, %v6254
  %6258 = vrot.lane.b32.xlu0 %v6256, 32
  %v6259 = vpop.permute.xlu0 %6258
  %v6261 = vsel %vm694, %v6256, %v6259
  %v6262 = vlaneseq
  %v6263 = vshrl.u32 %v6262, 7
  %v6264 = vsub.s32 0, %v6263
  %v6265 = vrot.slane %v6261, %v6264
  %v6266 = vmul.f32 %v6099, %v6265
  %v6267 = vmul.f32 %v6100, %v6265
  %v6268 = vmul.f32 %v6101, %v6265
  %v6269 = vmul.f32 %v6102, %v6265
  %v6270 = vmul.f32 %v6103, %v6265
  %v6271 = vmul.f32 %v6104, %v6265
  %v6272 = vmul.f32 %v6105, %v6265
  %v6273 = vmul.f32 %v6106, %v6265
  %v6274 = vmul.f32 %v6107, %v6265
  %v6275 = vmul.f32 %v6108, %v6265
  %v6276 = vmul.f32 %v6109, %v6265
  %v6277 = vmul.f32 %v6110, %v6265
  %v6278 = vmul.f32 %v6111, %v6265
  %v6279 = vmul.f32 %v6112, %v6265
  %v6280 = vmul.f32 %v6113, %v6265
  %v6281 = vmul.f32 %v6114, %v6265
  %6283 = vrot.lane.b32.xlu0 %v6246, 8
  %v6284 = vpop.permute.xlu0 %6283
  %v6286 = vsel %vm3984, %v6246, %v6284
  %6288 = vrot.lane.b32.xlu0 %v6286, 16
  %v6289 = vpop.permute.xlu0 %6288
  %v6291 = vsel %vm3990, %v6286, %v6289
  %6293 = vrot.lane.b32.xlu0 %v6291, 32
  %v6294 = vpop.permute.xlu0 %6293
  %v6296 = vsel %vm694, %v6291, %v6294
  %v6297 = vlaneseq
  %v6298 = vshrl.u32 %v6297, 7
  %v6299 = vsub.s32 0, %v6298
  %v6300 = vrot.slane %v6296, %v6299
  %v6301 = vadd.f32 %v6266, %v6300
  %v6302 = vadd.f32 %v6267, %v6300
  %v6303 = vadd.f32 %v6268, %v6300
  %v6304 = vadd.f32 %v6269, %v6300
  %v6305 = vadd.f32 %v6270, %v6300
  %v6306 = vadd.f32 %v6271, %v6300
  %v6307 = vadd.f32 %v6272, %v6300
  %v6308 = vadd.f32 %v6273, %v6300
  %v6309 = vadd.f32 %v6274, %v6300
  %v6310 = vadd.f32 %v6275, %v6300
  %v6311 = vadd.f32 %v6276, %v6300
  %v6312 = vadd.f32 %v6277, %v6300
  %v6313 = vadd.f32 %v6278, %v6300
  %v6314 = vadd.f32 %v6279, %v6300
  %v6315 = vadd.f32 %v6280, %v6300
  %v6316 = vadd.f32 %v6281, %v6300
  %6333 = vrot.lane.b32.xlu0 %v4258, 64
  %v6334 = vpop.permute.xlu0 %6333
  %6335 = vrot.lane.b32.xlu0 %v4259, 64
  %v6336 = vpop.permute.xlu0 %6335
  %6337 = vrot.lane.b32.xlu0 %v4260, 64
  %v6338 = vpop.permute.xlu0 %6337
  %6339 = vrot.lane.b32.xlu0 %v4261, 64
  %v6340 = vpop.permute.xlu0 %6339
  %6341 = vrot.lane.b32.xlu0 %v4262, 64
  %v6342 = vpop.permute.xlu0 %6341
  %6343 = vrot.lane.b32.xlu0 %v4263, 64
  %v6344 = vpop.permute.xlu0 %6343
  %6345 = vrot.lane.b32.xlu0 %v4264, 64
  %v6346 = vpop.permute.xlu0 %6345
  %6347 = vrot.lane.b32.xlu0 %v4265, 64
  %v6348 = vpop.permute.xlu0 %6347
  %6349 = vrot.lane.b32.xlu0 %v4266, 64
  %v6350 = vpop.permute.xlu0 %6349
  %6351 = vrot.lane.b32.xlu0 %v4267, 64
  %v6352 = vpop.permute.xlu0 %6351
  %6353 = vrot.lane.b32.xlu0 %v4268, 64
  %v6354 = vpop.permute.xlu0 %6353
  %6355 = vrot.lane.b32.xlu0 %v4269, 64
  %v6356 = vpop.permute.xlu0 %6355
  %6357 = vrot.lane.b32.xlu0 %v4270, 64
  %v6358 = vpop.permute.xlu0 %6357
  %6359 = vrot.lane.b32.xlu0 %v4271, 64
  %v6360 = vpop.permute.xlu0 %6359
  %6361 = vrot.lane.b32.xlu0 %v4272, 64
  %v6362 = vpop.permute.xlu0 %6361
  %6363 = vrot.lane.b32.xlu0 %v4273, 64
  %v6364 = vpop.permute.xlu0 %6363
  %v6381 = vadd.f32 %v6301, %v6334
  %v6382 = vadd.f32 %v6302, %v6336
  %v6383 = vadd.f32 %v6303, %v6338
  %v6384 = vadd.f32 %v6304, %v6340
  %v6385 = vadd.f32 %v6305, %v6342
  %v6386 = vadd.f32 %v6306, %v6344
  %v6387 = vadd.f32 %v6307, %v6346
  %v6388 = vadd.f32 %v6308, %v6348
  %v6389 = vadd.f32 %v6309, %v6350
  %v6390 = vadd.f32 %v6310, %v6352
  %v6391 = vadd.f32 %v6311, %v6354
  %v6392 = vadd.f32 %v6312, %v6356
  %v6393 = vadd.f32 %v6313, %v6358
  %v6394 = vadd.f32 %v6314, %v6360
  %v6395 = vadd.f32 %v6315, %v6362
  %v6396 = vadd.f32 %v6316, %v6364
  %v6397 = vmax.f32 %v6381, 0.0
  %v6398 = vmax.f32 %v6382, 0.0
  %v6399 = vmax.f32 %v6383, 0.0
  %v6400 = vmax.f32 %v6384, 0.0
  %v6401 = vmax.f32 %v6385, 0.0
  %v6402 = vmax.f32 %v6386, 0.0
  %v6403 = vmax.f32 %v6387, 0.0
  %v6404 = vmax.f32 %v6388, 0.0
  %v6405 = vmax.f32 %v6389, 0.0
  %v6406 = vmax.f32 %v6390, 0.0
  %v6407 = vmax.f32 %v6391, 0.0
  %v6408 = vmax.f32 %v6392, 0.0
  %v6409 = vmax.f32 %v6393, 0.0
  %v6410 = vmax.f32 %v6394, 0.0
  %v6411 = vmax.f32 %v6395, 0.0
  %v6412 = vmax.f32 %v6396, 0.0
  %6413 = vst.msk [vmem:[%s5] sm:$0xff] %vm3849, %v6397
  %6414 = vst.msk [vmem:[%s5 + $0x8] sm:$0xff] %vm3849, %v6398
  %6415 = vst.msk [vmem:[%s5 + $0x10] sm:$0xff] %vm3849, %v6399
  %6416 = vst.msk [vmem:[%s5 + $0x18] sm:$0xff] %vm3849, %v6400
  %6417 = vst.msk [vmem:[%s5 + $0x20] sm:$0xff] %vm3849, %v6401
  %6418 = vst.msk [vmem:[%s5 + $0x28] sm:$0xff] %vm3849, %v6402
  %6419 = vst.msk [vmem:[%s5 + $0x30] sm:$0xff] %vm3849, %v6403
  %6420 = vst.msk [vmem:[%s5 + $0x38] sm:$0xff] %vm3849, %v6404
  %6421 = vst.msk [vmem:[%s5 + $0x40] sm:$0xff] %vm3849, %v6405
  %6422 = vst.msk [vmem:[%s5 + $0x48] sm:$0xff] %vm3849, %v6406
  %6423 = vst.msk [vmem:[%s5 + $0x50] sm:$0xff] %vm3849, %v6407
  %6424 = vst.msk [vmem:[%s5 + $0x58] sm:$0xff] %vm3849, %v6408
  %6425 = vst.msk [vmem:[%s5 + $0x60] sm:$0xff] %vm3849, %v6409
  %6426 = vst.msk [vmem:[%s5 + $0x68] sm:$0xff] %vm3849, %v6410
  %6427 = vst.msk [vmem:[%s5 + $0x70] sm:$0xff] %vm3849, %v6411
  %6428 = vst.msk [vmem:[%s5 + $0x78] sm:$0xff] %vm3849, %v6412
  // Predicated region
  $region22: #{tpu_custom_call.1} parent=0 // pred_check
    _
  $region23: #{tpu_custom_call.1} parent=0 // pred_check_branch
    %6430 = sbr.rel (0) target = $region25
  $region24: #{tpu_custom_call.1} parent=0 // pred_region
    _
  $region25: #{tpu_custom_call.1} parent=0 // pred_fallthru
    _
  // Predicated region
  $region26: #{tpu_custom_call.1} parent=0 // pred_check
    _
  $region27: #{tpu_custom_call.1} parent=0 // pred_check_branch
    %6432 = sbr.rel (0) target = $region29
  $region28: #{tpu_custom_call.1} parent=0 // pred_region
    _
  $region29: #{tpu_custom_call.1} parent=0 // pred_fallthru
    _

</llo_original>
